<compile_context>
chip_gen: v7x
topology: tpu7x:2x2x1
jax: 0.10.0
libtpu: 0.0.40
codegen_flags: <defaults>
</compile_context>

<pallas_src>
import functools

import jax
import jax.numpy as jnp
from jax.experimental import pallas as pl
from jax.experimental.pallas import tpu as pltpu


def _make_fused_espcn_kernel(H, W, r2):
    """Fused conv1(5x5,1->64)+tanh -> conv2(3x3,64->32)+tanh ->
    conv3(3x3,32->r2)+sigmoid for one batch element, channel-major layout."""
    S = W + 4          # uniform flat row stride (conv1 needs W+4)
    M = H * S          # flat pixel count per image (incl. junk columns w>=W)
    C1, C2 = 64, 32
    T1 = 32            # conv1 taps padded 25 -> 32 for the MXU

    bf16 = jnp.bfloat16
    f32 = jnp.float32

    def kernel(x_ref, mask_ref, w1_ref, b1_ref, w2_ref, b2_ref,
               w3_ref, b3_ref, o_ref, p1, a1t, a2t):
        # x_ref : (1, (H+5)*S) f32   zero-padded, row-flattened input
        # mask  : (1, M)       f32   1.0 on real columns (q%S < W), 0.0 on junk
        # w1_ref: (64, 32)     bf16  conv1 weights, col = kh*5+kw (25 real + 7 zero)
        # w2_ref: (32, 576)    bf16  col = (kh*3+kw)*64 + cin
        # w3_ref: (r2, 288)    bf16  col = (kh*3+kw)*32 + cin
        # b*    : (C, 1)       f32
        # o_ref : (r2, M)      f32   sigmoid(conv3); junk columns dropped outside
        # p1    : (32, M)        bf16 scratch  conv1 tap-major patch matrix
        # a1t   : (64, (H+3)*S)  bf16 scratch  tanh(conv1), flat-padded (+S+1 halo)
        # a2t   : (32, (H+3)*S)  bf16 scratch  tanh(conv2), flat-padded (+S+1 halo)
        mask = mask_ref[...]                                   # (1, M)

        # ---- conv1: 5x5, 1 -> 64, tanh.  One MXU matmul (64,32)@(32,M).
        # Each tap is the flat input shifted by kh*S + kw -> a single contiguous
        # full-width row copy into the tap-major patch matrix.
        for kh in range(5):
            for kw in range(5):
                t = kh * 5 + kw
                p1[t:t + 1, :] = x_ref[:, pl.ds(kh * S + kw, M)].astype(bf16)
        p1[25:T1, :] = jnp.zeros((T1 - 25, M), bf16)           # padded taps = 0

        z1 = jnp.dot(w1_ref[...], p1[...], preferred_element_type=f32)
        a1 = (jnp.tanh(z1 + b1_ref[...]) * mask).astype(bf16)  # (64, M)

        # Place conv1 output at flat offset +S+1 (1-pixel halo for conv2); the
        # untouched head/tail strips are zeroed every step (no pl.when), so the
        # buffer is fully (re)written on every grid iteration.
        a1t[:, pl.ds(0, S + 1)] = jnp.zeros((C1, S + 1), bf16)
        a1t[:, pl.ds(S + 1, M)] = a1
        a1t[:, pl.ds((H + 1) * S + 1, 2 * S - 1)] = jnp.zeros((C1, 2 * S - 1), bf16)

        # ---- conv2: 3x3, 64 -> 32, tanh.  9 accumulated MXU matmuls (K=64);
        # operands are lane-offset slices of a1t (no im2col buffer).
        acc2 = jnp.zeros((C2, M), f32)
        for kh in range(3):
            for kw in range(3):
                t = kh * 3 + kw
                acc2 = acc2 + jnp.dot(
                    w2_ref[:, t * C1:(t + 1) * C1],
                    a1t[:, pl.ds(kh * S + kw, M)],
                    preferred_element_type=f32)
        a2 = (jnp.tanh(acc2 + b2_ref[...]) * mask).astype(bf16)  # (32, M)

        a2t[:, pl.ds(0, S + 1)] = jnp.zeros((C2, S + 1), bf16)
        a2t[:, pl.ds(S + 1, M)] = a2
        a2t[:, pl.ds((H + 1) * S + 1, 2 * S - 1)] = jnp.zeros((C2, 2 * S - 1), bf16)

        # ---- conv3: 3x3, 32 -> r^2, sigmoid fused.  9 accumulated matmuls (K=32).
        acc3 = jnp.zeros((r2, M), f32)
        for kh in range(3):
            for kw in range(3):
                t = kh * 3 + kw
                acc3 = acc3 + jnp.dot(
                    w3_ref[:, t * C2:(t + 1) * C2],
                    a2t[:, pl.ds(kh * S + kw, M)],
                    preferred_element_type=f32)

        # Lane-dense store: pixels on lanes, r2 channels on sublanes.
        o_ref[...] = jax.nn.sigmoid(acc3 + b3_ref[...]).astype(o_ref.dtype)

    return kernel


def espcn_fused_pallas(xflat, colmask, w1t, b1, w2t, b2, w3t, b3, H, W, r2):
    """Run the fused ESPCN forward.  xflat: (N, 1, (H+5)*(W+4)) f32.
    Returns (N, r2, H*(W+4)) with sigmoid already applied."""
    N = xflat.shape[0]
    S = W + 4
    M = H * S
    Lx = xflat.shape[2]
    T1 = 32
    kernel = _make_fused_espcn_kernel(H, W, r2)

    return pl.pallas_call(
        kernel,
        out_shape=jax.ShapeDtypeStruct((N, r2, M), jnp.float32),
        grid_spec=pltpu.PrefetchScalarGridSpec(
            num_scalar_prefetch=0,
            grid=(N,),
            in_specs=[
                pl.BlockSpec((None, 1, Lx), lambda n: (n, 0, 0)),   # input
                pl.BlockSpec((1, M), lambda n: (0, 0)),             # column mask
                pl.BlockSpec((64, T1), lambda n: (0, 0)),           # w1 (bf16)
                pl.BlockSpec((64, 1), lambda n: (0, 0)),            # b1
                pl.BlockSpec((32, 9 * 64), lambda n: (0, 0)),       # w2 (bf16)
                pl.BlockSpec((32, 1), lambda n: (0, 0)),            # b2
                pl.BlockSpec((r2, 9 * 32), lambda n: (0, 0)),       # w3 (bf16)
                pl.BlockSpec((r2, 1), lambda n: (0, 0)),            # b3
            ],
            out_specs=pl.BlockSpec((None, r2, M), lambda n: (n, 0, 0)),
            scratch_shapes=[
                pltpu.VMEM((T1, M), jnp.bfloat16),            # conv1 patch matrix
                pltpu.VMEM((64, (H + 3) * S), jnp.bfloat16),  # padded tanh(conv1)
                pltpu.VMEM((32, (H + 3) * S), jnp.bfloat16),  # padded tanh(conv2)
            ],
        ),
        compiler_params=pltpu.CompilerParams(
            dimension_semantics=("parallel",)),
    )(xflat, colmask, w1t, b1, w2t, b2, w3t, b3)


def init_params(upscale_factor, key):
    """Deterministic synthetic parameters with the shapes from Net.__init__.
    Weights are stored in (KH, KW, Cin, Cout) layout."""
    ks = jax.random.split(key, 6)

    def w_init(k, kh, kw, cin, cout):
        fan_in = cin * kh * kw
        bound = 1.0 / jnp.sqrt(fan_in)
        return jax.random.uniform(
            k, (kh, kw, cin, cout), jnp.float32, -bound, bound)

    def b_init(k, kh, kw, cin, cout):
        fan_in = cin * kh * kw
        bound = 1.0 / jnp.sqrt(fan_in)
        return jax.random.uniform(k, (cout,), jnp.float32, -bound, bound)

    r2 = upscale_factor ** 2
    return {
        "w1": w_init(ks[0], 5, 5, 1, 64),
        "b1": b_init(ks[1], 5, 5, 1, 64),
        "w2": w_init(ks[2], 3, 3, 64, 32),
        "b2": b_init(ks[3], 3, 3, 64, 32),
        "w3": w_init(ks[4], 3, 3, 32, r2),
        "b3": b_init(ks[5], 3, 3, 32, r2),
    }


@functools.partial(jax.jit, static_argnums=(2,))
def espcn_forward(x_nchw, params, upscale_factor):
    """Net.forward: NCHW in, NCHW out (matches PyTorch semantics)."""
    r = upscale_factor
    r2 = r * r
    N, C, H, W = x_nchw.shape
    assert C == 1
    S = W + 4
    M = H * S

    # Row-flattened, zero-padded input with uniform row stride S = W+4
    # (2 rows / 2 cols of conv1 SAME halo; one extra bottom row so the largest
    #  tap shift 4*S+4 stays in bounds for every flat column).
    x = x_nchw[:, 0].astype(jnp.float32)
    xpad = jnp.pad(x, ((0, 0), (2, 3), (2, 2)))               # (N, H+5, S)
    xflat = xpad.reshape(N, 1, (H + 5) * S)

    # {0,1} mask of real lane-columns: flat column q maps to pixel (q//S, q%S);
    # columns with q%S >= W are wrap-around junk and double as zero halo.
    col = jnp.arange(M, dtype=jnp.int32)
    colmask = ((col % S) < W).astype(jnp.float32).reshape(1, M)

    # Channel-major (Cout, K) weight layouts; bf16 MXU operands, f32 biases.
    w1t = jnp.pad(params["w1"].reshape(25, 64).T, ((0, 0), (0, 7)))
    w1t = w1t.astype(jnp.bfloat16)                            # (64, 32)
    w2t = jnp.transpose(params["w2"], (3, 0, 1, 2)).reshape(32, 9 * 64)
    w2t = w2t.astype(jnp.bfloat16)                            # (32, 576)
    w3t = jnp.transpose(params["w3"], (3, 0, 1, 2)).reshape(r2, 9 * 32)
    w3t = w3t.astype(jnp.bfloat16)                            # (r2, 288)
    b1 = params["b1"].reshape(64, 1).astype(jnp.float32)
    b2 = params["b2"].reshape(32, 1).astype(jnp.float32)
    b3 = params["b3"].reshape(r2, 1).astype(jnp.float32)

    y = espcn_fused_pallas(xflat, colmask, w1t, b1, w2t, b2, w3t, b3, H, W, r2)

    # Drop junk columns, then PixelShuffle (sigmoid already applied in-kernel;
    # it commutes with a pure permutation):
    #   out[n, 0, h*r+i, w*r+j] = y[n, i*r+j, h, w]
    y = y.reshape(N, r2, H, S)[:, :, :, :W]                   # (N, r2, H, W)
    y = y.reshape(N, r, r, H, W)                              # (n, i, j, h, w)
    y = jnp.transpose(y, (0, 3, 1, 4, 2))                     # (n, h, i, w, j)
    return y.reshape(N, 1, H * r, W * r)


def espcn_reference(x_nchw, params, upscale_factor):
    """Pure-JAX reference (lax.conv, f32) for verification."""
    r = upscale_factor
    N, C, H, W = x_nchw.shape
    x = x_nchw.astype(jnp.float32)

    def conv(x, w, b):
        y = jax.lax.conv_general_dilated(
            x, w, (1, 1), "SAME",
            dimension_numbers=("NCHW", "HWIO", "NCHW"),
        )
        return y + b.reshape(1, -1, 1, 1)

    x = jnp.tanh(conv(x, params["w1"], params["b1"]))
    x = jnp.tanh(conv(x, params["w2"], params["b2"]))
    x = conv(x, params["w3"], params["b3"])
    x = x.reshape(N, 1, r, r, H, W)
    x = jnp.transpose(x, (0, 1, 4, 2, 5, 3))
    x = x.reshape(N, 1, H * r, W * r)
    return jax.nn.sigmoid(x)


if __name__ == "__main__":
    upscale_factor = 3
    key = jax.random.PRNGKey(0)
    k_x, k_p = jax.random.split(key)

    # Small NCHW input consistent with Net (single input channel).
    x = jax.random.normal(k_x, (2, 1, 16, 16), jnp.float32)
    params = init_params(upscale_factor, k_p)

    out = espcn_forward(x, params, upscale_factor)
    out = jax.block_until_ready(out)
    assert out.shape == (2, 1, 16 * upscale_factor, 16 * upscale_factor), out.shape

    ref = jax.block_until_ready(espcn_reference(x, params, upscale_factor))
    # bf16 MXU operands (f32 accumulation) -> loosened tolerance vs the f32 ref.
    max_err = float(jnp.max(jnp.abs(out - ref)))
    assert max_err < 2e-2, max_err

    print("KERNEL_OK")
</pallas_src>

<mosaic_0001>
module attributes {stable_mosaic.version = 11 : i64} {
  func.func @kernel(%arg0: i32, %arg1: memref<1x1x420xf32, #tpu.memory_space<vmem>>, %arg2: memref<1x320xf32, #tpu.memory_space<vmem>>, %arg3: memref<64x32xbf16, #tpu.memory_space<vmem>>, %arg4: memref<64x1xf32, #tpu.memory_space<vmem>>, %arg5: memref<32x576xbf16, #tpu.memory_space<vmem>>, %arg6: memref<32x1xf32, #tpu.memory_space<vmem>>, %arg7: memref<9x288xbf16, #tpu.memory_space<vmem>>, %arg8: memref<9x1xf32, #tpu.memory_space<vmem>>, %arg9: memref<1x9x320xf32, #tpu.memory_space<vmem>>, %arg10: memref<32x320xbf16, #tpu.memory_space<vmem>>, %arg11: memref<64x380xbf16, #tpu.memory_space<vmem>>, %arg12: memref<32x380xbf16, #tpu.memory_space<vmem>>) attributes {dimension_semantics = [#tpu.dimension_semantics<parallel>], iteration_bounds = array<i64: 2>, scalar_prefetch = 0 : i64, scratch_operands = 3 : i64, tpu.core_type = #tpu.core_type<tc>, window_params = [{transform_indices = @transform_0, window_bounds = array<i64: 1, 1, 420>}, {pipeline_mode = #tpu.pipeline_mode<synchronous>, transform_indices = @transform_1, window_bounds = array<i64: 1, 320>}, {pipeline_mode = #tpu.pipeline_mode<synchronous>, transform_indices = @transform_2, window_bounds = array<i64: 64, 32>}, {pipeline_mode = #tpu.pipeline_mode<synchronous>, transform_indices = @transform_3, window_bounds = array<i64: 64, 1>}, {pipeline_mode = #tpu.pipeline_mode<synchronous>, transform_indices = @transform_4, window_bounds = array<i64: 32, 576>}, {pipeline_mode = #tpu.pipeline_mode<synchronous>, transform_indices = @transform_5, window_bounds = array<i64: 32, 1>}, {pipeline_mode = #tpu.pipeline_mode<synchronous>, transform_indices = @transform_6, window_bounds = array<i64: 9, 288>}, {pipeline_mode = #tpu.pipeline_mode<synchronous>, transform_indices = @transform_7, window_bounds = array<i64: 9, 1>}, {transform_indices = @transform_8, window_bounds = array<i64: 1, 9, 320>}]} {
    %c0 = arith.constant 0 : index
    %c0_0 = arith.constant 0 : index
    %0 = vector.load %arg2[%c0, %c0_0] : memref<1x320xf32, #tpu.memory_space<vmem>>, vector<1x320xf32>
    %c0_1 = arith.constant 0 : index
    %c0_2 = arith.constant 0 : index
    %c0_3 = arith.constant 0 : index
    %1 = vector.load %arg1[%c0_1, %c0_2, %c0_3] : memref<1x1x420xf32, #tpu.memory_space<vmem>>, vector<1x1x320xf32>
    %2 = vector.shape_cast %1 : vector<1x1x320xf32> to vector<1x320xf32>
    %3 = arith.truncf %2 : vector<1x320xf32> to vector<1x320xbf16>
    %c0_4 = arith.constant 0 : index
    %c0_5 = arith.constant 0 : index
    %4 = vector.load %arg10[%c0_4, %c0_5] : memref<32x320xbf16, #tpu.memory_space<vmem>>, vector<1x320xbf16>
    tpu.vector_store %arg10[%c0_4, %c0_5], %3 {strides = array<i32>} : memref<32x320xbf16, #tpu.memory_space<vmem>>, vector<1x320xbf16>,
    %c0_6 = arith.constant 0 : index
    %c0_7 = arith.constant 0 : index
    %c1 = arith.constant 1 : index
    %5 = vector.load %arg1[%c0_6, %c0_7, %c1] : memref<1x1x420xf32, #tpu.memory_space<vmem>>, vector<1x1x320xf32>
    %6 = vector.shape_cast %5 : vector<1x1x320xf32> to vector<1x320xf32>
    %7 = arith.truncf %6 : vector<1x320xf32> to vector<1x320xbf16>
    %c1_8 = arith.constant 1 : index
    %c0_9 = arith.constant 0 : index
    %8 = vector.load %arg10[%c1_8, %c0_9] : memref<32x320xbf16, #tpu.memory_space<vmem>>, vector<1x320xbf16>
    tpu.vector_store %arg10[%c1_8, %c0_9], %7 {strides = array<i32>} : memref<32x320xbf16, #tpu.memory_space<vmem>>, vector<1x320xbf16>,
    %c0_10 = arith.constant 0 : index
    %c0_11 = arith.constant 0 : index
    %c2 = arith.constant 2 : index
    %9 = vector.load %arg1[%c0_10, %c0_11, %c2] : memref<1x1x420xf32, #tpu.memory_space<vmem>>, vector<1x1x320xf32>
    %10 = vector.shape_cast %9 : vector<1x1x320xf32> to vector<1x320xf32>
    %11 = arith.truncf %10 : vector<1x320xf32> to vector<1x320xbf16>
    %c2_12 = arith.constant 2 : index
    %c0_13 = arith.constant 0 : index
    %12 = vector.load %arg10[%c2_12, %c0_13] : memref<32x320xbf16, #tpu.memory_space<vmem>>, vector<1x320xbf16>
    tpu.vector_store %arg10[%c2_12, %c0_13], %11 {strides = array<i32>} : memref<32x320xbf16, #tpu.memory_space<vmem>>, vector<1x320xbf16>,
    %c0_14 = arith.constant 0 : index
    %c0_15 = arith.constant 0 : index
    %c3 = arith.constant 3 : index
    %13 = vector.load %arg1[%c0_14, %c0_15, %c3] : memref<1x1x420xf32, #tpu.memory_space<vmem>>, vector<1x1x320xf32>
    %14 = vector.shape_cast %13 : vector<1x1x320xf32> to vector<1x320xf32>
    %15 = arith.truncf %14 : vector<1x320xf32> to vector<1x320xbf16>
    %c3_16 = arith.constant 3 : index
    %c0_17 = arith.constant 0 : index
    %16 = vector.load %arg10[%c3_16, %c0_17] : memref<32x320xbf16, #tpu.memory_space<vmem>>, vector<1x320xbf16>
    tpu.vector_store %arg10[%c3_16, %c0_17], %15 {strides = array<i32>} : memref<32x320xbf16, #tpu.memory_space<vmem>>, vector<1x320xbf16>,
    %c0_18 = arith.constant 0 : index
    %c0_19 = arith.constant 0 : index
    %c4 = arith.constant 4 : index
    %17 = vector.load %arg1[%c0_18, %c0_19, %c4] : memref<1x1x420xf32, #tpu.memory_space<vmem>>, vector<1x1x320xf32>
    %18 = vector.shape_cast %17 : vector<1x1x320xf32> to vector<1x320xf32>
    %19 = arith.truncf %18 : vector<1x320xf32> to vector<1x320xbf16>
    %c4_20 = arith.constant 4 : index
    %c0_21 = arith.constant 0 : index
    %20 = vector.load %arg10[%c4_20, %c0_21] : memref<32x320xbf16, #tpu.memory_space<vmem>>, vector<1x320xbf16>
    tpu.vector_store %arg10[%c4_20, %c0_21], %19 {strides = array<i32>} : memref<32x320xbf16, #tpu.memory_space<vmem>>, vector<1x320xbf16>,
    %c0_22 = arith.constant 0 : index
    %c0_23 = arith.constant 0 : index
    %c20 = arith.constant 20 : index
    %21 = vector.load %arg1[%c0_22, %c0_23, %c20] : memref<1x1x420xf32, #tpu.memory_space<vmem>>, vector<1x1x320xf32>
    %22 = vector.shape_cast %21 : vector<1x1x320xf32> to vector<1x320xf32>
    %23 = arith.truncf %22 : vector<1x320xf32> to vector<1x320xbf16>
    %c5 = arith.constant 5 : index
    %c0_24 = arith.constant 0 : index
    %24 = vector.load %arg10[%c5, %c0_24] : memref<32x320xbf16, #tpu.memory_space<vmem>>, vector<1x320xbf16>
    tpu.vector_store %arg10[%c5, %c0_24], %23 {strides = array<i32>} : memref<32x320xbf16, #tpu.memory_space<vmem>>, vector<1x320xbf16>,
    %c0_25 = arith.constant 0 : index
    %c0_26 = arith.constant 0 : index
    %c21 = arith.constant 21 : index
    %25 = vector.load %arg1[%c0_25, %c0_26, %c21] : memref<1x1x420xf32, #tpu.memory_space<vmem>>, vector<1x1x320xf32>
    %26 = vector.shape_cast %25 : vector<1x1x320xf32> to vector<1x320xf32>
    %27 = arith.truncf %26 : vector<1x320xf32> to vector<1x320xbf16>
    %c6 = arith.constant 6 : index
    %c0_27 = arith.constant 0 : index
    %28 = vector.load %arg10[%c6, %c0_27] : memref<32x320xbf16, #tpu.memory_space<vmem>>, vector<1x320xbf16>
    tpu.vector_store %arg10[%c6, %c0_27], %27 {strides = array<i32>} : memref<32x320xbf16, #tpu.memory_space<vmem>>, vector<1x320xbf16>,
    %c0_28 = arith.constant 0 : index
    %c0_29 = arith.constant 0 : index
    %c22 = arith.constant 22 : index
    %29 = vector.load %arg1[%c0_28, %c0_29, %c22] : memref<1x1x420xf32, #tpu.memory_space<vmem>>, vector<1x1x320xf32>
    %30 = vector.shape_cast %29 : vector<1x1x320xf32> to vector<1x320xf32>
    %31 = arith.truncf %30 : vector<1x320xf32> to vector<1x320xbf16>
    %c7 = arith.constant 7 : index
    %c0_30 = arith.constant 0 : index
    %32 = vector.load %arg10[%c7, %c0_30] : memref<32x320xbf16, #tpu.memory_space<vmem>>, vector<1x320xbf16>
    tpu.vector_store %arg10[%c7, %c0_30], %31 {strides = array<i32>} : memref<32x320xbf16, #tpu.memory_space<vmem>>, vector<1x320xbf16>,
    %c0_31 = arith.constant 0 : index
    %c0_32 = arith.constant 0 : index
    %c23 = arith.constant 23 : index
    %33 = vector.load %arg1[%c0_31, %c0_32, %c23] : memref<1x1x420xf32, #tpu.memory_space<vmem>>, vector<1x1x320xf32>
    %34 = vector.shape_cast %33 : vector<1x1x320xf32> to vector<1x320xf32>
    %35 = arith.truncf %34 : vector<1x320xf32> to vector<1x320xbf16>
    %c8 = arith.constant 8 : index
    %c0_33 = arith.constant 0 : index
    %36 = vector.load %arg10[%c8, %c0_33] : memref<32x320xbf16, #tpu.memory_space<vmem>>, vector<1x320xbf16>
    tpu.vector_store %arg10[%c8, %c0_33], %35 {strides = array<i32>} : memref<32x320xbf16, #tpu.memory_space<vmem>>, vector<1x320xbf16>,
    %c0_34 = arith.constant 0 : index
    %c0_35 = arith.constant 0 : index
    %c24 = arith.constant 24 : index
    %37 = vector.load %arg1[%c0_34, %c0_35, %c24] : memref<1x1x420xf32, #tpu.memory_space<vmem>>, vector<1x1x320xf32>
    %38 = vector.shape_cast %37 : vector<1x1x320xf32> to vector<1x320xf32>
    %39 = arith.truncf %38 : vector<1x320xf32> to vector<1x320xbf16>
    %c9 = arith.constant 9 : index
    %c0_36 = arith.constant 0 : index
    %40 = vector.load %arg10[%c9, %c0_36] : memref<32x320xbf16, #tpu.memory_space<vmem>>, vector<1x320xbf16>
    tpu.vector_store %arg10[%c9, %c0_36], %39 {strides = array<i32>} : memref<32x320xbf16, #tpu.memory_space<vmem>>, vector<1x320xbf16>,
    %c0_37 = arith.constant 0 : index
    %c0_38 = arith.constant 0 : index
    %c40 = arith.constant 40 : index
    %41 = vector.load %arg1[%c0_37, %c0_38, %c40] : memref<1x1x420xf32, #tpu.memory_space<vmem>>, vector<1x1x320xf32>
    %42 = vector.shape_cast %41 : vector<1x1x320xf32> to vector<1x320xf32>
    %43 = arith.truncf %42 : vector<1x320xf32> to vector<1x320xbf16>
    %c10 = arith.constant 10 : index
    %c0_39 = arith.constant 0 : index
    %44 = vector.load %arg10[%c10, %c0_39] : memref<32x320xbf16, #tpu.memory_space<vmem>>, vector<1x320xbf16>
    tpu.vector_store %arg10[%c10, %c0_39], %43 {strides = array<i32>} : memref<32x320xbf16, #tpu.memory_space<vmem>>, vector<1x320xbf16>,
    %c0_40 = arith.constant 0 : index
    %c0_41 = arith.constant 0 : index
    %c41 = arith.constant 41 : index
    %45 = vector.load %arg1[%c0_40, %c0_41, %c41] : memref<1x1x420xf32, #tpu.memory_space<vmem>>, vector<1x1x320xf32>
    %46 = vector.shape_cast %45 : vector<1x1x320xf32> to vector<1x320xf32>
    %47 = arith.truncf %46 : vector<1x320xf32> to vector<1x320xbf16>
    %c11 = arith.constant 11 : index
    %c0_42 = arith.constant 0 : index
    %48 = vector.load %arg10[%c11, %c0_42] : memref<32x320xbf16, #tpu.memory_space<vmem>>, vector<1x320xbf16>
    tpu.vector_store %arg10[%c11, %c0_42], %47 {strides = array<i32>} : memref<32x320xbf16, #tpu.memory_space<vmem>>, vector<1x320xbf16>,
    %c0_43 = arith.constant 0 : index
    %c0_44 = arith.constant 0 : index
    %c42 = arith.constant 42 : index
    %49 = vector.load %arg1[%c0_43, %c0_44, %c42] : memref<1x1x420xf32, #tpu.memory_space<vmem>>, vector<1x1x320xf32>
    %50 = vector.shape_cast %49 : vector<1x1x320xf32> to vector<1x320xf32>
    %51 = arith.truncf %50 : vector<1x320xf32> to vector<1x320xbf16>
    %c12 = arith.constant 12 : index
    %c0_45 = arith.constant 0 : index
    %52 = vector.load %arg10[%c12, %c0_45] : memref<32x320xbf16, #tpu.memory_space<vmem>>, vector<1x320xbf16>
    tpu.vector_store %arg10[%c12, %c0_45], %51 {strides = array<i32>} : memref<32x320xbf16, #tpu.memory_space<vmem>>, vector<1x320xbf16>,
    %c0_46 = arith.constant 0 : index
    %c0_47 = arith.constant 0 : index
    %c43 = arith.constant 43 : index
    %53 = vector.load %arg1[%c0_46, %c0_47, %c43] : memref<1x1x420xf32, #tpu.memory_space<vmem>>, vector<1x1x320xf32>
    %54 = vector.shape_cast %53 : vector<1x1x320xf32> to vector<1x320xf32>
    %55 = arith.truncf %54 : vector<1x320xf32> to vector<1x320xbf16>
    %c13 = arith.constant 13 : index
    %c0_48 = arith.constant 0 : index
    %56 = vector.load %arg10[%c13, %c0_48] : memref<32x320xbf16, #tpu.memory_space<vmem>>, vector<1x320xbf16>
    tpu.vector_store %arg10[%c13, %c0_48], %55 {strides = array<i32>} : memref<32x320xbf16, #tpu.memory_space<vmem>>, vector<1x320xbf16>,
    %c0_49 = arith.constant 0 : index
    %c0_50 = arith.constant 0 : index
    %c44 = arith.constant 44 : index
    %57 = vector.load %arg1[%c0_49, %c0_50, %c44] : memref<1x1x420xf32, #tpu.memory_space<vmem>>, vector<1x1x320xf32>
    %58 = vector.shape_cast %57 : vector<1x1x320xf32> to vector<1x320xf32>
    %59 = arith.truncf %58 : vector<1x320xf32> to vector<1x320xbf16>
    %c14 = arith.constant 14 : index
    %c0_51 = arith.constant 0 : index
    %60 = vector.load %arg10[%c14, %c0_51] : memref<32x320xbf16, #tpu.memory_space<vmem>>, vector<1x320xbf16>
    tpu.vector_store %arg10[%c14, %c0_51], %59 {strides = array<i32>} : memref<32x320xbf16, #tpu.memory_space<vmem>>, vector<1x320xbf16>,
    %c0_52 = arith.constant 0 : index
    %c0_53 = arith.constant 0 : index
    %c60 = arith.constant 60 : index
    %61 = vector.load %arg1[%c0_52, %c0_53, %c60] : memref<1x1x420xf32, #tpu.memory_space<vmem>>, vector<1x1x320xf32>
    %62 = vector.shape_cast %61 : vector<1x1x320xf32> to vector<1x320xf32>
    %63 = arith.truncf %62 : vector<1x320xf32> to vector<1x320xbf16>
    %c15 = arith.constant 15 : index
    %c0_54 = arith.constant 0 : index
    %64 = vector.load %arg10[%c15, %c0_54] : memref<32x320xbf16, #tpu.memory_space<vmem>>, vector<1x320xbf16>
    tpu.vector_store %arg10[%c15, %c0_54], %63 {strides = array<i32>} : memref<32x320xbf16, #tpu.memory_space<vmem>>, vector<1x320xbf16>,
    %c0_55 = arith.constant 0 : index
    %c0_56 = arith.constant 0 : index
    %c61 = arith.constant 61 : index
    %65 = vector.load %arg1[%c0_55, %c0_56, %c61] : memref<1x1x420xf32, #tpu.memory_space<vmem>>, vector<1x1x320xf32>
    %66 = vector.shape_cast %65 : vector<1x1x320xf32> to vector<1x320xf32>
    %67 = arith.truncf %66 : vector<1x320xf32> to vector<1x320xbf16>
    %c16 = arith.constant 16 : index
    %c0_57 = arith.constant 0 : index
    %68 = vector.load %arg10[%c16, %c0_57] : memref<32x320xbf16, #tpu.memory_space<vmem>>, vector<1x320xbf16>
    tpu.vector_store %arg10[%c16, %c0_57], %67 {strides = array<i32>} : memref<32x320xbf16, #tpu.memory_space<vmem>>, vector<1x320xbf16>,
    %c0_58 = arith.constant 0 : index
    %c0_59 = arith.constant 0 : index
    %c62 = arith.constant 62 : index
    %69 = vector.load %arg1[%c0_58, %c0_59, %c62] : memref<1x1x420xf32, #tpu.memory_space<vmem>>, vector<1x1x320xf32>
    %70 = vector.shape_cast %69 : vector<1x1x320xf32> to vector<1x320xf32>
    %71 = arith.truncf %70 : vector<1x320xf32> to vector<1x320xbf16>
    %c17 = arith.constant 17 : index
    %c0_60 = arith.constant 0 : index
    %72 = vector.load %arg10[%c17, %c0_60] : memref<32x320xbf16, #tpu.memory_space<vmem>>, vector<1x320xbf16>
    tpu.vector_store %arg10[%c17, %c0_60], %71 {strides = array<i32>} : memref<32x320xbf16, #tpu.memory_space<vmem>>, vector<1x320xbf16>,
    %c0_61 = arith.constant 0 : index
    %c0_62 = arith.constant 0 : index
    %c63 = arith.constant 63 : index
    %73 = vector.load %arg1[%c0_61, %c0_62, %c63] : memref<1x1x420xf32, #tpu.memory_space<vmem>>, vector<1x1x320xf32>
    %74 = vector.shape_cast %73 : vector<1x1x320xf32> to vector<1x320xf32>
    %75 = arith.truncf %74 : vector<1x320xf32> to vector<1x320xbf16>
    %c18 = arith.constant 18 : index
    %c0_63 = arith.constant 0 : index
    %76 = vector.load %arg10[%c18, %c0_63] : memref<32x320xbf16, #tpu.memory_space<vmem>>, vector<1x320xbf16>
    tpu.vector_store %arg10[%c18, %c0_63], %75 {strides = array<i32>} : memref<32x320xbf16, #tpu.memory_space<vmem>>, vector<1x320xbf16>,
    %c0_64 = arith.constant 0 : index
    %c0_65 = arith.constant 0 : index
    %c64 = arith.constant 64 : index
    %77 = vector.load %arg1[%c0_64, %c0_65, %c64] : memref<1x1x420xf32, #tpu.memory_space<vmem>>, vector<1x1x320xf32>
    %78 = vector.shape_cast %77 : vector<1x1x320xf32> to vector<1x320xf32>
    %79 = arith.truncf %78 : vector<1x320xf32> to vector<1x320xbf16>
    %c19 = arith.constant 19 : index
    %c0_66 = arith.constant 0 : index
    %80 = vector.load %arg10[%c19, %c0_66] : memref<32x320xbf16, #tpu.memory_space<vmem>>, vector<1x320xbf16>
    tpu.vector_store %arg10[%c19, %c0_66], %79 {strides = array<i32>} : memref<32x320xbf16, #tpu.memory_space<vmem>>, vector<1x320xbf16>,
    %c0_67 = arith.constant 0 : index
    %c0_68 = arith.constant 0 : index
    %c80 = arith.constant 80 : index
    %81 = vector.load %arg1[%c0_67, %c0_68, %c80] : memref<1x1x420xf32, #tpu.memory_space<vmem>>, vector<1x1x320xf32>
    %82 = vector.shape_cast %81 : vector<1x1x320xf32> to vector<1x320xf32>
    %83 = arith.truncf %82 : vector<1x320xf32> to vector<1x320xbf16>
    %c20_69 = arith.constant 20 : index
    %c0_70 = arith.constant 0 : index
    %84 = vector.load %arg10[%c20_69, %c0_70] : memref<32x320xbf16, #tpu.memory_space<vmem>>, vector<1x320xbf16>
    tpu.vector_store %arg10[%c20_69, %c0_70], %83 {strides = array<i32>} : memref<32x320xbf16, #tpu.memory_space<vmem>>, vector<1x320xbf16>,
    %c0_71 = arith.constant 0 : index
    %c0_72 = arith.constant 0 : index
    %c81 = arith.constant 81 : index
    %85 = vector.load %arg1[%c0_71, %c0_72, %c81] : memref<1x1x420xf32, #tpu.memory_space<vmem>>, vector<1x1x320xf32>
    %86 = vector.shape_cast %85 : vector<1x1x320xf32> to vector<1x320xf32>
    %87 = arith.truncf %86 : vector<1x320xf32> to vector<1x320xbf16>
    %c21_73 = arith.constant 21 : index
    %c0_74 = arith.constant 0 : index
    %88 = vector.load %arg10[%c21_73, %c0_74] : memref<32x320xbf16, #tpu.memory_space<vmem>>, vector<1x320xbf16>
    tpu.vector_store %arg10[%c21_73, %c0_74], %87 {strides = array<i32>} : memref<32x320xbf16, #tpu.memory_space<vmem>>, vector<1x320xbf16>,
    %c0_75 = arith.constant 0 : index
    %c0_76 = arith.constant 0 : index
    %c82 = arith.constant 82 : index
    %89 = vector.load %arg1[%c0_75, %c0_76, %c82] : memref<1x1x420xf32, #tpu.memory_space<vmem>>, vector<1x1x320xf32>
    %90 = vector.shape_cast %89 : vector<1x1x320xf32> to vector<1x320xf32>
    %91 = arith.truncf %90 : vector<1x320xf32> to vector<1x320xbf16>
    %c22_77 = arith.constant 22 : index
    %c0_78 = arith.constant 0 : index
    %92 = vector.load %arg10[%c22_77, %c0_78] : memref<32x320xbf16, #tpu.memory_space<vmem>>, vector<1x320xbf16>
    tpu.vector_store %arg10[%c22_77, %c0_78], %91 {strides = array<i32>} : memref<32x320xbf16, #tpu.memory_space<vmem>>, vector<1x320xbf16>,
    %c0_79 = arith.constant 0 : index
    %c0_80 = arith.constant 0 : index
    %c83 = arith.constant 83 : index
    %93 = vector.load %arg1[%c0_79, %c0_80, %c83] : memref<1x1x420xf32, #tpu.memory_space<vmem>>, vector<1x1x320xf32>
    %94 = vector.shape_cast %93 : vector<1x1x320xf32> to vector<1x320xf32>
    %95 = arith.truncf %94 : vector<1x320xf32> to vector<1x320xbf16>
    %c23_81 = arith.constant 23 : index
    %c0_82 = arith.constant 0 : index
    %96 = vector.load %arg10[%c23_81, %c0_82] : memref<32x320xbf16, #tpu.memory_space<vmem>>, vector<1x320xbf16>
    tpu.vector_store %arg10[%c23_81, %c0_82], %95 {strides = array<i32>} : memref<32x320xbf16, #tpu.memory_space<vmem>>, vector<1x320xbf16>,
    %c0_83 = arith.constant 0 : index
    %c0_84 = arith.constant 0 : index
    %c84 = arith.constant 84 : index
    %97 = vector.load %arg1[%c0_83, %c0_84, %c84] : memref<1x1x420xf32, #tpu.memory_space<vmem>>, vector<1x1x320xf32>
    %98 = vector.shape_cast %97 : vector<1x1x320xf32> to vector<1x320xf32>
    %99 = arith.truncf %98 : vector<1x320xf32> to vector<1x320xbf16>
    %c24_85 = arith.constant 24 : index
    %c0_86 = arith.constant 0 : index
    %100 = vector.load %arg10[%c24_85, %c0_86] : memref<32x320xbf16, #tpu.memory_space<vmem>>, vector<1x320xbf16>
    tpu.vector_store %arg10[%c24_85, %c0_86], %99 {strides = array<i32>} : memref<32x320xbf16, #tpu.memory_space<vmem>>, vector<1x320xbf16>,
    %cst = arith.constant 0.000000e+00 : bf16
    %101 = vector.broadcast %cst : bf16 to vector<7x320xbf16>
    %c25 = arith.constant 25 : index
    %c0_87 = arith.constant 0 : index
    %102 = vector.load %arg10[%c25, %c0_87] : memref<32x320xbf16, #tpu.memory_space<vmem>>, vector<7x320xbf16>
    tpu.vector_store %arg10[%c25, %c0_87], %101 {strides = array<i32>} : memref<32x320xbf16, #tpu.memory_space<vmem>>, vector<7x320xbf16>,
    %c0_88 = arith.constant 0 : index
    %c0_89 = arith.constant 0 : index
    %103 = vector.load %arg3[%c0_88, %c0_89] : memref<64x32xbf16, #tpu.memory_space<vmem>>, vector<64x32xbf16>
    %c0_90 = arith.constant 0 : index
    %c0_91 = arith.constant 0 : index
    %104 = vector.load %arg10[%c0_90, %c0_91] : memref<32x320xbf16, #tpu.memory_space<vmem>>, vector<32x320xbf16>
    %cst_92 = arith.constant dense<0.000000e+00> : vector<64x320xf32>
    %105 = tpu.matmul %103, %104, %cst_92 {dimension_numbers = #tpu.dot_dimension_numbers<[1], [0], [0], [1], [0, 0, 1, 1], [], []>} : vector<64x32xbf16>, vector<32x320xbf16>, vector<64x320xf32> -> vector<64x320xf32>
    %c0_93 = arith.constant 0 : index
    %c0_94 = arith.constant 0 : index
    %106 = vector.load %arg4[%c0_93, %c0_94] : memref<64x1xf32, #tpu.memory_space<vmem>>, vector<64x1xf32>
    %107 = vector.broadcast %106 : vector<64x1xf32> to vector<64x320xf32>
    %108 = arith.addf %105, %107 : vector<64x320xf32>
    %109 = math.tanh %108 : vector<64x320xf32>
    %110 = vector.broadcast %0 : vector<1x320xf32> to vector<64x320xf32>
    %111 = arith.mulf %109, %110 : vector<64x320xf32>
    %112 = arith.truncf %111 : vector<64x320xf32> to vector<64x320xbf16>
    %cst_95 = arith.constant 0.000000e+00 : bf16
    %113 = vector.broadcast %cst_95 : bf16 to vector<64x21xbf16>
    %c0_96 = arith.constant 0 : index
    %c0_97 = arith.constant 0 : index
    %114 = vector.load %arg11[%c0_96, %c0_97] : memref<64x380xbf16, #tpu.memory_space<vmem>>, vector<64x21xbf16>
    tpu.vector_store %arg11[%c0_96, %c0_97], %113 {strides = array<i32>} : memref<64x380xbf16, #tpu.memory_space<vmem>>, vector<64x21xbf16>,
    %c0_98 = arith.constant 0 : index
    %c21_99 = arith.constant 21 : index
    %115 = vector.load %arg11[%c0_98, %c21_99] : memref<64x380xbf16, #tpu.memory_space<vmem>>, vector<64x320xbf16>
    tpu.vector_store %arg11[%c0_98, %c21_99], %112 {strides = array<i32>} : memref<64x380xbf16, #tpu.memory_space<vmem>>, vector<64x320xbf16>,
    %cst_100 = arith.constant 0.000000e+00 : bf16
    %116 = vector.broadcast %cst_100 : bf16 to vector<64x39xbf16>
    %c0_101 = arith.constant 0 : index
    %c341 = arith.constant 341 : index
    %117 = vector.load %arg11[%c0_101, %c341] : memref<64x380xbf16, #tpu.memory_space<vmem>>, vector<64x39xbf16>
    tpu.vector_store %arg11[%c0_101, %c341], %116 {strides = array<i32>} : memref<64x380xbf16, #tpu.memory_space<vmem>>, vector<64x39xbf16>,
    %cst_102 = arith.constant 0.000000e+00 : f32
    %118 = vector.broadcast %cst_102 : f32 to vector<32x320xf32>
    %c0_103 = arith.constant 0 : index
    %c0_104 = arith.constant 0 : index
    %119 = vector.load %arg5[%c0_103, %c0_104] : memref<32x576xbf16, #tpu.memory_space<vmem>>, vector<32x64xbf16>
    %c0_105 = arith.constant 0 : index
    %c0_106 = arith.constant 0 : index
    %120 = vector.load %arg11[%c0_105, %c0_106] : memref<64x380xbf16, #tpu.memory_space<vmem>>, vector<64x320xbf16>
    %cst_107 = arith.constant dense<0.000000e+00> : vector<32x320xf32>
    %121 = tpu.matmul %119, %120, %cst_107 {dimension_numbers = #tpu.dot_dimension_numbers<[1], [0], [0], [1], [0, 0, 1, 1], [], []>} : vector<32x64xbf16>, vector<64x320xbf16>, vector<32x320xf32> -> vector<32x320xf32>
    %122 = arith.addf %118, %121 : vector<32x320xf32>
    %c0_108 = arith.constant 0 : index
    %c64_109 = arith.constant 64 : index
    %123 = vector.load %arg5[%c0_108, %c64_109] : memref<32x576xbf16, #tpu.memory_space<vmem>>, vector<32x64xbf16>
    %c0_110 = arith.constant 0 : index
    %c1_111 = arith.constant 1 : index
    %124 = vector.load %arg11[%c0_110, %c1_111] : memref<64x380xbf16, #tpu.memory_space<vmem>>, vector<64x320xbf16>
    %cst_112 = arith.constant dense<0.000000e+00> : vector<32x320xf32>
    %125 = tpu.matmul %123, %124, %cst_112 {dimension_numbers = #tpu.dot_dimension_numbers<[1], [0], [0], [1], [0, 0, 1, 1], [], []>} : vector<32x64xbf16>, vector<64x320xbf16>, vector<32x320xf32> -> vector<32x320xf32>
    %126 = arith.addf %122, %125 : vector<32x320xf32>
    %c0_113 = arith.constant 0 : index
    %c128 = arith.constant 128 : index
    %127 = vector.load %arg5[%c0_113, %c128] : memref<32x576xbf16, #tpu.memory_space<vmem>>, vector<32x64xbf16>
    %c0_114 = arith.constant 0 : index
    %c2_115 = arith.constant 2 : index
    %128 = vector.load %arg11[%c0_114, %c2_115] : memref<64x380xbf16, #tpu.memory_space<vmem>>, vector<64x320xbf16>
    %cst_116 = arith.constant dense<0.000000e+00> : vector<32x320xf32>
    %129 = tpu.matmul %127, %128, %cst_116 {dimension_numbers = #tpu.dot_dimension_numbers<[1], [0], [0], [1], [0, 0, 1, 1], [], []>} : vector<32x64xbf16>, vector<64x320xbf16>, vector<32x320xf32> -> vector<32x320xf32>
    %130 = arith.addf %126, %129 : vector<32x320xf32>
    %c0_117 = arith.constant 0 : index
    %c192 = arith.constant 192 : index
    %131 = vector.load %arg5[%c0_117, %c192] : memref<32x576xbf16, #tpu.memory_space<vmem>>, vector<32x64xbf16>
    %c0_118 = arith.constant 0 : index
    %c20_119 = arith.constant 20 : index
    %132 = vector.load %arg11[%c0_118, %c20_119] : memref<64x380xbf16, #tpu.memory_space<vmem>>, vector<64x320xbf16>
    %cst_120 = arith.constant dense<0.000000e+00> : vector<32x320xf32>
    %133 = tpu.matmul %131, %132, %cst_120 {dimension_numbers = #tpu.dot_dimension_numbers<[1], [0], [0], [1], [0, 0, 1, 1], [], []>} : vector<32x64xbf16>, vector<64x320xbf16>, vector<32x320xf32> -> vector<32x320xf32>
    %134 = arith.addf %130, %133 : vector<32x320xf32>
    %c0_121 = arith.constant 0 : index
    %c256 = arith.constant 256 : index
    %135 = vector.load %arg5[%c0_121, %c256] : memref<32x576xbf16, #tpu.memory_space<vmem>>, vector<32x64xbf16>
    %c0_122 = arith.constant 0 : index
    %c21_123 = arith.constant 21 : index
    %136 = vector.load %arg11[%c0_122, %c21_123] : memref<64x380xbf16, #tpu.memory_space<vmem>>, vector<64x320xbf16>
    %cst_124 = arith.constant dense<0.000000e+00> : vector<32x320xf32>
    %137 = tpu.matmul %135, %136, %cst_124 {dimension_numbers = #tpu.dot_dimension_numbers<[1], [0], [0], [1], [0, 0, 1, 1], [], []>} : vector<32x64xbf16>, vector<64x320xbf16>, vector<32x320xf32> -> vector<32x320xf32>
    %138 = arith.addf %134, %137 : vector<32x320xf32>
    %c0_125 = arith.constant 0 : index
    %c320 = arith.constant 320 : index
    %139 = vector.load %arg5[%c0_125, %c320] : memref<32x576xbf16, #tpu.memory_space<vmem>>, vector<32x64xbf16>
    %c0_126 = arith.constant 0 : index
    %c22_127 = arith.constant 22 : index
    %140 = vector.load %arg11[%c0_126, %c22_127] : memref<64x380xbf16, #tpu.memory_space<vmem>>, vector<64x320xbf16>
    %cst_128 = arith.constant dense<0.000000e+00> : vector<32x320xf32>
    %141 = tpu.matmul %139, %140, %cst_128 {dimension_numbers = #tpu.dot_dimension_numbers<[1], [0], [0], [1], [0, 0, 1, 1], [], []>} : vector<32x64xbf16>, vector<64x320xbf16>, vector<32x320xf32> -> vector<32x320xf32>
    %142 = arith.addf %138, %141 : vector<32x320xf32>
    %c0_129 = arith.constant 0 : index
    %c384 = arith.constant 384 : index
    %143 = vector.load %arg5[%c0_129, %c384] : memref<32x576xbf16, #tpu.memory_space<vmem>>, vector<32x64xbf16>
    %c0_130 = arith.constant 0 : index
    %c40_131 = arith.constant 40 : index
    %144 = vector.load %arg11[%c0_130, %c40_131] : memref<64x380xbf16, #tpu.memory_space<vmem>>, vector<64x320xbf16>
    %cst_132 = arith.constant dense<0.000000e+00> : vector<32x320xf32>
    %145 = tpu.matmul %143, %144, %cst_132 {dimension_numbers = #tpu.dot_dimension_numbers<[1], [0], [0], [1], [0, 0, 1, 1], [], []>} : vector<32x64xbf16>, vector<64x320xbf16>, vector<32x320xf32> -> vector<32x320xf32>
    %146 = arith.addf %142, %145 : vector<32x320xf32>
    %c0_133 = arith.constant 0 : index
    %c448 = arith.constant 448 : index
    %147 = vector.load %arg5[%c0_133, %c448] : memref<32x576xbf16, #tpu.memory_space<vmem>>, vector<32x64xbf16>
    %c0_134 = arith.constant 0 : index
    %c41_135 = arith.constant 41 : index
    %148 = vector.load %arg11[%c0_134, %c41_135] : memref<64x380xbf16, #tpu.memory_space<vmem>>, vector<64x320xbf16>
    %cst_136 = arith.constant dense<0.000000e+00> : vector<32x320xf32>
    %149 = tpu.matmul %147, %148, %cst_136 {dimension_numbers = #tpu.dot_dimension_numbers<[1], [0], [0], [1], [0, 0, 1, 1], [], []>} : vector<32x64xbf16>, vector<64x320xbf16>, vector<32x320xf32> -> vector<32x320xf32>
    %150 = arith.addf %146, %149 : vector<32x320xf32>
    %c0_137 = arith.constant 0 : index
    %c512 = arith.constant 512 : index
    %151 = vector.load %arg5[%c0_137, %c512] : memref<32x576xbf16, #tpu.memory_space<vmem>>, vector<32x64xbf16>
    %c0_138 = arith.constant 0 : index
    %c42_139 = arith.constant 42 : index
    %152 = vector.load %arg11[%c0_138, %c42_139] : memref<64x380xbf16, #tpu.memory_space<vmem>>, vector<64x320xbf16>
    %cst_140 = arith.constant dense<0.000000e+00> : vector<32x320xf32>
    %153 = tpu.matmul %151, %152, %cst_140 {dimension_numbers = #tpu.dot_dimension_numbers<[1], [0], [0], [1], [0, 0, 1, 1], [], []>} : vector<32x64xbf16>, vector<64x320xbf16>, vector<32x320xf32> -> vector<32x320xf32>
    %154 = arith.addf %150, %153 : vector<32x320xf32>
    %c0_141 = arith.constant 0 : index
    %c0_142 = arith.constant 0 : index
    %155 = vector.load %arg6[%c0_141, %c0_142] : memref<32x1xf32, #tpu.memory_space<vmem>>, vector<32x1xf32>
    %156 = vector.broadcast %155 : vector<32x1xf32> to vector<32x320xf32>
    %157 = arith.addf %154, %156 : vector<32x320xf32>
    %158 = math.tanh %157 : vector<32x320xf32>
    %159 = vector.broadcast %0 : vector<1x320xf32> to vector<32x320xf32>
    %160 = arith.mulf %158, %159 : vector<32x320xf32>
    %161 = arith.truncf %160 : vector<32x320xf32> to vector<32x320xbf16>
    %cst_143 = arith.constant 0.000000e+00 : bf16
    %162 = vector.broadcast %cst_143 : bf16 to vector<32x21xbf16>
    %c0_144 = arith.constant 0 : index
    %c0_145 = arith.constant 0 : index
    %163 = vector.load %arg12[%c0_144, %c0_145] : memref<32x380xbf16, #tpu.memory_space<vmem>>, vector<32x21xbf16>
    tpu.vector_store %arg12[%c0_144, %c0_145], %162 {strides = array<i32>} : memref<32x380xbf16, #tpu.memory_space<vmem>>, vector<32x21xbf16>,
    %c0_146 = arith.constant 0 : index
    %c21_147 = arith.constant 21 : index
    %164 = vector.load %arg12[%c0_146, %c21_147] : memref<32x380xbf16, #tpu.memory_space<vmem>>, vector<32x320xbf16>
    tpu.vector_store %arg12[%c0_146, %c21_147], %161 {strides = array<i32>} : memref<32x380xbf16, #tpu.memory_space<vmem>>, vector<32x320xbf16>,
    %cst_148 = arith.constant 0.000000e+00 : bf16
    %165 = vector.broadcast %cst_148 : bf16 to vector<32x39xbf16>
    %c0_149 = arith.constant 0 : index
    %c341_150 = arith.constant 341 : index
    %166 = vector.load %arg12[%c0_149, %c341_150] : memref<32x380xbf16, #tpu.memory_space<vmem>>, vector<32x39xbf16>
    tpu.vector_store %arg12[%c0_149, %c341_150], %165 {strides = array<i32>} : memref<32x380xbf16, #tpu.memory_space<vmem>>, vector<32x39xbf16>,
    %cst_151 = arith.constant 0.000000e+00 : f32
    %167 = vector.broadcast %cst_151 : f32 to vector<9x320xf32>
    %c0_152 = arith.constant 0 : index
    %c0_153 = arith.constant 0 : index
    %168 = vector.load %arg7[%c0_152, %c0_153] : memref<9x288xbf16, #tpu.memory_space<vmem>>, vector<9x32xbf16>
    %c0_154 = arith.constant 0 : index
    %c0_155 = arith.constant 0 : index
    %169 = vector.load %arg12[%c0_154, %c0_155] : memref<32x380xbf16, #tpu.memory_space<vmem>>, vector<32x320xbf16>
    %cst_156 = arith.constant dense<0.000000e+00> : vector<9x320xf32>
    %170 = tpu.matmul %168, %169, %cst_156 {dimension_numbers = #tpu.dot_dimension_numbers<[1], [0], [0], [1], [0, 0, 1, 1], [], []>} : vector<9x32xbf16>, vector<32x320xbf16>, vector<9x320xf32> -> vector<9x320xf32>
    %171 = arith.addf %167, %170 : vector<9x320xf32>
    %c0_157 = arith.constant 0 : index
    %c32 = arith.constant 32 : index
    %172 = vector.load %arg7[%c0_157, %c32] : memref<9x288xbf16, #tpu.memory_space<vmem>>, vector<9x32xbf16>
    %c0_158 = arith.constant 0 : index
    %c1_159 = arith.constant 1 : index
    %173 = vector.load %arg12[%c0_158, %c1_159] : memref<32x380xbf16, #tpu.memory_space<vmem>>, vector<32x320xbf16>
    %cst_160 = arith.constant dense<0.000000e+00> : vector<9x320xf32>
    %174 = tpu.matmul %172, %173, %cst_160 {dimension_numbers = #tpu.dot_dimension_numbers<[1], [0], [0], [1], [0, 0, 1, 1], [], []>} : vector<9x32xbf16>, vector<32x320xbf16>, vector<9x320xf32> -> vector<9x320xf32>
    %175 = arith.addf %171, %174 : vector<9x320xf32>
    %c0_161 = arith.constant 0 : index
    %c64_162 = arith.constant 64 : index
    %176 = vector.load %arg7[%c0_161, %c64_162] : memref<9x288xbf16, #tpu.memory_space<vmem>>, vector<9x32xbf16>
    %c0_163 = arith.constant 0 : index
    %c2_164 = arith.constant 2 : index
    %177 = vector.load %arg12[%c0_163, %c2_164] : memref<32x380xbf16, #tpu.memory_space<vmem>>, vector<32x320xbf16>
    %cst_165 = arith.constant dense<0.000000e+00> : vector<9x320xf32>
    %178 = tpu.matmul %176, %177, %cst_165 {dimension_numbers = #tpu.dot_dimension_numbers<[1], [0], [0], [1], [0, 0, 1, 1], [], []>} : vector<9x32xbf16>, vector<32x320xbf16>, vector<9x320xf32> -> vector<9x320xf32>
    %179 = arith.addf %175, %178 : vector<9x320xf32>
    %c0_166 = arith.constant 0 : index
    %c96 = arith.constant 96 : index
    %180 = vector.load %arg7[%c0_166, %c96] : memref<9x288xbf16, #tpu.memory_space<vmem>>, vector<9x32xbf16>
    %c0_167 = arith.constant 0 : index
    %c20_168 = arith.constant 20 : index
    %181 = vector.load %arg12[%c0_167, %c20_168] : memref<32x380xbf16, #tpu.memory_space<vmem>>, vector<32x320xbf16>
    %cst_169 = arith.constant dense<0.000000e+00> : vector<9x320xf32>
    %182 = tpu.matmul %180, %181, %cst_169 {dimension_numbers = #tpu.dot_dimension_numbers<[1], [0], [0], [1], [0, 0, 1, 1], [], []>} : vector<9x32xbf16>, vector<32x320xbf16>, vector<9x320xf32> -> vector<9x320xf32>
    %183 = arith.addf %179, %182 : vector<9x320xf32>
    %c0_170 = arith.constant 0 : index
    %c128_171 = arith.constant 128 : index
    %184 = vector.load %arg7[%c0_170, %c128_171] : memref<9x288xbf16, #tpu.memory_space<vmem>>, vector<9x32xbf16>
    %c0_172 = arith.constant 0 : index
    %c21_173 = arith.constant 21 : index
    %185 = vector.load %arg12[%c0_172, %c21_173] : memref<32x380xbf16, #tpu.memory_space<vmem>>, vector<32x320xbf16>
    %cst_174 = arith.constant dense<0.000000e+00> : vector<9x320xf32>
    %186 = tpu.matmul %184, %185, %cst_174 {dimension_numbers = #tpu.dot_dimension_numbers<[1], [0], [0], [1], [0, 0, 1, 1], [], []>} : vector<9x32xbf16>, vector<32x320xbf16>, vector<9x320xf32> -> vector<9x320xf32>
    %187 = arith.addf %183, %186 : vector<9x320xf32>
    %c0_175 = arith.constant 0 : index
    %c160 = arith.constant 160 : index
    %188 = vector.load %arg7[%c0_175, %c160] : memref<9x288xbf16, #tpu.memory_space<vmem>>, vector<9x32xbf16>
    %c0_176 = arith.constant 0 : index
    %c22_177 = arith.constant 22 : index
    %189 = vector.load %arg12[%c0_176, %c22_177] : memref<32x380xbf16, #tpu.memory_space<vmem>>, vector<32x320xbf16>
    %cst_178 = arith.constant dense<0.000000e+00> : vector<9x320xf32>
    %190 = tpu.matmul %188, %189, %cst_178 {dimension_numbers = #tpu.dot_dimension_numbers<[1], [0], [0], [1], [0, 0, 1, 1], [], []>} : vector<9x32xbf16>, vector<32x320xbf16>, vector<9x320xf32> -> vector<9x320xf32>
    %191 = arith.addf %187, %190 : vector<9x320xf32>
    %c0_179 = arith.constant 0 : index
    %c192_180 = arith.constant 192 : index
    %192 = vector.load %arg7[%c0_179, %c192_180] : memref<9x288xbf16, #tpu.memory_space<vmem>>, vector<9x32xbf16>
    %c0_181 = arith.constant 0 : index
    %c40_182 = arith.constant 40 : index
    %193 = vector.load %arg12[%c0_181, %c40_182] : memref<32x380xbf16, #tpu.memory_space<vmem>>, vector<32x320xbf16>
    %cst_183 = arith.constant dense<0.000000e+00> : vector<9x320xf32>
    %194 = tpu.matmul %192, %193, %cst_183 {dimension_numbers = #tpu.dot_dimension_numbers<[1], [0], [0], [1], [0, 0, 1, 1], [], []>} : vector<9x32xbf16>, vector<32x320xbf16>, vector<9x320xf32> -> vector<9x320xf32>
    %195 = arith.addf %191, %194 : vector<9x320xf32>
    %c0_184 = arith.constant 0 : index
    %c224 = arith.constant 224 : index
    %196 = vector.load %arg7[%c0_184, %c224] : memref<9x288xbf16, #tpu.memory_space<vmem>>, vector<9x32xbf16>
    %c0_185 = arith.constant 0 : index
    %c41_186 = arith.constant 41 : index
    %197 = vector.load %arg12[%c0_185, %c41_186] : memref<32x380xbf16, #tpu.memory_space<vmem>>, vector<32x320xbf16>
    %cst_187 = arith.constant dense<0.000000e+00> : vector<9x320xf32>
    %198 = tpu.matmul %196, %197, %cst_187 {dimension_numbers = #tpu.dot_dimension_numbers<[1], [0], [0], [1], [0, 0, 1, 1], [], []>} : vector<9x32xbf16>, vector<32x320xbf16>, vector<9x320xf32> -> vector<9x320xf32>
    %199 = arith.addf %195, %198 : vector<9x320xf32>
    %c0_188 = arith.constant 0 : index
    %c256_189 = arith.constant 256 : index
    %200 = vector.load %arg7[%c0_188, %c256_189] : memref<9x288xbf16, #tpu.memory_space<vmem>>, vector<9x32xbf16>
    %c0_190 = arith.constant 0 : index
    %c42_191 = arith.constant 42 : index
    %201 = vector.load %arg12[%c0_190, %c42_191] : memref<32x380xbf16, #tpu.memory_space<vmem>>, vector<32x320xbf16>
    %cst_192 = arith.constant dense<0.000000e+00> : vector<9x320xf32>
    %202 = tpu.matmul %200, %201, %cst_192 {dimension_numbers = #tpu.dot_dimension_numbers<[1], [0], [0], [1], [0, 0, 1, 1], [], []>} : vector<9x32xbf16>, vector<32x320xbf16>, vector<9x320xf32> -> vector<9x320xf32>
    %203 = arith.addf %199, %202 : vector<9x320xf32>
    %c0_193 = arith.constant 0 : index
    %c0_194 = arith.constant 0 : index
    %204 = vector.load %arg8[%c0_193, %c0_194] : memref<9x1xf32, #tpu.memory_space<vmem>>, vector<9x1xf32>
    %205 = vector.broadcast %204 : vector<9x1xf32> to vector<9x320xf32>
    %206 = arith.addf %203, %205 : vector<9x320xf32>
    %207 = arith.negf %206 : vector<9x320xf32>
    %208 = math.exp %207 : vector<9x320xf32>
    %cst_195 = arith.constant 1.000000e+00 : f32
    %209 = vector.broadcast %cst_195 : f32 to vector<9x320xf32>
    %210 = arith.addf %209, %208 : vector<9x320xf32>
    %211 = arith.divf %209, %210 : vector<9x320xf32>
    %c0_196 = arith.constant 0 : index
    %c0_197 = arith.constant 0 : index
    %c0_198 = arith.constant 0 : index
    %212 = vector.load %arg9[%c0_196, %c0_197, %c0_198] : memref<1x9x320xf32, #tpu.memory_space<vmem>>, vector<1x9x320xf32>
    %213 = vector.shape_cast %212 : vector<1x9x320xf32> to vector<9x320xf32>
    %214 = vector.shape_cast %211 : vector<9x320xf32> to vector<1x9x320xf32>
    tpu.vector_store %arg9[%c0_196, %c0_197, %c0_198], %214 {strides = array<i32>} : memref<1x9x320xf32, #tpu.memory_space<vmem>>, vector<1x9x320xf32>,
    return
  }
  func.func @transform_0(%arg0: i32) -> (i32, i32, i32) {
    %c0_i32 = arith.constant 0 : i32
    %c0_i32_0 = arith.constant 0 : i32
    %c0_i32_1 = arith.constant 0 : i32
    return %arg0, %c0_i32, %c0_i32_0 : i32, i32, i32
  }
  func.func @transform_1(%arg0: i32) -> (i32, i32) {
    %c0_i32 = arith.constant 0 : i32
    %c0_i32_0 = arith.constant 0 : i32
    %c0_i32_1 = arith.constant 0 : i32
    return %c0_i32, %c0_i32_0 : i32, i32
  }
  func.func @transform_2(%arg0: i32) -> (i32, i32) {
    %c0_i32 = arith.constant 0 : i32
    %c0_i32_0 = arith.constant 0 : i32
    %c0_i32_1 = arith.constant 0 : i32
    return %c0_i32, %c0_i32_0 : i32, i32
  }
  func.func @transform_3(%arg0: i32) -> (i32, i32) {
    %c0_i32 = arith.constant 0 : i32
    %c0_i32_0 = arith.constant 0 : i32
    %c0_i32_1 = arith.constant 0 : i32
    return %c0_i32, %c0_i32_0 : i32, i32
  }
  func.func @transform_4(%arg0: i32) -> (i32, i32) {
    %c0_i32 = arith.constant 0 : i32
    %c0_i32_0 = arith.constant 0 : i32
    %c0_i32_1 = arith.constant 0 : i32
    return %c0_i32, %c0_i32_0 : i32, i32
  }
  func.func @transform_5(%arg0: i32) -> (i32, i32) {
    %c0_i32 = arith.constant 0 : i32
    %c0_i32_0 = arith.constant 0 : i32
    %c0_i32_1 = arith.constant 0 : i32
    return %c0_i32, %c0_i32_0 : i32, i32
  }
  func.func @transform_6(%arg0: i32) -> (i32, i32) {
    %c0_i32 = arith.constant 0 : i32
    %c0_i32_0 = arith.constant 0 : i32
    %c0_i32_1 = arith.constant 0 : i32
    return %c0_i32, %c0_i32_0 : i32, i32
  }
  func.func @transform_7(%arg0: i32) -> (i32, i32) {
    %c0_i32 = arith.constant 0 : i32
    %c0_i32_0 = arith.constant 0 : i32
    %c0_i32_1 = arith.constant 0 : i32
    return %c0_i32, %c0_i32_0 : i32, i32
  }
  func.func @transform_8(%arg0: i32) -> (i32, i32, i32) {
    %c0_i32 = arith.constant 0 : i32
    %c0_i32_0 = arith.constant 0 : i32
    %c0_i32_1 = arith.constant 0 : i32
    return %arg0, %c0_i32, %c0_i32_0 : i32, i32, i32
  }
}

</mosaic_0001>

<llo_original>
// kernel: espcn_forward.1
$region0: #{espcn_forward.1}
  #allocation0 [shape = 'u32[]', space=smem, size = 0x4, offset = 0x4, fixed_abs, tag = 'smem constant byte address 0x4 - core index']
  #allocation1 [shape = 'u32[144,128]{1,0:T(1,128)}', space=vmem, size = 0x12000, scoped, tag = 'internal scratch']
  #allocation2 [shape = 'bf16[32,320]{1,0:T(16,128)(2,1)}', space=vmem, size = 0x6000, scoped, tag = 'scratch operand']
  #allocation3 [shape = 'bf16[64,380]{1,0:T(16,128)(2,1)}', space=vmem, size = 0xc000, scoped, tag = 'scratch operand']
  #allocation4 [shape = 'bf16[32,380]{1,0:T(16,128)(2,1)}', space=vmem, size = 0x6000, scoped, tag = 'scratch operand']
  %s0 = inlined_call_operand.vmem [shape: f32[2,1,420], index: 0, kind: input, shape index: {}]
  %s1 = inlined_call_operand.vmem [shape: f32[1,320], index: 1, kind: input, shape index: {}]
  %s2 = inlined_call_operand.vmem [shape: bf16[64,32], index: 2, kind: input, shape index: {}]
  %s3 = inlined_call_operand.vmem [shape: f32[64,1], index: 3, kind: input, shape index: {}]
  %s4 = inlined_call_operand.vmem [shape: bf16[32,576], index: 4, kind: input, shape index: {}]
  %s5 = inlined_call_operand.vmem [shape: f32[32,1], index: 5, kind: input, shape index: {}]
  %s6 = inlined_call_operand.vmem [shape: bf16[9,288], index: 6, kind: input, shape index: {}]
  %s7 = inlined_call_operand.vmem [shape: f32[9,1], index: 7, kind: input, shape index: {}]
  %s8 = inlined_call_operand.vmem [shape: f32[2,9,320], index: 8, kind: output, shape index: {}]
  %s9 = sld [smem:[#allocation0]]
  $region65: #{espcn_forward.1} parent=0
    _
  %s11 = ssub.s32 1, %s9
  %s12 = scalar_select 0, %s11, %s9
  loop: start=0, step=1, limit=4
  $region2: #{espcn_forward.1} parent=0 // loop_pre_header
    _
  $region3: #{espcn_forward.1} parent=0 // loop_header
    %s14 = sphi 0, %s18
    %p15 = scmp.ge.s32.totalorder %s14, 4
    %s24 = sphi 0, %s26
    %s27 = sphi 0, %s24
    %s28 = sphi 0, %s27
    %s44 = sphi 0, %s28
    %s48 = sphi 0, %s48
    %s50 = sphi 0, %s48
    %s51 = sphi 0, %s50
    %s65 = sphi 0, %s51
    %s69 = sphi 0, %s69
    %s71 = sphi 0, %s69
    %s72 = sphi 0, %s71
    %s86 = sphi 0, %s72
    %s90 = sphi 0, %s90
    %s92 = sphi 0, %s90
    %s93 = sphi 0, %s92
    %s107 = sphi 0, %s93
    %s111 = sphi 0, %s111
    %s113 = sphi 0, %s111
    %s114 = sphi 0, %s113
    %s128 = sphi 0, %s114
    %s132 = sphi 0, %s132
    %s134 = sphi 0, %s132
    %s135 = sphi 0, %s134
    %s149 = sphi 0, %s135
    %s153 = sphi 0, %s153
    %s155 = sphi 0, %s153
    %s156 = sphi 0, %s155
    %s170 = sphi 0, %s156
    %s174 = sphi 0, %s174
    %s176 = sphi 0, %s174
    %s177 = sphi 0, %s176
    %s191 = sphi 0, %s177
    %s197 = sphi 0, %s199
    %s200 = sphi 0, %s197
    %s201 = sphi 0, %s200
    %s217 = sphi 0, %s201
  $region4: #{espcn_forward.1} parent=0 // loop_header_branch
    %17 = sbr.rel (%p15) target = $region8
  $region5: #{espcn_forward.1} parent=0 // loop_body
    %s19 = ssub.s32 %s14, 1
    %s20 = ssub.s32 %s14, 2
    %s21 = sadd.s32 %s14, 1
    %s22 = ssub.s32 %s14, %s21
    %p23 = scmp.eq.s32.totalorder %s22, 0
    %s25 = sadd.s32 %s24, 1
    %s26 = scalar_select %p23, %s24, %s25
    %p29 = pneg %p23
    %p30 = scmp.eq.s32.totalorder %s14, 1
    %p31 = por %p29, %p30
    %p32 = scmp.ne.s32.totalorder %s24, %s27
    %p33 = scmp.eq.s32.totalorder %s14, 0
    %p34 = por %p32, %p33
    %p35 = scmp.ne.s32.totalorder %s24, %s27
    %p36 = scmp.eq.s32.totalorder %s19, 1
    %p37 = por %p35, %p36
    %p38 = scmp.ne.s32.totalorder %s27, %s28
    %p39 = scmp.eq.s32.totalorder %s19, 0
    %p40 = por %p38, %p39
    %p41 = scmp.ne.s32.totalorder %s27, %s28
    %p42 = scmp.eq.s32.totalorder %s20, 1
    %p43 = por %p41, %p42
    %p45 = scmp.ne.s32.totalorder %s28, %s44
    %p46 = scmp.eq.s32.totalorder %s20, 0
    %p47 = por %p45, %p46
    %s49 = sadd.s32 %s48, 1
    %p52 = scmp.eq.s32.totalorder %s14, 1
    %p53 = scmp.ne.s32.totalorder %s48, %s50
    %p54 = scmp.eq.s32.totalorder %s14, 0
    %p55 = por %p53, %p54
    %p56 = scmp.ne.s32.totalorder %s48, %s50
    %p57 = scmp.eq.s32.totalorder %s19, 1
    %p58 = por %p56, %p57
    %p59 = scmp.ne.s32.totalorder %s50, %s51
    %p60 = scmp.eq.s32.totalorder %s19, 0
    %p61 = por %p59, %p60
    %p62 = scmp.ne.s32.totalorder %s50, %s51
    %p63 = scmp.eq.s32.totalorder %s20, 1
    %p64 = por %p62, %p63
    %p66 = scmp.ne.s32.totalorder %s51, %s65
    %p67 = scmp.eq.s32.totalorder %s20, 0
    %p68 = por %p66, %p67
    %s70 = sadd.s32 %s69, 1
    %p73 = scmp.eq.s32.totalorder %s14, 1
    %p74 = scmp.ne.s32.totalorder %s69, %s71
    %p75 = scmp.eq.s32.totalorder %s14, 0
    %p76 = por %p74, %p75
    %p77 = scmp.ne.s32.totalorder %s69, %s71
    %p78 = scmp.eq.s32.totalorder %s19, 1
    %p79 = por %p77, %p78
    %p80 = scmp.ne.s32.totalorder %s71, %s72
    %p81 = scmp.eq.s32.totalorder %s19, 0
    %p82 = por %p80, %p81
    %p83 = scmp.ne.s32.totalorder %s71, %s72
    %p84 = scmp.eq.s32.totalorder %s20, 1
    %p85 = por %p83, %p84
    %p87 = scmp.ne.s32.totalorder %s72, %s86
    %p88 = scmp.eq.s32.totalorder %s20, 0
    %p89 = por %p87, %p88
    %s91 = sadd.s32 %s90, 1
    %p94 = scmp.eq.s32.totalorder %s14, 1
    %p95 = scmp.ne.s32.totalorder %s90, %s92
    %p96 = scmp.eq.s32.totalorder %s14, 0
    %p97 = por %p95, %p96
    %p98 = scmp.ne.s32.totalorder %s90, %s92
    %p99 = scmp.eq.s32.totalorder %s19, 1
    %p100 = por %p98, %p99
    %p101 = scmp.ne.s32.totalorder %s92, %s93
    %p102 = scmp.eq.s32.totalorder %s19, 0
    %p103 = por %p101, %p102
    %p104 = scmp.ne.s32.totalorder %s92, %s93
    %p105 = scmp.eq.s32.totalorder %s20, 1
    %p106 = por %p104, %p105
    %p108 = scmp.ne.s32.totalorder %s93, %s107
    %p109 = scmp.eq.s32.totalorder %s20, 0
    %p110 = por %p108, %p109
    %s112 = sadd.s32 %s111, 1
    %p115 = scmp.eq.s32.totalorder %s14, 1
    %p116 = scmp.ne.s32.totalorder %s111, %s113
    %p117 = scmp.eq.s32.totalorder %s14, 0
    %p118 = por %p116, %p117
    %p119 = scmp.ne.s32.totalorder %s111, %s113
    %p120 = scmp.eq.s32.totalorder %s19, 1
    %p121 = por %p119, %p120
    %p122 = scmp.ne.s32.totalorder %s113, %s114
    %p123 = scmp.eq.s32.totalorder %s19, 0
    %p124 = por %p122, %p123
    %p125 = scmp.ne.s32.totalorder %s113, %s114
    %p126 = scmp.eq.s32.totalorder %s20, 1
    %p127 = por %p125, %p126
    %p129 = scmp.ne.s32.totalorder %s114, %s128
    %p130 = scmp.eq.s32.totalorder %s20, 0
    %p131 = por %p129, %p130
    %s133 = sadd.s32 %s132, 1
    %p136 = scmp.eq.s32.totalorder %s14, 1
    %p137 = scmp.ne.s32.totalorder %s132, %s134
    %p138 = scmp.eq.s32.totalorder %s14, 0
    %p139 = por %p137, %p138
    %p140 = scmp.ne.s32.totalorder %s132, %s134
    %p141 = scmp.eq.s32.totalorder %s19, 1
    %p142 = por %p140, %p141
    %p143 = scmp.ne.s32.totalorder %s134, %s135
    %p144 = scmp.eq.s32.totalorder %s19, 0
    %p145 = por %p143, %p144
    %p146 = scmp.ne.s32.totalorder %s134, %s135
    %p147 = scmp.eq.s32.totalorder %s20, 1
    %p148 = por %p146, %p147
    %p150 = scmp.ne.s32.totalorder %s135, %s149
    %p151 = scmp.eq.s32.totalorder %s20, 0
    %p152 = por %p150, %p151
    %s154 = sadd.s32 %s153, 1
    %p157 = scmp.eq.s32.totalorder %s14, 1
    %p158 = scmp.ne.s32.totalorder %s153, %s155
    %p159 = scmp.eq.s32.totalorder %s14, 0
    %p160 = por %p158, %p159
    %p161 = scmp.ne.s32.totalorder %s153, %s155
    %p162 = scmp.eq.s32.totalorder %s19, 1
    %p163 = por %p161, %p162
    %p164 = scmp.ne.s32.totalorder %s155, %s156
    %p165 = scmp.eq.s32.totalorder %s19, 0
    %p166 = por %p164, %p165
    %p167 = scmp.ne.s32.totalorder %s155, %s156
    %p168 = scmp.eq.s32.totalorder %s20, 1
    %p169 = por %p167, %p168
    %p171 = scmp.ne.s32.totalorder %s156, %s170
    %p172 = scmp.eq.s32.totalorder %s20, 0
    %p173 = por %p171, %p172
    %s175 = sadd.s32 %s174, 1
    %p178 = scmp.eq.s32.totalorder %s14, 1
    %p179 = scmp.ne.s32.totalorder %s174, %s176
    %p180 = scmp.eq.s32.totalorder %s14, 0
    %p181 = por %p179, %p180
    %p182 = scmp.ne.s32.totalorder %s174, %s176
    %p183 = scmp.eq.s32.totalorder %s19, 1
    %p184 = por %p182, %p183
    %p185 = scmp.ne.s32.totalorder %s176, %s177
    %p186 = scmp.eq.s32.totalorder %s19, 0
    %p187 = por %p185, %p186
    %p188 = scmp.ne.s32.totalorder %s176, %s177
    %p189 = scmp.eq.s32.totalorder %s20, 1
    %p190 = por %p188, %p189
    %p192 = scmp.ne.s32.totalorder %s177, %s191
    %p193 = scmp.eq.s32.totalorder %s20, 0
    %p194 = por %p192, %p193
    %s195 = ssub.s32 %s14, %s21
    %p196 = scmp.eq.s32.totalorder %s195, 0
    %s198 = sadd.s32 %s197, 1
    %s199 = scalar_select %p196, %s197, %s198
    %p202 = pneg %p196
    %p203 = scmp.eq.s32.totalorder %s14, 1
    %p204 = por %p202, %p203
    %p205 = scmp.ne.s32.totalorder %s197, %s200
    %p206 = scmp.eq.s32.totalorder %s14, 0
    %p207 = por %p205, %p206
    %p208 = scmp.ne.s32.totalorder %s197, %s200
    %p209 = scmp.eq.s32.totalorder %s19, 1
    %p210 = por %p208, %p209
    %p211 = scmp.ne.s32.totalorder %s200, %s201
    %p212 = scmp.eq.s32.totalorder %s19, 0
    %p213 = por %p211, %p212
    %p214 = scmp.ne.s32.totalorder %s200, %s201
    %p215 = scmp.eq.s32.totalorder %s20, 1
    %p216 = por %p214, %p215
    %p218 = scmp.ne.s32.totalorder %s201, %s217
    %p219 = scmp.eq.s32.totalorder %s20, 0
    %p220 = por %p218, %p219
    %p221 = scmp.le.s32.totalorder 1, %s14
    %p222 = scmp.lt.s32.totalorder %s14, 3
    %p223 = pnand %p221, %p222
    %p224 = pneg %p223
    // Predicated region
    $region9: #{espcn_forward.1} parent=5 // pred_check
      _
    $region10: #{espcn_forward.1} parent=5 // pred_check_branch
      %226 = sbr.rel (%p223) target = $region12
    $region11: #{espcn_forward.1} parent=5 // pred_region
      %s227 = ssub.s32 %s14, 1
      // Predicated region
      $region13: #{espcn_forward.1} parent=11 // pred_check
        %p228 = pneg %p61
      $region14: #{espcn_forward.1} parent=11 // pred_check_branch
        %230 = sbr.rel (%p228) target = $region16
      $region15: #{espcn_forward.1} parent=11 // pred_region
        _
      $region16: #{espcn_forward.1} parent=11 // pred_fallthru
        _
      // Predicated region
      $region17: #{espcn_forward.1} parent=11 // pred_check
        %p231 = pneg %p82
      $region18: #{espcn_forward.1} parent=11 // pred_check_branch
        %233 = sbr.rel (%p231) target = $region20
      $region19: #{espcn_forward.1} parent=11 // pred_region
        _
      $region20: #{espcn_forward.1} parent=11 // pred_fallthru
        _
      // Predicated region
      $region21: #{espcn_forward.1} parent=11 // pred_check
        %p234 = pneg %p103
      $region22: #{espcn_forward.1} parent=11 // pred_check_branch
        %236 = sbr.rel (%p234) target = $region24
      $region23: #{espcn_forward.1} parent=11 // pred_region
        _
      $region24: #{espcn_forward.1} parent=11 // pred_fallthru
        _
      // Predicated region
      $region25: #{espcn_forward.1} parent=11 // pred_check
        %p237 = pneg %p124
      $region26: #{espcn_forward.1} parent=11 // pred_check_branch
        %239 = sbr.rel (%p237) target = $region28
      $region27: #{espcn_forward.1} parent=11 // pred_region
        _
      $region28: #{espcn_forward.1} parent=11 // pred_fallthru
        _
      // Predicated region
      $region29: #{espcn_forward.1} parent=11 // pred_check
        %p240 = pneg %p145
      $region30: #{espcn_forward.1} parent=11 // pred_check_branch
        %242 = sbr.rel (%p240) target = $region32
      $region31: #{espcn_forward.1} parent=11 // pred_region
        _
      $region32: #{espcn_forward.1} parent=11 // pred_fallthru
        _
      // Predicated region
      $region33: #{espcn_forward.1} parent=11 // pred_check
        %p243 = pneg %p166
      $region34: #{espcn_forward.1} parent=11 // pred_check_branch
        %245 = sbr.rel (%p243) target = $region36
      $region35: #{espcn_forward.1} parent=11 // pred_region
        _
      $region36: #{espcn_forward.1} parent=11 // pred_fallthru
        _
      // Predicated region
      $region37: #{espcn_forward.1} parent=11 // pred_check
        %p246 = pneg %p187
      $region38: #{espcn_forward.1} parent=11 // pred_check_branch
        %248 = sbr.rel (%p246) target = $region40
      $region39: #{espcn_forward.1} parent=11 // pred_region
        _
      $region40: #{espcn_forward.1} parent=11 // pred_fallthru
        _
    $region12: #{espcn_forward.1} parent=5 // pred_fallthru
      _
    %p249 = scmp.lt.s32.totalorder %s14, 2
    // Predicated region
    $region41: #{espcn_forward.1} parent=5 // pred_check
      %p250 = pneg %p249
    $region42: #{espcn_forward.1} parent=5 // pred_check_branch
      %252 = sbr.rel (%p250) target = $region44
    $region43: #{espcn_forward.1} parent=5 // pred_region
      // Predicated region
      $region45: #{espcn_forward.1} parent=43 // pred_check
        %p253 = pneg %p34
      $region46: #{espcn_forward.1} parent=43 // pred_check_branch
        %255 = sbr.rel (%p253) target = $region48
      $region47: #{espcn_forward.1} parent=43 // pred_region
        %p256 = scmp.lt.s32.totalorder %s14, 1
        %s257 = scalar_select %p256, %s14, 1
        %s258 = smul.addr %s257, 4
        %s259 = scalar_lea.vmem %s0, %s258
      $region48: #{espcn_forward.1} parent=43 // pred_fallthru
        _
    $region44: #{espcn_forward.1} parent=5 // pred_fallthru
      _
    %p260 = scmp.le.s32.totalorder 1, %s14
    %p261 = scmp.lt.s32.totalorder %s14, 3
    %p262 = pnand %p260, %p261
    %p263 = pneg %p262
    // Predicated region
    $region49: #{espcn_forward.1} parent=5 // pred_check
      _
    $region50: #{espcn_forward.1} parent=5 // pred_check_branch
      %265 = sbr.rel (%p262) target = $region52
    $region51: #{espcn_forward.1} parent=5 // pred_region
      %s266 = ssub.s32 %s14, 1
      %p267 = scmp.lt.s32.totalorder %s19, 1
      %s268 = scalar_select %p267, %s19, 1
      %s269 = smul.addr %s268, 4
      %s270 = scalar_lea.vmem %s0, %s269
      %p271 = pneg %p40
      %p272 = pneg %p37
      %p273 = pneg %p61
      %p274 = pneg %p58
      %p275 = pneg %p82
      %p276 = pneg %p79
      %p277 = pneg %p103
      %p278 = pneg %p100
      %p279 = pneg %p124
      %p280 = pneg %p121
      %p281 = pneg %p145
      %p282 = pneg %p142
      %p283 = pneg %p166
      %p284 = pneg %p163
      %p285 = pneg %p187
      %p286 = pneg %p184
      %p287 = pneg %p213
      %p288 = pneg %p210
      %p289 = scmp.lt.s32.totalorder %s19, 1
      %s290 = scalar_select %p289, %s19, 1
      %s291 = smul.addr %s290, 6
      %s292 = smul.addr %s291, 8
      %s293 = scalar_lea.vmem %s8, %s292
      %p294 = scmp.lt.s32.totalorder %s19, 1
      %s295 = scalar_select %p294, %s19, 1
      %s296 = smul.addr %s295, 4
      %s297 = scalar_lea.vmem %s0, %s296
      %p298 = scmp.lt.s32.totalorder %s19, 1
      %s299 = scalar_select %p298, %s19, 1
      %s300 = smul.addr %s299, 6
      %s301 = smul.addr %s300, 8
      %s302 = scalar_lea.vmem %s8, %s301
      %v304 = vld [vmem:[%s1] sm:$0x7]
      %v305 = vld [vmem:[%s297] sm:$0x7]
      %v307 = vlaneseq
      %v308 = vshrl.u32 %v307, 7
      %v309 = vsub.s32 0, %v308
      %v310 = vrot.slane %v305, %v309
      %v311 = vlaneseq
      %v312 = vshrl.u32 %v311, 7
      %v313 = vsub.s32 1, %v312
      %v314 = vrot.slane %v305, %v313
      %v315 = vlaneseq
      %v316 = vshrl.u32 %v315, 7
      %v317 = vsub.s32 2, %v316
      %v318 = vrot.slane %v305, %v317
      %v322 = vpack.c.bf16 %v310, %v310
      %v323 = vpack.c.bf16 %v314, %v314
      %v324 = vpack.c.bf16 %v318, %v318
      %vm325 = vcmask 1040384
      %vm326 = vsmask.f32 256
      %vm327 = vmand %vm325, %vm326
      %v328 = vld [vmem:[#allocation2] sm:$0x1]
      %v329 = vsel %vm327, %v322, %v328
      %330 = vst [vmem:[#allocation2] sm:$0x1] %v329
      %v331 = vld [vmem:[#allocation2 + $0x8] sm:$0x1]
      %v332 = vsel %vm327, %v323, %v331
      %333 = vst [vmem:[#allocation2 + $0x8] sm:$0x1] %v332
      %vm334 = vcmask 516096
      %vm335 = vmand %vm334, %vm326
      %v336 = vld [vmem:[#allocation2 + $0x10] sm:$0x1]
      %v337 = vsel %vm335, %v324, %v336
      %338 = vst [vmem:[#allocation2 + $0x10] sm:$0x1] %v337
      %v339 = vld [vmem:[%s297] sm:$0x7]
      %v341 = vlaneseq
      %v342 = vshrl.u32 %v341, 7
      %v343 = vsub.s32 0, %v342
      %v344 = vrot.slane %v339, %v343
      %v345 = vlaneseq
      %v346 = vshrl.u32 %v345, 7
      %v347 = vsub.s32 1, %v346
      %v348 = vrot.slane %v339, %v347
      %v349 = vlaneseq
      %v350 = vshrl.u32 %v349, 7
      %v351 = vsub.s32 2, %v350
      %v352 = vrot.slane %v339, %v351
      %v356 = vpack.c.bf16 %v344, %v344
      %v357 = vpack.c.bf16 %v348, %v348
      %v358 = vpack.c.bf16 %v352, %v352
      %v360 = vshll.u32 %v356, 16
      %v363 = vshll.u32 %v357, 16
      %v366 = vshll.u32 %v358, 16
      %368 = vrot.lane.b32.xlu0 %v360, 127
      %v369 = vpop.permute.xlu0 %368
      %370 = vrot.lane.b32.xlu0 %v363, 127
      %v371 = vpop.permute.xlu0 %370
      %372 = vrot.lane.b32.xlu0 %v366, 127
      %v373 = vpop.permute.xlu0 %372
      %vm374 = vcmask 1039360
      %v375 = vsel %vm374, %v369, %v371
      %v376 = vsel %vm374, %v371, %v373
      %vm380 = vsmask.f32 7938
      %vm381 = vmand %vm325, %vm380
      %v382 = vld [vmem:[#allocation2] sm:$0x1]
      %v383 = vsel %vm381, %v375, %v382
      %384 = vst [vmem:[#allocation2] sm:$0x1] %v383
      %v385 = vld [vmem:[#allocation2 + $0x8] sm:$0x1]
      %v386 = vsel %vm381, %v376, %v385
      %387 = vst [vmem:[#allocation2 + $0x8] sm:$0x1] %v386
      %vm388 = vmand %vm334, %vm380
      %v389 = vld [vmem:[#allocation2 + $0x10] sm:$0x1]
      %v390 = vsel %vm388, %v373, %v389
      %391 = vst [vmem:[#allocation2 + $0x10] sm:$0x1] %v390
      %v392 = vld [vmem:[%s297] sm:$0x7]
      %v394 = vlaneseq
      %v395 = vshrl.u32 %v394, 7
      %v396 = vsub.s32 0, %v395
      %v397 = vrot.slane %v392, %v396
      %v398 = vlaneseq
      %v399 = vshrl.u32 %v398, 7
      %v400 = vsub.s32 1, %v399
      %v401 = vrot.slane %v392, %v400
      %v402 = vlaneseq
      %v403 = vshrl.u32 %v402, 7
      %v404 = vsub.s32 2, %v403
      %v405 = vrot.slane %v392, %v404
      %v409 = vpack.c.bf16 %v397, %v397
      %v410 = vpack.c.bf16 %v401, %v401
      %v411 = vpack.c.bf16 %v405, %v405
      %v415 = vrot.slane %v409, 7
      %v416 = vrot.slane %v410, 7
      %v417 = vrot.slane %v411, 7
      %418 = vrot.lane.b32.xlu0 %v415, 126
      %v419 = vpop.permute.xlu0 %418
      %420 = vrot.lane.b32.xlu0 %v416, 126
      %v421 = vpop.permute.xlu0 %420
      %422 = vrot.lane.b32.xlu0 %v417, 126
      %v423 = vpop.permute.xlu0 %422
      %vm424 = vcmask 1031168
      %v425 = vsel %vm424, %v419, %v421
      %v426 = vsel %vm424, %v421, %v423
      %vm430 = vcmask 1041409
      %vm431 = vsmask.f32 1280
      %vm432 = vmand %vm430, %vm431
      %v433 = vld [vmem:[#allocation2] sm:$0x2]
      %v434 = vsel %vm432, %v425, %v433
      %435 = vst [vmem:[#allocation2] sm:$0x2] %v434
      %v436 = vld [vmem:[#allocation2 + $0x8] sm:$0x2]
      %v437 = vsel %vm432, %v426, %v436
      %438 = vst [vmem:[#allocation2 + $0x8] sm:$0x2] %v437
      %vm439 = vcmask 517121
      %vm440 = vmand %vm439, %vm431
      %v441 = vld [vmem:[#allocation2 + $0x10] sm:$0x2]
      %v442 = vsel %vm440, %v423, %v441
      %443 = vst [vmem:[#allocation2 + $0x10] sm:$0x2] %v442
      %v444 = vld [vmem:[%s297] sm:$0x7]
      %v446 = vlaneseq
      %v447 = vshrl.u32 %v446, 7
      %v448 = vsub.s32 0, %v447
      %v449 = vrot.slane %v444, %v448
      %v450 = vlaneseq
      %v451 = vshrl.u32 %v450, 7
      %v452 = vsub.s32 1, %v451
      %v453 = vrot.slane %v444, %v452
      %v454 = vlaneseq
      %v455 = vshrl.u32 %v454, 7
      %v456 = vsub.s32 2, %v455
      %v457 = vrot.slane %v444, %v456
      %v461 = vpack.c.bf16 %v449, %v449
      %v462 = vpack.c.bf16 %v453, %v453
      %v463 = vpack.c.bf16 %v457, %v457
      %v465 = vshll.u32 %v461, 16
      %v467 = vrot.slane %v465, 7
      %v469 = vshll.u32 %v462, 16
      %v471 = vrot.slane %v469, 7
      %v473 = vshll.u32 %v463, 16
      %v475 = vrot.slane %v473, 7
      %476 = vrot.lane.b32.xlu0 %v467, 125
      %v477 = vpop.permute.xlu0 %476
      %478 = vrot.lane.b32.xlu0 %v471, 125
      %v479 = vpop.permute.xlu0 %478
      %480 = vrot.lane.b32.xlu0 %v475, 125
      %v481 = vpop.permute.xlu0 %480
      %vm482 = vcmask 1022976
      %v483 = vsel %vm482, %v477, %v479
      %v484 = vsel %vm482, %v479, %v481
      %vm488 = vsmask.f32 7942
      %vm489 = vmand %vm430, %vm488
      %v490 = vld [vmem:[#allocation2] sm:$0x2]
      %v491 = vsel %vm489, %v483, %v490
      %492 = vst [vmem:[#allocation2] sm:$0x2] %v491
      %v493 = vld [vmem:[#allocation2 + $0x8] sm:$0x2]
      %v494 = vsel %vm489, %v484, %v493
      %495 = vst [vmem:[#allocation2 + $0x8] sm:$0x2] %v494
      %vm496 = vmand %vm439, %vm488
      %v497 = vld [vmem:[#allocation2 + $0x10] sm:$0x2]
      %v498 = vsel %vm496, %v481, %v497
      %499 = vst [vmem:[#allocation2 + $0x10] sm:$0x2] %v498
      %v500 = vld [vmem:[%s297] sm:$0x7]
      %v502 = vlaneseq
      %v503 = vshrl.u32 %v502, 7
      %v504 = vsub.s32 0, %v503
      %v505 = vrot.slane %v500, %v504
      %v506 = vlaneseq
      %v507 = vshrl.u32 %v506, 7
      %v508 = vsub.s32 1, %v507
      %v509 = vrot.slane %v500, %v508
      %v510 = vlaneseq
      %v511 = vshrl.u32 %v510, 7
      %v512 = vsub.s32 2, %v511
      %v513 = vrot.slane %v500, %v512
      %v517 = vpack.c.bf16 %v505, %v505
      %v518 = vpack.c.bf16 %v509, %v509
      %v519 = vpack.c.bf16 %v513, %v513
      %v523 = vrot.slane %v517, 6
      %v524 = vrot.slane %v518, 6
      %v525 = vrot.slane %v519, 6
      %526 = vrot.lane.b32.xlu0 %v523, 124
      %v527 = vpop.permute.xlu0 %526
      %528 = vrot.lane.b32.xlu0 %v524, 124
      %v529 = vpop.permute.xlu0 %528
      %530 = vrot.lane.b32.xlu0 %v525, 124
      %v531 = vpop.permute.xlu0 %530
      %vm532 = vcmask 1014784
      %v533 = vsel %vm532, %v527, %v529
      %v534 = vsel %vm532, %v529, %v531
      %vm538 = vcmask 1042434
      %vm539 = vsmask.f32 2304
      %vm540 = vmand %vm538, %vm539
      %v541 = vld [vmem:[#allocation2] sm:$0x4]
      %v542 = vsel %vm540, %v533, %v541
      %543 = vst [vmem:[#allocation2] sm:$0x4] %v542
      %v544 = vld [vmem:[#allocation2 + $0x8] sm:$0x4]
      %v545 = vsel %vm540, %v534, %v544
      %546 = vst [vmem:[#allocation2 + $0x8] sm:$0x4] %v545
      %vm547 = vcmask 518146
      %vm548 = vmand %vm547, %vm539
      %v549 = vld [vmem:[#allocation2 + $0x10] sm:$0x4]
      %v550 = vsel %vm548, %v531, %v549
      %551 = vst [vmem:[#allocation2 + $0x10] sm:$0x4] %v550
      %v552 = vld [vmem:[%s297] sm:$0x7]
      %v554 = vlaneseq
      %v555 = vshrl.u32 %v554, 7
      %v556 = vsub.s32 0, %v555
      %v557 = vrot.slane %v552, %v556
      %v558 = vlaneseq
      %v559 = vshrl.u32 %v558, 7
      %v560 = vsub.s32 1, %v559
      %v561 = vrot.slane %v552, %v560
      %v562 = vlaneseq
      %v563 = vshrl.u32 %v562, 7
      %v564 = vsub.s32 2, %v563
      %v565 = vrot.slane %v552, %v564
      %v569 = vpack.c.bf16 %v557, %v557
      %v570 = vpack.c.bf16 %v561, %v561
      %v571 = vpack.c.bf16 %v565, %v565
      %v573 = vshll.u32 %v569, 16
      %v575 = vrot.slane %v573, 6
      %v577 = vshll.u32 %v570, 16
      %v579 = vrot.slane %v577, 6
      %v581 = vshll.u32 %v571, 16
      %v583 = vrot.slane %v581, 6
      %584 = vrot.lane.b32.xlu0 %v575, 108
      %v585 = vpop.permute.xlu0 %584
      %586 = vrot.lane.b32.xlu0 %v579, 108
      %v587 = vpop.permute.xlu0 %586
      %588 = vrot.lane.b32.xlu0 %v583, 108
      %v589 = vpop.permute.xlu0 %588
      %vm590 = vcmask 883712
      %v591 = vsel %vm590, %v585, %v587
      %v592 = vsel %vm590, %v587, %v589
      %vm596 = vsmask.f32 7946
      %vm597 = vmand %vm538, %vm596
      %v598 = vld [vmem:[#allocation2] sm:$0x4]
      %v599 = vsel %vm597, %v591, %v598
      %600 = vst [vmem:[#allocation2] sm:$0x4] %v599
      %v601 = vld [vmem:[#allocation2 + $0x8] sm:$0x4]
      %v602 = vsel %vm597, %v592, %v601
      %603 = vst [vmem:[#allocation2 + $0x8] sm:$0x4] %v602
      %vm604 = vmand %vm547, %vm596
      %v605 = vld [vmem:[#allocation2 + $0x10] sm:$0x4]
      %v606 = vsel %vm604, %v589, %v605
      %607 = vst [vmem:[#allocation2 + $0x10] sm:$0x4] %v606
      %v608 = vld [vmem:[%s297] sm:$0x7]
      %v610 = vlaneseq
      %v611 = vshrl.u32 %v610, 7
      %v612 = vsub.s32 0, %v611
      %v613 = vrot.slane %v608, %v612
      %v614 = vlaneseq
      %v615 = vshrl.u32 %v614, 7
      %v616 = vsub.s32 1, %v615
      %v617 = vrot.slane %v608, %v616
      %v618 = vlaneseq
      %v619 = vshrl.u32 %v618, 7
      %v620 = vsub.s32 2, %v619
      %v621 = vrot.slane %v608, %v620
      %v625 = vpack.c.bf16 %v613, %v613
      %v626 = vpack.c.bf16 %v617, %v617
      %v627 = vpack.c.bf16 %v621, %v621
      %v631 = vrot.slane %v625, 5
      %v632 = vrot.slane %v626, 5
      %v633 = vrot.slane %v627, 5
      %634 = vrot.lane.b32.xlu0 %v631, 107
      %v635 = vpop.permute.xlu0 %634
      %636 = vrot.lane.b32.xlu0 %v632, 107
      %v637 = vpop.permute.xlu0 %636
      %638 = vrot.lane.b32.xlu0 %v633, 107
      %v639 = vpop.permute.xlu0 %638
      %vm640 = vcmask 875520
      %v641 = vsel %vm640, %v635, %v637
      %v642 = vsel %vm640, %v637, %v639
      %vm646 = vcmask 1043459
      %vm647 = vsmask.f32 3328
      %vm648 = vmand %vm646, %vm647
      %v649 = vld [vmem:[#allocation2] sm:$0x8]
      %v650 = vsel %vm648, %v641, %v649
      %651 = vst [vmem:[#allocation2] sm:$0x8] %v650
      %v652 = vld [vmem:[#allocation2 + $0x8] sm:$0x8]
      %v653 = vsel %vm648, %v642, %v652
      %654 = vst [vmem:[#allocation2 + $0x8] sm:$0x8] %v653
      %vm655 = vcmask 519171
      %vm656 = vmand %vm655, %vm647
      %v657 = vld [vmem:[#allocation2 + $0x10] sm:$0x8]
      %v658 = vsel %vm656, %v639, %v657
      %659 = vst [vmem:[#allocation2 + $0x10] sm:$0x8] %v658
      %v660 = vld [vmem:[%s297] sm:$0x7]
      %v662 = vlaneseq
      %v663 = vshrl.u32 %v662, 7
      %v664 = vsub.s32 0, %v663
      %v665 = vrot.slane %v660, %v664
      %v666 = vlaneseq
      %v667 = vshrl.u32 %v666, 7
      %v668 = vsub.s32 1, %v667
      %v669 = vrot.slane %v660, %v668
      %v670 = vlaneseq
      %v671 = vshrl.u32 %v670, 7
      %v672 = vsub.s32 2, %v671
      %v673 = vrot.slane %v660, %v672
      %v677 = vpack.c.bf16 %v665, %v665
      %v678 = vpack.c.bf16 %v669, %v669
      %v679 = vpack.c.bf16 %v673, %v673
      %v681 = vshll.u32 %v677, 16
      %v683 = vrot.slane %v681, 5
      %v685 = vshll.u32 %v678, 16
      %v687 = vrot.slane %v685, 5
      %v689 = vshll.u32 %v679, 16
      %v691 = vrot.slane %v689, 5
      %692 = vrot.lane.b32.xlu0 %v683, 106
      %v693 = vpop.permute.xlu0 %692
      %694 = vrot.lane.b32.xlu0 %v687, 106
      %v695 = vpop.permute.xlu0 %694
      %696 = vrot.lane.b32.xlu0 %v691, 106
      %v697 = vpop.permute.xlu0 %696
      %vm698 = vcmask 867328
      %v699 = vsel %vm698, %v693, %v695
      %v700 = vsel %vm698, %v695, %v697
      %vm704 = vsmask.f32 7950
      %vm705 = vmand %vm646, %vm704
      %v706 = vld [vmem:[#allocation2] sm:$0x8]
      %v707 = vsel %vm705, %v699, %v706
      %708 = vst [vmem:[#allocation2] sm:$0x8] %v707
      %v709 = vld [vmem:[#allocation2 + $0x8] sm:$0x8]
      %v710 = vsel %vm705, %v700, %v709
      %711 = vst [vmem:[#allocation2 + $0x8] sm:$0x8] %v710
      %vm712 = vmand %vm655, %vm704
      %v713 = vld [vmem:[#allocation2 + $0x10] sm:$0x8]
      %v714 = vsel %vm712, %v697, %v713
      %715 = vst [vmem:[#allocation2 + $0x10] sm:$0x8] %v714
      %v716 = vld [vmem:[%s297] sm:$0x7]
      %v718 = vlaneseq
      %v719 = vshrl.u32 %v718, 7
      %v720 = vsub.s32 0, %v719
      %v721 = vrot.slane %v716, %v720
      %v722 = vlaneseq
      %v723 = vshrl.u32 %v722, 7
      %v724 = vsub.s32 1, %v723
      %v725 = vrot.slane %v716, %v724
      %v726 = vlaneseq
      %v727 = vshrl.u32 %v726, 7
      %v728 = vsub.s32 2, %v727
      %v729 = vrot.slane %v716, %v728
      %v733 = vpack.c.bf16 %v721, %v721
      %v734 = vpack.c.bf16 %v725, %v725
      %v735 = vpack.c.bf16 %v729, %v729
      %v739 = vrot.slane %v733, 4
      %v740 = vrot.slane %v734, 4
      %v741 = vrot.slane %v735, 4
      %742 = vrot.lane.b32.xlu0 %v739, 105
      %v743 = vpop.permute.xlu0 %742
      %744 = vrot.lane.b32.xlu0 %v740, 105
      %v745 = vpop.permute.xlu0 %744
      %746 = vrot.lane.b32.xlu0 %v741, 105
      %v747 = vpop.permute.xlu0 %746
      %vm748 = vcmask 859136
      %v749 = vsel %vm748, %v743, %v745
      %v750 = vsel %vm748, %v745, %v747
      %vm754 = vcmask 1044484
      %vm755 = vsmask.f32 4352
      %vm756 = vmand %vm754, %vm755
      %v757 = vld [vmem:[#allocation2] sm:$0x10]
      %v758 = vsel %vm756, %v749, %v757
      %759 = vst [vmem:[#allocation2] sm:$0x10] %v758
      %v760 = vld [vmem:[#allocation2 + $0x8] sm:$0x10]
      %v761 = vsel %vm756, %v750, %v760
      %762 = vst [vmem:[#allocation2 + $0x8] sm:$0x10] %v761
      %vm763 = vcmask 520196
      %vm764 = vmand %vm763, %vm755
      %v765 = vld [vmem:[#allocation2 + $0x10] sm:$0x10]
      %v766 = vsel %vm764, %v747, %v765
      %767 = vst [vmem:[#allocation2 + $0x10] sm:$0x10] %v766
      %v768 = vld [vmem:[%s297] sm:$0x7]
      %v770 = vlaneseq
      %v771 = vshrl.u32 %v770, 7
      %v772 = vsub.s32 0, %v771
      %v773 = vrot.slane %v768, %v772
      %v774 = vlaneseq
      %v775 = vshrl.u32 %v774, 7
      %v776 = vsub.s32 1, %v775
      %v777 = vrot.slane %v768, %v776
      %v778 = vlaneseq
      %v779 = vshrl.u32 %v778, 7
      %v780 = vsub.s32 2, %v779
      %v781 = vrot.slane %v768, %v780
      %v785 = vpack.c.bf16 %v773, %v773
      %v786 = vpack.c.bf16 %v777, %v777
      %v787 = vpack.c.bf16 %v781, %v781
      %v789 = vshll.u32 %v785, 16
      %v791 = vrot.slane %v789, 4
      %v793 = vshll.u32 %v786, 16
      %v795 = vrot.slane %v793, 4
      %v797 = vshll.u32 %v787, 16
      %v799 = vrot.slane %v797, 4
      %800 = vrot.lane.b32.xlu0 %v791, 104
      %v801 = vpop.permute.xlu0 %800
      %802 = vrot.lane.b32.xlu0 %v795, 104
      %v803 = vpop.permute.xlu0 %802
      %804 = vrot.lane.b32.xlu0 %v799, 104
      %v805 = vpop.permute.xlu0 %804
      %vm806 = vcmask 850944
      %v807 = vsel %vm806, %v801, %v803
      %v808 = vsel %vm806, %v803, %v805
      %vm812 = vsmask.f32 7954
      %vm813 = vmand %vm754, %vm812
      %v814 = vld [vmem:[#allocation2] sm:$0x10]
      %v815 = vsel %vm813, %v807, %v814
      %816 = vst [vmem:[#allocation2] sm:$0x10] %v815
      %v817 = vld [vmem:[#allocation2 + $0x8] sm:$0x10]
      %v818 = vsel %vm813, %v808, %v817
      %819 = vst [vmem:[#allocation2 + $0x8] sm:$0x10] %v818
      %vm820 = vmand %vm763, %vm812
      %v821 = vld [vmem:[#allocation2 + $0x10] sm:$0x10]
      %v822 = vsel %vm820, %v805, %v821
      %823 = vst [vmem:[#allocation2 + $0x10] sm:$0x10] %v822
      %v824 = vld [vmem:[%s297] sm:$0x7]
      %v826 = vlaneseq
      %v827 = vshrl.u32 %v826, 7
      %v828 = vsub.s32 0, %v827
      %v829 = vrot.slane %v824, %v828
      %v830 = vlaneseq
      %v831 = vshrl.u32 %v830, 7
      %v832 = vsub.s32 1, %v831
      %v833 = vrot.slane %v824, %v832
      %v834 = vlaneseq
      %v835 = vshrl.u32 %v834, 7
      %v836 = vsub.s32 2, %v835
      %v837 = vrot.slane %v824, %v836
      %v841 = vpack.c.bf16 %v829, %v829
      %v842 = vpack.c.bf16 %v833, %v833
      %v843 = vpack.c.bf16 %v837, %v837
      %v847 = vrot.slane %v841, 3
      %v848 = vrot.slane %v842, 3
      %v849 = vrot.slane %v843, 3
      %850 = vrot.lane.b32.xlu0 %v847, 88
      %v851 = vpop.permute.xlu0 %850
      %852 = vrot.lane.b32.xlu0 %v848, 88
      %v853 = vpop.permute.xlu0 %852
      %854 = vrot.lane.b32.xlu0 %v849, 88
      %v855 = vpop.permute.xlu0 %854
      %vm856 = vcmask 719872
      %v857 = vsel %vm856, %v851, %v853
      %v858 = vsel %vm856, %v853, %v855
      %vm862 = vcmask 1045509
      %vm863 = vsmask.f32 5376
      %vm864 = vmand %vm862, %vm863
      %v865 = vld [vmem:[#allocation2] sm:$0x20]
      %v866 = vsel %vm864, %v857, %v865
      %867 = vst [vmem:[#allocation2] sm:$0x20] %v866
      %v868 = vld [vmem:[#allocation2 + $0x8] sm:$0x20]
      %v869 = vsel %vm864, %v858, %v868
      %870 = vst [vmem:[#allocation2 + $0x8] sm:$0x20] %v869
      %vm871 = vcmask 521221
      %vm872 = vmand %vm871, %vm863
      %v873 = vld [vmem:[#allocation2 + $0x10] sm:$0x20]
      %v874 = vsel %vm872, %v855, %v873
      %875 = vst [vmem:[#allocation2 + $0x10] sm:$0x20] %v874
      %v876 = vld [vmem:[%s297] sm:$0x7]
      %v878 = vlaneseq
      %v879 = vshrl.u32 %v878, 7
      %v880 = vsub.s32 0, %v879
      %v881 = vrot.slane %v876, %v880
      %v882 = vlaneseq
      %v883 = vshrl.u32 %v882, 7
      %v884 = vsub.s32 1, %v883
      %v885 = vrot.slane %v876, %v884
      %v886 = vlaneseq
      %v887 = vshrl.u32 %v886, 7
      %v888 = vsub.s32 2, %v887
      %v889 = vrot.slane %v876, %v888
      %v893 = vpack.c.bf16 %v881, %v881
      %v894 = vpack.c.bf16 %v885, %v885
      %v895 = vpack.c.bf16 %v889, %v889
      %v897 = vshll.u32 %v893, 16
      %v899 = vrot.slane %v897, 3
      %v901 = vshll.u32 %v894, 16
      %v903 = vrot.slane %v901, 3
      %v905 = vshll.u32 %v895, 16
      %v907 = vrot.slane %v905, 3
      %908 = vrot.lane.b32.xlu0 %v899, 87
      %v909 = vpop.permute.xlu0 %908
      %910 = vrot.lane.b32.xlu0 %v903, 87
      %v911 = vpop.permute.xlu0 %910
      %912 = vrot.lane.b32.xlu0 %v907, 87
      %v913 = vpop.permute.xlu0 %912
      %vm914 = vcmask 711680
      %v915 = vsel %vm914, %v909, %v911
      %v916 = vsel %vm914, %v911, %v913
      %vm920 = vsmask.f32 7958
      %vm921 = vmand %vm862, %vm920
      %v922 = vld [vmem:[#allocation2] sm:$0x20]
      %v923 = vsel %vm921, %v915, %v922
      %924 = vst [vmem:[#allocation2] sm:$0x20] %v923
      %v925 = vld [vmem:[#allocation2 + $0x8] sm:$0x20]
      %v926 = vsel %vm921, %v916, %v925
      %927 = vst [vmem:[#allocation2 + $0x8] sm:$0x20] %v926
      %vm928 = vmand %vm871, %vm920
      %v929 = vld [vmem:[#allocation2 + $0x10] sm:$0x20]
      %v930 = vsel %vm928, %v913, %v929
      %931 = vst [vmem:[#allocation2 + $0x10] sm:$0x20] %v930
      %v932 = vld [vmem:[%s297] sm:$0x7]
      %v934 = vlaneseq
      %v935 = vshrl.u32 %v934, 7
      %v936 = vsub.s32 0, %v935
      %v937 = vrot.slane %v932, %v936
      %v938 = vlaneseq
      %v939 = vshrl.u32 %v938, 7
      %v940 = vsub.s32 1, %v939
      %v941 = vrot.slane %v932, %v940
      %v942 = vlaneseq
      %v943 = vshrl.u32 %v942, 7
      %v944 = vsub.s32 2, %v943
      %v945 = vrot.slane %v932, %v944
      %v949 = vpack.c.bf16 %v937, %v937
      %v950 = vpack.c.bf16 %v941, %v941
      %v951 = vpack.c.bf16 %v945, %v945
      %v955 = vrot.slane %v949, 2
      %v956 = vrot.slane %v950, 2
      %v957 = vrot.slane %v951, 2
      %958 = vrot.lane.b32.xlu0 %v955, 86
      %v959 = vpop.permute.xlu0 %958
      %960 = vrot.lane.b32.xlu0 %v956, 86
      %v961 = vpop.permute.xlu0 %960
      %962 = vrot.lane.b32.xlu0 %v957, 86
      %v963 = vpop.permute.xlu0 %962
      %vm964 = vcmask 703488
      %v965 = vsel %vm964, %v959, %v961
      %v966 = vsel %vm964, %v961, %v963
      %vm970 = vcmask 1046534
      %vm971 = vsmask.f32 6400
      %vm972 = vmand %vm970, %vm971
      %v973 = vld [vmem:[#allocation2] sm:$0x40]
      %v974 = vsel %vm972, %v965, %v973
      %975 = vst [vmem:[#allocation2] sm:$0x40] %v974
      %v976 = vld [vmem:[#allocation2 + $0x8] sm:$0x40]
      %v977 = vsel %vm972, %v966, %v976
      %978 = vst [vmem:[#allocation2 + $0x8] sm:$0x40] %v977
      %vm979 = vcmask 522246
      %vm980 = vmand %vm979, %vm971
      %v981 = vld [vmem:[#allocation2 + $0x10] sm:$0x40]
      %v982 = vsel %vm980, %v963, %v981
      %983 = vst [vmem:[#allocation2 + $0x10] sm:$0x40] %v982
      %v984 = vld [vmem:[%s297] sm:$0x7]
      %v986 = vlaneseq
      %v987 = vshrl.u32 %v986, 7
      %v988 = vsub.s32 0, %v987
      %v989 = vrot.slane %v984, %v988
      %v990 = vlaneseq
      %v991 = vshrl.u32 %v990, 7
      %v992 = vsub.s32 1, %v991
      %v993 = vrot.slane %v984, %v992
      %v994 = vlaneseq
      %v995 = vshrl.u32 %v994, 7
      %v996 = vsub.s32 2, %v995
      %v997 = vrot.slane %v984, %v996
      %v1001 = vpack.c.bf16 %v989, %v989
      %v1002 = vpack.c.bf16 %v993, %v993
      %v1003 = vpack.c.bf16 %v997, %v997
      %v1005 = vshll.u32 %v1001, 16
      %v1007 = vrot.slane %v1005, 2
      %v1009 = vshll.u32 %v1002, 16
      %v1011 = vrot.slane %v1009, 2
      %v1013 = vshll.u32 %v1003, 16
      %v1015 = vrot.slane %v1013, 2
      %1016 = vrot.lane.b32.xlu0 %v1007, 85
      %v1017 = vpop.permute.xlu0 %1016
      %1018 = vrot.lane.b32.xlu0 %v1011, 85
      %v1019 = vpop.permute.xlu0 %1018
      %1020 = vrot.lane.b32.xlu0 %v1015, 85
      %v1021 = vpop.permute.xlu0 %1020
      %vm1022 = vcmask 695296
      %v1023 = vsel %vm1022, %v1017, %v1019
      %v1024 = vsel %vm1022, %v1019, %v1021
      %vm1028 = vsmask.f32 7962
      %vm1029 = vmand %vm970, %vm1028
      %v1030 = vld [vmem:[#allocation2] sm:$0x40]
      %v1031 = vsel %vm1029, %v1023, %v1030
      %1032 = vst [vmem:[#allocation2] sm:$0x40] %v1031
      %v1033 = vld [vmem:[#allocation2 + $0x8] sm:$0x40]
      %v1034 = vsel %vm1029, %v1024, %v1033
      %1035 = vst [vmem:[#allocation2 + $0x8] sm:$0x40] %v1034
      %vm1036 = vmand %vm979, %vm1028
      %v1037 = vld [vmem:[#allocation2 + $0x10] sm:$0x40]
      %v1038 = vsel %vm1036, %v1021, %v1037
      %1039 = vst [vmem:[#allocation2 + $0x10] sm:$0x40] %v1038
      %v1040 = vld [vmem:[%s297] sm:$0x7]
      %v1042 = vlaneseq
      %v1043 = vshrl.u32 %v1042, 7
      %v1044 = vsub.s32 0, %v1043
      %v1045 = vrot.slane %v1040, %v1044
      %v1046 = vlaneseq
      %v1047 = vshrl.u32 %v1046, 7
      %v1048 = vsub.s32 1, %v1047
      %v1049 = vrot.slane %v1040, %v1048
      %v1050 = vlaneseq
      %v1051 = vshrl.u32 %v1050, 7
      %v1052 = vsub.s32 2, %v1051
      %v1053 = vrot.slane %v1040, %v1052
      %v1057 = vpack.c.bf16 %v1045, %v1045
      %v1058 = vpack.c.bf16 %v1049, %v1049
      %v1059 = vpack.c.bf16 %v1053, %v1053
      %v1063 = vrot.slane %v1057, 1
      %v1064 = vrot.slane %v1058, 1
      %v1065 = vrot.slane %v1059, 1
      %1066 = vrot.lane.b32.xlu0 %v1063, 84
      %v1067 = vpop.permute.xlu0 %1066
      %1068 = vrot.lane.b32.xlu0 %v1064, 84
      %v1069 = vpop.permute.xlu0 %1068
      %1070 = vrot.lane.b32.xlu0 %v1065, 84
      %v1071 = vpop.permute.xlu0 %1070
      %vm1072 = vcmask 687104
      %v1073 = vsel %vm1072, %v1067, %v1069
      %v1074 = vsel %vm1072, %v1069, %v1071
      %vm1078 = vcmask 1047559
      %vm1079 = vsmask.f32 7424
      %vm1080 = vmand %vm1078, %vm1079
      %v1081 = vld [vmem:[#allocation2] sm:$0x80]
      %v1082 = vsel %vm1080, %v1073, %v1081
      %1083 = vst [vmem:[#allocation2] sm:$0x80] %v1082
      %v1084 = vld [vmem:[#allocation2 + $0x8] sm:$0x80]
      %v1085 = vsel %vm1080, %v1074, %v1084
      %1086 = vst [vmem:[#allocation2 + $0x8] sm:$0x80] %v1085
      %vm1087 = vcmask 523271
      %vm1088 = vmand %vm1087, %vm1079
      %v1089 = vld [vmem:[#allocation2 + $0x10] sm:$0x80]
      %v1090 = vsel %vm1088, %v1071, %v1089
      %1091 = vst [vmem:[#allocation2 + $0x10] sm:$0x80] %v1090
      %v1092 = vld [vmem:[%s297] sm:$0x7]
      %v1094 = vlaneseq
      %v1095 = vshrl.u32 %v1094, 7
      %v1096 = vsub.s32 0, %v1095
      %v1097 = vrot.slane %v1092, %v1096
      %v1098 = vlaneseq
      %v1099 = vshrl.u32 %v1098, 7
      %v1100 = vsub.s32 1, %v1099
      %v1101 = vrot.slane %v1092, %v1100
      %v1102 = vlaneseq
      %v1103 = vshrl.u32 %v1102, 7
      %v1104 = vsub.s32 2, %v1103
      %v1105 = vrot.slane %v1092, %v1104
      %v1109 = vpack.c.bf16 %v1097, %v1097
      %v1110 = vpack.c.bf16 %v1101, %v1101
      %v1111 = vpack.c.bf16 %v1105, %v1105
      %v1113 = vshll.u32 %v1109, 16
      %v1115 = vrot.slane %v1113, 1
      %v1117 = vshll.u32 %v1110, 16
      %v1119 = vrot.slane %v1117, 1
      %v1121 = vshll.u32 %v1111, 16
      %v1123 = vrot.slane %v1121, 1
      %1124 = vrot.lane.b32.xlu0 %v1115, 68
      %v1125 = vpop.permute.xlu0 %1124
      %1126 = vrot.lane.b32.xlu0 %v1119, 68
      %v1127 = vpop.permute.xlu0 %1126
      %1128 = vrot.lane.b32.xlu0 %v1123, 68
      %v1129 = vpop.permute.xlu0 %1128
      %vm1130 = vcmask 556032
      %v1131 = vsel %vm1130, %v1125, %v1127
      %v1132 = vsel %vm1130, %v1127, %v1129
      %vm1136 = vsmask.f32 7966
      %vm1137 = vmand %vm1078, %vm1136
      %v1138 = vld [vmem:[#allocation2] sm:$0x80]
      %v1139 = vsel %vm1137, %v1131, %v1138
      %1140 = vst [vmem:[#allocation2] sm:$0x80] %v1139
      %v1141 = vld [vmem:[#allocation2 + $0x8] sm:$0x80]
      %v1142 = vsel %vm1137, %v1132, %v1141
      %1143 = vst [vmem:[#allocation2 + $0x8] sm:$0x80] %v1142
      %vm1144 = vmand %vm1087, %vm1136
      %v1145 = vld [vmem:[#allocation2 + $0x10] sm:$0x80]
      %v1146 = vsel %vm1144, %v1129, %v1145
      %1147 = vst [vmem:[#allocation2 + $0x10] sm:$0x80] %v1146
      %v1148 = vld [vmem:[%s297] sm:$0x7]
      %v1150 = vlaneseq
      %v1151 = vshrl.u32 %v1150, 7
      %v1152 = vsub.s32 0, %v1151
      %v1153 = vrot.slane %v1148, %v1152
      %v1154 = vlaneseq
      %v1155 = vshrl.u32 %v1154, 7
      %v1156 = vsub.s32 1, %v1155
      %v1157 = vrot.slane %v1148, %v1156
      %v1158 = vlaneseq
      %v1159 = vshrl.u32 %v1158, 7
      %v1160 = vsub.s32 2, %v1159
      %v1161 = vrot.slane %v1148, %v1160
      %v1165 = vpack.c.bf16 %v1153, %v1153
      %v1166 = vpack.c.bf16 %v1157, %v1157
      %v1167 = vpack.c.bf16 %v1161, %v1161
      %1171 = vrot.lane.b32.xlu0 %v1165, 67
      %v1172 = vpop.permute.xlu0 %1171
      %1173 = vrot.lane.b32.xlu0 %v1166, 67
      %v1174 = vpop.permute.xlu0 %1173
      %1175 = vrot.lane.b32.xlu0 %v1167, 67
      %v1176 = vpop.permute.xlu0 %1175
      %vm1177 = vcmask 547840
      %v1178 = vsel %vm1177, %v1172, %v1174
      %v1179 = vsel %vm1177, %v1174, %v1176
      %v1183 = vld [vmem:[#allocation2 + $0x18] sm:$0x1]
      %v1184 = vsel %vm327, %v1178, %v1183
      %1185 = vst [vmem:[#allocation2 + $0x18] sm:$0x1] %v1184
      %v1186 = vld [vmem:[#allocation2 + $0x20] sm:$0x1]
      %v1187 = vsel %vm327, %v1179, %v1186
      %1188 = vst [vmem:[#allocation2 + $0x20] sm:$0x1] %v1187
      %v1189 = vld [vmem:[#allocation2 + $0x28] sm:$0x1]
      %v1190 = vsel %vm335, %v1176, %v1189
      %1191 = vst [vmem:[#allocation2 + $0x28] sm:$0x1] %v1190
      %v1192 = vld [vmem:[%s297] sm:$0x7]
      %v1194 = vlaneseq
      %v1195 = vshrl.u32 %v1194, 7
      %v1196 = vsub.s32 0, %v1195
      %v1197 = vrot.slane %v1192, %v1196
      %v1198 = vlaneseq
      %v1199 = vshrl.u32 %v1198, 7
      %v1200 = vsub.s32 1, %v1199
      %v1201 = vrot.slane %v1192, %v1200
      %v1202 = vlaneseq
      %v1203 = vshrl.u32 %v1202, 7
      %v1204 = vsub.s32 2, %v1203
      %v1205 = vrot.slane %v1192, %v1204
      %v1209 = vpack.c.bf16 %v1197, %v1197
      %v1210 = vpack.c.bf16 %v1201, %v1201
      %v1211 = vpack.c.bf16 %v1205, %v1205
      %v1213 = vshll.u32 %v1209, 16
      %v1216 = vshll.u32 %v1210, 16
      %v1219 = vshll.u32 %v1211, 16
      %1221 = vrot.lane.b32.xlu0 %v1213, 66
      %v1222 = vpop.permute.xlu0 %1221
      %1223 = vrot.lane.b32.xlu0 %v1216, 66
      %v1224 = vpop.permute.xlu0 %1223
      %1225 = vrot.lane.b32.xlu0 %v1219, 66
      %v1226 = vpop.permute.xlu0 %1225
      %vm1227 = vcmask 539648
      %v1228 = vsel %vm1227, %v1222, %v1224
      %v1229 = vsel %vm1227, %v1224, %v1226
      %v1233 = vld [vmem:[#allocation2 + $0x18] sm:$0x1]
      %v1234 = vsel %vm381, %v1228, %v1233
      %1235 = vst [vmem:[#allocation2 + $0x18] sm:$0x1] %v1234
      %v1236 = vld [vmem:[#allocation2 + $0x20] sm:$0x1]
      %v1237 = vsel %vm381, %v1229, %v1236
      %1238 = vst [vmem:[#allocation2 + $0x20] sm:$0x1] %v1237
      %v1239 = vld [vmem:[#allocation2 + $0x28] sm:$0x1]
      %v1240 = vsel %vm388, %v1226, %v1239
      %1241 = vst [vmem:[#allocation2 + $0x28] sm:$0x1] %v1240
      %v1242 = vld [vmem:[%s297] sm:$0x7]
      %v1244 = vlaneseq
      %v1245 = vshrl.u32 %v1244, 7
      %v1246 = vsub.s32 0, %v1245
      %v1247 = vrot.slane %v1242, %v1246
      %v1248 = vlaneseq
      %v1249 = vshrl.u32 %v1248, 7
      %v1250 = vsub.s32 1, %v1249
      %v1251 = vrot.slane %v1242, %v1250
      %v1252 = vlaneseq
      %v1253 = vshrl.u32 %v1252, 7
      %v1254 = vsub.s32 2, %v1253
      %v1255 = vrot.slane %v1242, %v1254
      %v1259 = vpack.c.bf16 %v1247, %v1247
      %v1260 = vpack.c.bf16 %v1251, %v1251
      %v1261 = vpack.c.bf16 %v1255, %v1255
      %v1265 = vrot.slane %v1259, 7
      %v1266 = vrot.slane %v1260, 7
      %v1267 = vrot.slane %v1261, 7
      %1268 = vrot.lane.b32.xlu0 %v1265, 65
      %v1269 = vpop.permute.xlu0 %1268
      %1270 = vrot.lane.b32.xlu0 %v1266, 65
      %v1271 = vpop.permute.xlu0 %1270
      %1272 = vrot.lane.b32.xlu0 %v1267, 65
      %v1273 = vpop.permute.xlu0 %1272
      %vm1274 = vcmask 531456
      %v1275 = vsel %vm1274, %v1269, %v1271
      %v1276 = vsel %vm1274, %v1271, %v1273
      %v1280 = vld [vmem:[#allocation2 + $0x18] sm:$0x2]
      %v1281 = vsel %vm432, %v1275, %v1280
      %1282 = vst [vmem:[#allocation2 + $0x18] sm:$0x2] %v1281
      %v1283 = vld [vmem:[#allocation2 + $0x20] sm:$0x2]
      %v1284 = vsel %vm432, %v1276, %v1283
      %1285 = vst [vmem:[#allocation2 + $0x20] sm:$0x2] %v1284
      %v1286 = vld [vmem:[#allocation2 + $0x28] sm:$0x2]
      %v1287 = vsel %vm440, %v1273, %v1286
      %1288 = vst [vmem:[#allocation2 + $0x28] sm:$0x2] %v1287
      %v1289 = vld [vmem:[%s297] sm:$0x7]
      %v1291 = vlaneseq
      %v1292 = vshrl.u32 %v1291, 7
      %v1293 = vsub.s32 0, %v1292
      %v1294 = vrot.slane %v1289, %v1293
      %v1295 = vlaneseq
      %v1296 = vshrl.u32 %v1295, 7
      %v1297 = vsub.s32 1, %v1296
      %v1298 = vrot.slane %v1289, %v1297
      %v1299 = vlaneseq
      %v1300 = vshrl.u32 %v1299, 7
      %v1301 = vsub.s32 2, %v1300
      %v1302 = vrot.slane %v1289, %v1301
      %v1306 = vpack.c.bf16 %v1294, %v1294
      %v1307 = vpack.c.bf16 %v1298, %v1298
      %v1308 = vpack.c.bf16 %v1302, %v1302
      %v1310 = vshll.u32 %v1306, 16
      %v1312 = vrot.slane %v1310, 7
      %v1314 = vshll.u32 %v1307, 16
      %v1316 = vrot.slane %v1314, 7
      %v1318 = vshll.u32 %v1308, 16
      %v1320 = vrot.slane %v1318, 7
      %1321 = vrot.lane.b32.xlu0 %v1312, 64
      %v1322 = vpop.permute.xlu0 %1321
      %1323 = vrot.lane.b32.xlu0 %v1316, 64
      %v1324 = vpop.permute.xlu0 %1323
      %1325 = vrot.lane.b32.xlu0 %v1320, 64
      %v1326 = vpop.permute.xlu0 %1325
      %vm1327 = vcmask 523264
      %v1328 = vsel %vm1327, %v1322, %v1324
      %v1329 = vsel %vm1327, %v1324, %v1326
      %v1333 = vld [vmem:[#allocation2 + $0x18] sm:$0x2]
      %v1334 = vsel %vm489, %v1328, %v1333
      %1335 = vst [vmem:[#allocation2 + $0x18] sm:$0x2] %v1334
      %v1336 = vld [vmem:[#allocation2 + $0x20] sm:$0x2]
      %v1337 = vsel %vm489, %v1329, %v1336
      %1338 = vst [vmem:[#allocation2 + $0x20] sm:$0x2] %v1337
      %v1339 = vld [vmem:[#allocation2 + $0x28] sm:$0x2]
      %v1340 = vsel %vm496, %v1326, %v1339
      %1341 = vst [vmem:[#allocation2 + $0x28] sm:$0x2] %v1340
      %v1342 = vld [vmem:[%s297] sm:$0xf]
      %v1344 = vlaneseq
      %v1345 = vshrl.u32 %v1344, 7
      %v1346 = vsub.s32 0, %v1345
      %v1347 = vrot.slane %v1342, %v1346
      %v1348 = vlaneseq
      %v1349 = vshrl.u32 %v1348, 7
      %v1350 = vsub.s32 1, %v1349
      %v1351 = vrot.slane %v1342, %v1350
      %v1352 = vlaneseq
      %v1353 = vshrl.u32 %v1352, 7
      %v1354 = vsub.s32 2, %v1353
      %v1355 = vrot.slane %v1342, %v1354
      %v1356 = vlaneseq
      %v1357 = vshrl.u32 %v1356, 7
      %v1358 = vsub.s32 3, %v1357
      %v1359 = vrot.slane %v1342, %v1358
      %v1364 = vpack.c.bf16 %v1347, %v1347
      %v1365 = vpack.c.bf16 %v1351, %v1351
      %v1366 = vpack.c.bf16 %v1355, %v1355
      %v1367 = vpack.c.bf16 %v1359, %v1359
      %v1372 = vrot.slane %v1364, 6
      %v1373 = vrot.slane %v1365, 6
      %v1374 = vrot.slane %v1366, 6
      %v1375 = vrot.slane %v1367, 6
      %1376 = vrot.lane.b32.xlu0 %v1372, 48
      %v1377 = vpop.permute.xlu0 %1376
      %1378 = vrot.lane.b32.xlu0 %v1373, 48
      %v1379 = vpop.permute.xlu0 %1378
      %1380 = vrot.lane.b32.xlu0 %v1374, 48
      %v1381 = vpop.permute.xlu0 %1380
      %1382 = vrot.lane.b32.xlu0 %v1375, 48
      %v1383 = vpop.permute.xlu0 %1382
      %vm1384 = vcmask 392192
      %v1385 = vsel %vm1384, %v1377, %v1379
      %v1386 = vsel %vm1384, %v1379, %v1381
      %v1387 = vsel %vm1384, %v1381, %v1383
      %v1391 = vld [vmem:[#allocation2 + $0x18] sm:$0x4]
      %v1392 = vsel %vm540, %v1385, %v1391
      %1393 = vst [vmem:[#allocation2 + $0x18] sm:$0x4] %v1392
      %v1394 = vld [vmem:[#allocation2 + $0x20] sm:$0x4]
      %v1395 = vsel %vm540, %v1386, %v1394
      %1396 = vst [vmem:[#allocation2 + $0x20] sm:$0x4] %v1395
      %v1397 = vld [vmem:[#allocation2 + $0x28] sm:$0x4]
      %v1398 = vsel %vm548, %v1387, %v1397
      %1399 = vst [vmem:[#allocation2 + $0x28] sm:$0x4] %v1398
      %v1400 = vld [vmem:[%s297] sm:$0xf]
      %v1402 = vlaneseq
      %v1403 = vshrl.u32 %v1402, 7
      %v1404 = vsub.s32 0, %v1403
      %v1405 = vrot.slane %v1400, %v1404
      %v1406 = vlaneseq
      %v1407 = vshrl.u32 %v1406, 7
      %v1408 = vsub.s32 1, %v1407
      %v1409 = vrot.slane %v1400, %v1408
      %v1410 = vlaneseq
      %v1411 = vshrl.u32 %v1410, 7
      %v1412 = vsub.s32 2, %v1411
      %v1413 = vrot.slane %v1400, %v1412
      %v1414 = vlaneseq
      %v1415 = vshrl.u32 %v1414, 7
      %v1416 = vsub.s32 3, %v1415
      %v1417 = vrot.slane %v1400, %v1416
      %v1422 = vpack.c.bf16 %v1405, %v1405
      %v1423 = vpack.c.bf16 %v1409, %v1409
      %v1424 = vpack.c.bf16 %v1413, %v1413
      %v1425 = vpack.c.bf16 %v1417, %v1417
      %v1427 = vshll.u32 %v1422, 16
      %v1429 = vrot.slane %v1427, 6
      %v1431 = vshll.u32 %v1423, 16
      %v1433 = vrot.slane %v1431, 6
      %v1435 = vshll.u32 %v1424, 16
      %v1437 = vrot.slane %v1435, 6
      %v1439 = vshll.u32 %v1425, 16
      %v1441 = vrot.slane %v1439, 6
      %1442 = vrot.lane.b32.xlu0 %v1429, 47
      %v1443 = vpop.permute.xlu0 %1442
      %1444 = vrot.lane.b32.xlu0 %v1433, 47
      %v1445 = vpop.permute.xlu0 %1444
      %1446 = vrot.lane.b32.xlu0 %v1437, 47
      %v1447 = vpop.permute.xlu0 %1446
      %1448 = vrot.lane.b32.xlu0 %v1441, 47
      %v1449 = vpop.permute.xlu0 %1448
      %vm1450 = vcmask 384000
      %v1451 = vsel %vm1450, %v1443, %v1445
      %v1452 = vsel %vm1450, %v1445, %v1447
      %v1453 = vsel %vm1450, %v1447, %v1449
      %v1457 = vld [vmem:[#allocation2 + $0x18] sm:$0x4]
      %v1458 = vsel %vm597, %v1451, %v1457
      %1459 = vst [vmem:[#allocation2 + $0x18] sm:$0x4] %v1458
      %v1460 = vld [vmem:[#allocation2 + $0x20] sm:$0x4]
      %v1461 = vsel %vm597, %v1452, %v1460
      %1462 = vst [vmem:[#allocation2 + $0x20] sm:$0x4] %v1461
      %v1463 = vld [vmem:[#allocation2 + $0x28] sm:$0x4]
      %v1464 = vsel %vm604, %v1453, %v1463
      %1465 = vst [vmem:[#allocation2 + $0x28] sm:$0x4] %v1464
      %v1466 = vld [vmem:[%s297] sm:$0xf]
      %v1468 = vlaneseq
      %v1469 = vshrl.u32 %v1468, 7
      %v1470 = vsub.s32 0, %v1469
      %v1471 = vrot.slane %v1466, %v1470
      %v1472 = vlaneseq
      %v1473 = vshrl.u32 %v1472, 7
      %v1474 = vsub.s32 1, %v1473
      %v1475 = vrot.slane %v1466, %v1474
      %v1476 = vlaneseq
      %v1477 = vshrl.u32 %v1476, 7
      %v1478 = vsub.s32 2, %v1477
      %v1479 = vrot.slane %v1466, %v1478
      %v1480 = vlaneseq
      %v1481 = vshrl.u32 %v1480, 7
      %v1482 = vsub.s32 3, %v1481
      %v1483 = vrot.slane %v1466, %v1482
      %v1488 = vpack.c.bf16 %v1471, %v1471
      %v1489 = vpack.c.bf16 %v1475, %v1475
      %v1490 = vpack.c.bf16 %v1479, %v1479
      %v1491 = vpack.c.bf16 %v1483, %v1483
      %v1496 = vrot.slane %v1488, 5
      %v1497 = vrot.slane %v1489, 5
      %v1498 = vrot.slane %v1490, 5
      %v1499 = vrot.slane %v1491, 5
      %1500 = vrot.lane.b32.xlu0 %v1496, 46
      %v1501 = vpop.permute.xlu0 %1500
      %1502 = vrot.lane.b32.xlu0 %v1497, 46
      %v1503 = vpop.permute.xlu0 %1502
      %1504 = vrot.lane.b32.xlu0 %v1498, 46
      %v1505 = vpop.permute.xlu0 %1504
      %1506 = vrot.lane.b32.xlu0 %v1499, 46
      %v1507 = vpop.permute.xlu0 %1506
      %vm1508 = vcmask 375808
      %v1509 = vsel %vm1508, %v1501, %v1503
      %v1510 = vsel %vm1508, %v1503, %v1505
      %v1511 = vsel %vm1508, %v1505, %v1507
      %v1515 = vld [vmem:[#allocation2 + $0x18] sm:$0x8]
      %v1516 = vsel %vm648, %v1509, %v1515
      %1517 = vst [vmem:[#allocation2 + $0x18] sm:$0x8] %v1516
      %v1518 = vld [vmem:[#allocation2 + $0x20] sm:$0x8]
      %v1519 = vsel %vm648, %v1510, %v1518
      %1520 = vst [vmem:[#allocation2 + $0x20] sm:$0x8] %v1519
      %v1521 = vld [vmem:[#allocation2 + $0x28] sm:$0x8]
      %v1522 = vsel %vm656, %v1511, %v1521
      %1523 = vst [vmem:[#allocation2 + $0x28] sm:$0x8] %v1522
      %v1524 = vld [vmem:[%s297] sm:$0xf]
      %v1526 = vlaneseq
      %v1527 = vshrl.u32 %v1526, 7
      %v1528 = vsub.s32 0, %v1527
      %v1529 = vrot.slane %v1524, %v1528
      %v1530 = vlaneseq
      %v1531 = vshrl.u32 %v1530, 7
      %v1532 = vsub.s32 1, %v1531
      %v1533 = vrot.slane %v1524, %v1532
      %v1534 = vlaneseq
      %v1535 = vshrl.u32 %v1534, 7
      %v1536 = vsub.s32 2, %v1535
      %v1537 = vrot.slane %v1524, %v1536
      %v1538 = vlaneseq
      %v1539 = vshrl.u32 %v1538, 7
      %v1540 = vsub.s32 3, %v1539
      %v1541 = vrot.slane %v1524, %v1540
      %v1546 = vpack.c.bf16 %v1529, %v1529
      %v1547 = vpack.c.bf16 %v1533, %v1533
      %v1548 = vpack.c.bf16 %v1537, %v1537
      %v1549 = vpack.c.bf16 %v1541, %v1541
      %v1551 = vshll.u32 %v1546, 16
      %v1553 = vrot.slane %v1551, 5
      %v1555 = vshll.u32 %v1547, 16
      %v1557 = vrot.slane %v1555, 5
      %v1559 = vshll.u32 %v1548, 16
      %v1561 = vrot.slane %v1559, 5
      %v1563 = vshll.u32 %v1549, 16
      %v1565 = vrot.slane %v1563, 5
      %1566 = vrot.lane.b32.xlu0 %v1553, 45
      %v1567 = vpop.permute.xlu0 %1566
      %1568 = vrot.lane.b32.xlu0 %v1557, 45
      %v1569 = vpop.permute.xlu0 %1568
      %1570 = vrot.lane.b32.xlu0 %v1561, 45
      %v1571 = vpop.permute.xlu0 %1570
      %1572 = vrot.lane.b32.xlu0 %v1565, 45
      %v1573 = vpop.permute.xlu0 %1572
      %vm1574 = vcmask 367616
      %v1575 = vsel %vm1574, %v1567, %v1569
      %v1576 = vsel %vm1574, %v1569, %v1571
      %v1577 = vsel %vm1574, %v1571, %v1573
      %v1581 = vld [vmem:[#allocation2 + $0x18] sm:$0x8]
      %v1582 = vsel %vm705, %v1575, %v1581
      %1583 = vst [vmem:[#allocation2 + $0x18] sm:$0x8] %v1582
      %v1584 = vld [vmem:[#allocation2 + $0x20] sm:$0x8]
      %v1585 = vsel %vm705, %v1576, %v1584
      %1586 = vst [vmem:[#allocation2 + $0x20] sm:$0x8] %v1585
      %v1587 = vld [vmem:[#allocation2 + $0x28] sm:$0x8]
      %v1588 = vsel %vm712, %v1577, %v1587
      %1589 = vst [vmem:[#allocation2 + $0x28] sm:$0x8] %v1588
      %v1590 = vld [vmem:[%s297] sm:$0xf]
      %v1592 = vlaneseq
      %v1593 = vshrl.u32 %v1592, 7
      %v1594 = vsub.s32 0, %v1593
      %v1595 = vrot.slane %v1590, %v1594
      %v1596 = vlaneseq
      %v1597 = vshrl.u32 %v1596, 7
      %v1598 = vsub.s32 1, %v1597
      %v1599 = vrot.slane %v1590, %v1598
      %v1600 = vlaneseq
      %v1601 = vshrl.u32 %v1600, 7
      %v1602 = vsub.s32 2, %v1601
      %v1603 = vrot.slane %v1590, %v1602
      %v1604 = vlaneseq
      %v1605 = vshrl.u32 %v1604, 7
      %v1606 = vsub.s32 3, %v1605
      %v1607 = vrot.slane %v1590, %v1606
      %v1612 = vpack.c.bf16 %v1595, %v1595
      %v1613 = vpack.c.bf16 %v1599, %v1599
      %v1614 = vpack.c.bf16 %v1603, %v1603
      %v1615 = vpack.c.bf16 %v1607, %v1607
      %v1620 = vrot.slane %v1612, 4
      %v1621 = vrot.slane %v1613, 4
      %v1622 = vrot.slane %v1614, 4
      %v1623 = vrot.slane %v1615, 4
      %1624 = vrot.lane.b32.xlu0 %v1620, 44
      %v1625 = vpop.permute.xlu0 %1624
      %1626 = vrot.lane.b32.xlu0 %v1621, 44
      %v1627 = vpop.permute.xlu0 %1626
      %1628 = vrot.lane.b32.xlu0 %v1622, 44
      %v1629 = vpop.permute.xlu0 %1628
      %1630 = vrot.lane.b32.xlu0 %v1623, 44
      %v1631 = vpop.permute.xlu0 %1630
      %vm1632 = vcmask 359424
      %v1633 = vsel %vm1632, %v1625, %v1627
      %v1634 = vsel %vm1632, %v1627, %v1629
      %v1635 = vsel %vm1632, %v1629, %v1631
      %v1639 = vld [vmem:[#allocation2 + $0x18] sm:$0x10]
      %v1640 = vsel %vm756, %v1633, %v1639
      %1641 = vst [vmem:[#allocation2 + $0x18] sm:$0x10] %v1640
      %v1642 = vld [vmem:[#allocation2 + $0x20] sm:$0x10]
      %v1643 = vsel %vm756, %v1634, %v1642
      %1644 = vst [vmem:[#allocation2 + $0x20] sm:$0x10] %v1643
      %v1645 = vld [vmem:[#allocation2 + $0x28] sm:$0x10]
      %v1646 = vsel %vm764, %v1635, %v1645
      %1647 = vst [vmem:[#allocation2 + $0x28] sm:$0x10] %v1646
      %vm1648 = vcmask 1047556
      %vm1649 = vmand %vm1648, %vm812
      %v1650 = vld [vmem:[#allocation2 + $0x18] sm:$0xf0]
      %v1651 = vsel %vm1649, 0, %v1650
      %1652 = vst [vmem:[#allocation2 + $0x18] sm:$0xf0] %v1651
      %v1653 = vld [vmem:[#allocation2 + $0x20] sm:$0xf0]
      %v1654 = vsel %vm1649, 0, %v1653
      %1655 = vst [vmem:[#allocation2 + $0x20] sm:$0xf0] %v1654
      %vm1656 = vcmask 523268
      %vm1657 = vmand %vm1656, %vm812
      %v1658 = vld [vmem:[#allocation2 + $0x28] sm:$0xf0]
      %v1659 = vsel %vm1657, 0, %v1658
      %1660 = vst [vmem:[#allocation2 + $0x28] sm:$0xf0] %v1659
      %v1661 = vld [vmem:[%s2] sm:$0xf]
      %v1662 = vld [vmem:[%s2 + $0x4] sm:$0xf]
      %v1663 = vld [vmem:[%s2 + $0x8] sm:$0xf]
      %v1664 = vld [vmem:[%s2 + $0xc] sm:$0xf]
      %v1665 = vld [vmem:[%s2 + $0x10] sm:$0xf]
      %v1666 = vld [vmem:[%s2 + $0x14] sm:$0xf]
      %v1667 = vld [vmem:[%s2 + $0x18] sm:$0xf]
      %v1668 = vld [vmem:[%s2 + $0x1c] sm:$0xf]
      %v1669 = vld [vmem:[#allocation2] sm:$0xff]
      %v1670 = vld [vmem:[#allocation2 + $0x8] sm:$0xff]
      %v1671 = vld [vmem:[#allocation2 + $0x10] sm:$0xff]
      %v1672 = vld [vmem:[#allocation2 + $0x18] sm:$0xff]
      %v1673 = vld [vmem:[#allocation2 + $0x20] sm:$0xff]
      %v1674 = vld [vmem:[#allocation2 + $0x28] sm:$0xff]
      %v1675 = vld [vmem:[%s3] sm:$0xff]
      %v1676 = vld [vmem:[%s3 + $0x8] sm:$0xff]
      %v1677 = vld [vmem:[%s3 + $0x10] sm:$0xff]
      %v1678 = vld [vmem:[%s3 + $0x18] sm:$0xff]
      %v1679 = vld [vmem:[%s3 + $0x20] sm:$0xff]
      %v1680 = vld [vmem:[%s3 + $0x28] sm:$0xff]
      %v1681 = vld [vmem:[%s3 + $0x30] sm:$0xff]
      %v1682 = vld [vmem:[%s3 + $0x38] sm:$0xff]
      %1684 = vset.pattern.permute.xlu0 0
      %1685 = vperm.xlu0 %1684, %v1675
      %v1686 = vpop.permute.xlu0 %1685
      %1689 = vset.pattern.permute.xlu0 0
      %1690 = vperm.xlu0 %1689, %v1676
      %v1691 = vpop.permute.xlu0 %1690
      %1694 = vset.pattern.permute.xlu0 0
      %1695 = vperm.xlu0 %1694, %v1677
      %v1696 = vpop.permute.xlu0 %1695
      %1699 = vset.pattern.permute.xlu0 0
      %1700 = vperm.xlu0 %1699, %v1678
      %v1701 = vpop.permute.xlu0 %1700
      %1704 = vset.pattern.permute.xlu0 0
      %1705 = vperm.xlu0 %1704, %v1679
      %v1706 = vpop.permute.xlu0 %1705
      %1709 = vset.pattern.permute.xlu0 0
      %1710 = vperm.xlu0 %1709, %v1680
      %v1711 = vpop.permute.xlu0 %1710
      %1714 = vset.pattern.permute.xlu0 0
      %1715 = vperm.xlu0 %1714, %v1681
      %v1716 = vpop.permute.xlu0 %1715
      %1719 = vset.pattern.permute.xlu0 0
      %1720 = vperm.xlu0 %1719, %v1682
      %v1721 = vpop.permute.xlu0 %1720
      %v1731 = vunpack.c.l.b16 %v1661
      %v1732 = vunpack.c.l.b16 %v1662
      %v1733 = vunpack.c.l.b16 %v1663
      %v1734 = vunpack.c.l.b16 %v1664
      %v1735 = vunpack.c.l.b16 %v1665
      %v1736 = vunpack.c.l.b16 %v1666
      %v1737 = vunpack.c.l.b16 %v1667
      %v1738 = vunpack.c.l.b16 %v1668
      %v1739 = vpack.c.b16 %v1732, %v1731
      %v1740 = vpack.c.b16 %v1734, %v1733
      %v1741 = vpack.c.b16 %v1736, %v1735
      %v1742 = vpack.c.b16 %v1738, %v1737
      %vm1743 = vcmask 261120
      %v1745 = vsel %vm1743, %v1739, 0
      %v1748 = vsel %vm1743, %v1740, 0
      %v1751 = vsel %vm1743, %v1741, 0
      %v1754 = vsel %vm1743, %v1742, 0
      %1756 = vmatprep.subr.bf16.mxu0 %v1670
      %1757 = vmatpush1.bf16.msra.mxu0 %v1669
      %1758 = vmatprep.subr.bf16.mxu0 %v1673
      %1759 = vmatpush1.bf16.msra.mxu0 %v1672
      %1760 = vmatprep.subr.bf16.mxu0 0
      %1761 = vmatpush1.bf16.msra.mxu0 0
      %1762 = vmatprep.subr.bf16.mxu0 0
      %1763 = vmatpush1.bf16.msra.mxu0 0
      %1764 = vmatprep.subr.bf16.mxu0 0
      %1765 = vmatpush1.bf16.msra.mxu0 0
      %1766 = vmatprep.subr.bf16.mxu0 0
      %1767 = vmatpush1.bf16.msra.mxu0 0
      %1768 = vmatprep.subr.bf16.mxu0 0
      %1769 = vmatpush1.bf16.msra.mxu0 0
      %1770 = vmatprep.subr.bf16.mxu0 0
      %1771 = vmatpush1.bf16.msra.mxu0 0
      %1772 = vmatprep.subr.bf16.mxu0 0
      %1773 = vmatpush1.bf16.msra.mxu0 0
      %1774 = vmatprep.subr.bf16.mxu0 0
      %1775 = vmatpush1.bf16.msra.mxu0 0
      %1776 = vmatprep.subr.bf16.mxu0 0
      %1777 = vmatpush1.bf16.msra.mxu0 0
      %1778 = vmatprep.subr.bf16.mxu0 0
      %1779 = vmatpush1.bf16.msra.mxu0 0
      %1780 = vmatprep.subr.bf16.mxu0 0
      %1781 = vmatpush1.bf16.msra.mxu0 0
      %1782 = vmatprep.subr.bf16.mxu0 0
      %1783 = vmatpush1.bf16.msra.mxu0 0
      %1784 = vmatprep.subr.bf16.mxu0 0
      %1785 = vmatpush1.bf16.msra.mxu0 0
      %1786 = vmatprep.subr.bf16.mxu0 0
      %1787 = vmatpush1.bf16.msra.mxu0 0
      %1788 = vmatprep.mubr.bf16.mxu0 0
      %1789 = vmatmul.mubr.bf16.gmra.mrb[0].mxu0 %v1745
      %v1790 = vpop.f32.mrb[0].mxu0
      %v1791 = vadd.f32 %v1686, %v1790
      %v1792 = vpop.f32.mrb[0].mxu0
      %v1793 = vadd.f32 %v1686, %v1792
      %v1794 = vpop.f32.mrb[0].mxu0
      %v1795 = vadd.f32 %v1691, %v1794
      %v1796 = vpop.f32.mrb[0].mxu0
      %v1797 = vadd.f32 %v1691, %v1796
      %1798 = vmatprep.mubr.bf16.mxu0 0
      %1799 = vmatmul.mubr.bf16.gmra.mrb[0].mxu0 %v1748
      %v1800 = vpop.f32.mrb[0].mxu0
      %v1801 = vadd.f32 %v1696, %v1800
      %v1802 = vpop.f32.mrb[0].mxu0
      %v1803 = vadd.f32 %v1696, %v1802
      %v1804 = vpop.f32.mrb[0].mxu0
      %v1805 = vadd.f32 %v1701, %v1804
      %v1806 = vpop.f32.mrb[0].mxu0
      %v1807 = vadd.f32 %v1701, %v1806
      %1808 = vmatprep.mubr.bf16.mxu0 0
      %1809 = vmatmul.mubr.bf16.gmra.mrb[0].mxu0 %v1751
      %v1810 = vpop.f32.mrb[0].mxu0
      %v1811 = vadd.f32 %v1706, %v1810
      %v1812 = vpop.f32.mrb[0].mxu0
      %v1813 = vadd.f32 %v1706, %v1812
      %v1814 = vpop.f32.mrb[0].mxu0
      %v1815 = vadd.f32 %v1711, %v1814
      %v1816 = vpop.f32.mrb[0].mxu0
      %v1817 = vadd.f32 %v1711, %v1816
      %1818 = vmatprep.mubr.bf16.mxu0 0
      %1819 = vmatmul.mubr.bf16.gmra.mrb[0].mxu0 %v1754
      %v1820 = vpop.f32.mrb[0].mxu0
      %v1821 = vadd.f32 %v1716, %v1820
      %v1822 = vpop.f32.mrb[0].mxu0
      %v1823 = vadd.f32 %v1716, %v1822
      %v1824 = vpop.f32.mrb[0].mxu0
      %v1825 = vadd.f32 %v1721, %v1824
      %v1826 = vpop.f32.mrb[0].mxu0
      %v1827 = vadd.f32 %v1721, %v1826
      %1828 = vdwg.mxu0
      %1829 = vmatprep.subr.bf16.mxu0 0
      %1830 = vmatpush1.bf16.msra.mxu0 %v1671
      %1831 = vmatprep.subr.bf16.mxu0 0
      %1832 = vmatpush1.bf16.msra.mxu0 %v1674
      %1833 = vmatprep.subr.bf16.mxu0 0
      %1834 = vmatpush1.bf16.msra.mxu0 0
      %1835 = vmatprep.subr.bf16.mxu0 0
      %1836 = vmatpush1.bf16.msra.mxu0 0
      %1837 = vmatprep.subr.bf16.mxu0 0
      %1838 = vmatpush1.bf16.msra.mxu0 0
      %1839 = vmatprep.subr.bf16.mxu0 0
      %1840 = vmatpush1.bf16.msra.mxu0 0
      %1841 = vmatprep.subr.bf16.mxu0 0
      %1842 = vmatpush1.bf16.msra.mxu0 0
      %1843 = vmatprep.subr.bf16.mxu0 0
      %1844 = vmatpush1.bf16.msra.mxu0 0
      %1845 = vmatprep.subr.bf16.mxu0 0
      %1846 = vmatpush1.bf16.msra.mxu0 0
      %1847 = vmatprep.subr.bf16.mxu0 0
      %1848 = vmatpush1.bf16.msra.mxu0 0
      %1849 = vmatprep.subr.bf16.mxu0 0
      %1850 = vmatpush1.bf16.msra.mxu0 0
      %1851 = vmatprep.subr.bf16.mxu0 0
      %1852 = vmatpush1.bf16.msra.mxu0 0
      %1853 = vmatprep.subr.bf16.mxu0 0
      %1854 = vmatpush1.bf16.msra.mxu0 0
      %1855 = vmatprep.subr.bf16.mxu0 0
      %1856 = vmatpush1.bf16.msra.mxu0 0
      %1857 = vmatprep.subr.bf16.mxu0 0
      %1858 = vmatpush1.bf16.msra.mxu0 0
      %1859 = vmatprep.subr.bf16.mxu0 0
      %1860 = vmatpush1.bf16.msra.mxu0 0
      %1861 = vmatprep.mubr.bf16.mxu0 0
      %1862 = vmatmul.mubr.bf16.gmra.mrb[0].mxu0 %v1745
      %v1863 = vpop.f32.mrb[0].mxu0
      %v1864 = vadd.f32 %v1686, %v1863
      %v1865 = vpop.f32.mrb[0].mxu0
      %v1866 = vpop.f32.mrb[0].mxu0
      %v1867 = vadd.f32 %v1691, %v1866
      %v1868 = vpop.f32.mrb[0].mxu0
      %1869 = vmatprep.mubr.bf16.mxu0 0
      %1870 = vmatmul.mubr.bf16.gmra.mrb[0].mxu0 %v1748
      %v1871 = vpop.f32.mrb[0].mxu0
      %v1872 = vadd.f32 %v1696, %v1871
      %v1873 = vpop.f32.mrb[0].mxu0
      %v1874 = vpop.f32.mrb[0].mxu0
      %v1875 = vadd.f32 %v1701, %v1874
      %v1876 = vpop.f32.mrb[0].mxu0
      %1877 = vmatprep.mubr.bf16.mxu0 0
      %1878 = vmatmul.mubr.bf16.gmra.mrb[0].mxu0 %v1751
      %v1879 = vpop.f32.mrb[0].mxu0
      %v1880 = vadd.f32 %v1706, %v1879
      %v1881 = vpop.f32.mrb[0].mxu0
      %v1882 = vpop.f32.mrb[0].mxu0
      %v1883 = vadd.f32 %v1711, %v1882
      %v1884 = vpop.f32.mrb[0].mxu0
      %1885 = vmatprep.mubr.bf16.mxu0 0
      %1886 = vmatmul.mubr.bf16.gmra.mrb[0].mxu0 %v1754
      %v1887 = vpop.f32.mrb[0].mxu0
      %v1888 = vadd.f32 %v1716, %v1887
      %v1889 = vpop.f32.mrb[0].mxu0
      %v1890 = vpop.f32.mrb[0].mxu0
      %v1891 = vadd.f32 %v1721, %v1890
      %v1892 = vpop.f32.mrb[0].mxu0
      %1893 = vdwg.mxu0
      %v1894 = vtanh.pop %v1791
      %v1895 = vtanh.pop %v1793
      %v1896 = vtanh.pop %v1864
      %v1897 = vtanh.pop %v1795
      %v1898 = vtanh.pop %v1797
      %v1899 = vtanh.pop %v1867
      %v1900 = vtanh.pop %v1801
      %v1901 = vtanh.pop %v1803
      %v1902 = vtanh.pop %v1872
      %v1903 = vtanh.pop %v1805
      %v1904 = vtanh.pop %v1807
      %v1905 = vtanh.pop %v1875
      %v1906 = vtanh.pop %v1811
      %v1907 = vtanh.pop %v1813
      %v1908 = vtanh.pop %v1880
      %v1909 = vtanh.pop %v1815
      %v1910 = vtanh.pop %v1817
      %v1911 = vtanh.pop %v1883
      %v1912 = vtanh.pop %v1821
      %v1913 = vtanh.pop %v1823
      %v1914 = vtanh.pop %v1888
      %v1915 = vtanh.pop %v1825
      %v1916 = vtanh.pop %v1827
      %v1917 = vtanh.pop %v1891
      %v1919 = vlaneseq
      %v1920 = vshrl.u32 %v1919, 7
      %v1921 = vsub.s32 0, %v1920
      %v1922 = vrot.slane %v304, %v1921
      %v1923 = vlaneseq
      %v1924 = vshrl.u32 %v1923, 7
      %v1925 = vsub.s32 1, %v1924
      %v1926 = vrot.slane %v304, %v1925
      %v1927 = vlaneseq
      %v1928 = vshrl.u32 %v1927, 7
      %v1929 = vsub.s32 2, %v1928
      %v1930 = vrot.slane %v304, %v1929
      %v1934 = vmul.f32 %v1894, %v1922
      %v1935 = vmul.f32 %v1895, %v1926
      %v1936 = vmul.f32 %v1896, %v1930
      %v1937 = vmul.f32 %v1897, %v1922
      %v1938 = vmul.f32 %v1898, %v1926
      %v1939 = vmul.f32 %v1899, %v1930
      %v1940 = vmul.f32 %v1900, %v1922
      %v1941 = vmul.f32 %v1901, %v1926
      %v1942 = vmul.f32 %v1902, %v1930
      %v1943 = vmul.f32 %v1903, %v1922
      %v1944 = vmul.f32 %v1904, %v1926
      %v1945 = vmul.f32 %v1905, %v1930
      %v1946 = vmul.f32 %v1906, %v1922
      %v1947 = vmul.f32 %v1907, %v1926
      %v1948 = vmul.f32 %v1908, %v1930
      %v1949 = vmul.f32 %v1909, %v1922
      %v1950 = vmul.f32 %v1910, %v1926
      %v1951 = vmul.f32 %v1911, %v1930
      %v1952 = vmul.f32 %v1912, %v1922
      %v1953 = vmul.f32 %v1913, %v1926
      %v1954 = vmul.f32 %v1914, %v1930
      %v1955 = vmul.f32 %v1915, %v1922
      %v1956 = vmul.f32 %v1916, %v1926
      %v1957 = vmul.f32 %v1917, %v1930
      %v1958 = vpack.c.bf16 %v1937, %v1934
      %v1959 = vpack.c.bf16 %v1938, %v1935
      %v1960 = vpack.c.bf16 %v1939, %v1936
      %v1961 = vpack.c.bf16 %v1943, %v1940
      %v1962 = vpack.c.bf16 %v1944, %v1941
      %v1963 = vpack.c.bf16 %v1945, %v1942
      %v1964 = vpack.c.bf16 %v1949, %v1946
      %v1965 = vpack.c.bf16 %v1950, %v1947
      %v1966 = vpack.c.bf16 %v1951, %v1948
      %v1967 = vpack.c.bf16 %v1955, %v1952
      %v1968 = vpack.c.bf16 %v1956, %v1953
      %v1969 = vpack.c.bf16 %v1957, %v1954
      %vm1970 = vcmask 171008
      %1971 = vst.msk [vmem:[#allocation3] sm:$0xff] %vm1970, 0
      %1972 = vst.msk [vmem:[#allocation3 + $0x18] sm:$0xff] %vm1970, 0
      %1973 = vst.msk [vmem:[#allocation3 + $0x30] sm:$0xff] %vm1970, 0
      %1974 = vst.msk [vmem:[#allocation3 + $0x48] sm:$0xff] %vm1970, 0
      %1987 = vrot.lane.b32.xlu0 %v1958, 21
      %v1988 = vpop.permute.xlu0 %1987
      %1989 = vrot.lane.b32.xlu0 %v1959, 21
      %v1990 = vpop.permute.xlu0 %1989
      %1991 = vrot.lane.b32.xlu0 %v1960, 21
      %v1992 = vpop.permute.xlu0 %1991
      %1993 = vrot.lane.b32.xlu0 %v1961, 21
      %v1994 = vpop.permute.xlu0 %1993
      %1995 = vrot.lane.b32.xlu0 %v1962, 21
      %v1996 = vpop.permute.xlu0 %1995
      %1997 = vrot.lane.b32.xlu0 %v1963, 21
      %v1998 = vpop.permute.xlu0 %1997
      %1999 = vrot.lane.b32.xlu0 %v1964, 21
      %v2000 = vpop.permute.xlu0 %1999
      %2001 = vrot.lane.b32.xlu0 %v1965, 21
      %v2002 = vpop.permute.xlu0 %2001
      %2003 = vrot.lane.b32.xlu0 %v1966, 21
      %v2004 = vpop.permute.xlu0 %2003
      %2005 = vrot.lane.b32.xlu0 %v1967, 21
      %v2006 = vpop.permute.xlu0 %2005
      %2007 = vrot.lane.b32.xlu0 %v1968, 21
      %v2008 = vpop.permute.xlu0 %2007
      %2009 = vrot.lane.b32.xlu0 %v1969, 21
      %v2010 = vpop.permute.xlu0 %2009
      %vm2011 = vcmask 171008
      %v2012 = vsel %vm2011, %v1988, %v1990
      %v2013 = vsel %vm2011, %v1990, %v1992
      %v2014 = vsel %vm2011, %v1994, %v1996
      %v2015 = vsel %vm2011, %v1996, %v1998
      %v2016 = vsel %vm2011, %v2000, %v2002
      %v2017 = vsel %vm2011, %v2002, %v2004
      %v2018 = vsel %vm2011, %v2006, %v2008
      %v2019 = vsel %vm2011, %v2008, %v2010
      %vm2032 = vcmask 1047720
      %2033 = vst.msk [vmem:[#allocation3] sm:$0xff] %vm2032, %v1988
      %2034 = vst [vmem:[#allocation3 + $0x8] sm:$0xff] %v2012
      %vm2035 = vcmask 695296
      %2036 = vst.msk [vmem:[#allocation3 + $0x10] sm:$0xff] %vm2035, %v2013
      %2037 = vst.msk [vmem:[#allocation3 + $0x18] sm:$0xff] %vm2032, %v1994
      %2038 = vst [vmem:[#allocation3 + $0x20] sm:$0xff] %v2014
      %2039 = vst.msk [vmem:[#allocation3 + $0x28] sm:$0xff] %vm2035, %v2015
      %2040 = vst.msk [vmem:[#allocation3 + $0x30] sm:$0xff] %vm2032, %v2000
      %2041 = vst [vmem:[#allocation3 + $0x38] sm:$0xff] %v2016
      %2042 = vst.msk [vmem:[#allocation3 + $0x40] sm:$0xff] %vm2035, %v2017
      %2043 = vst.msk [vmem:[#allocation3 + $0x48] sm:$0xff] %vm2032, %v2006
      %2044 = vst [vmem:[#allocation3 + $0x50] sm:$0xff] %v2018
      %2045 = vst.msk [vmem:[#allocation3 + $0x58] sm:$0xff] %vm2035, %v2019
      %vm2046 = vcmask 1015464
      %2047 = vst.msk [vmem:[#allocation3 + $0x10] sm:$0xff] %vm2046, 0
      %2048 = vst.msk [vmem:[#allocation3 + $0x28] sm:$0xff] %vm2046, 0
      %2049 = vst.msk [vmem:[#allocation3 + $0x40] sm:$0xff] %vm2046, 0
      %2050 = vst.msk [vmem:[#allocation3 + $0x58] sm:$0xff] %vm2046, 0
      %v2051 = vld [vmem:[%s4] sm:$0xf]
      %v2052 = vld [vmem:[%s4 + $0x14] sm:$0xf]
      %v2053 = vld [vmem:[%s4 + $0x28] sm:$0xf]
      %v2054 = vld [vmem:[%s4 + $0x3c] sm:$0xf]
      %v2055 = vld [vmem:[#allocation3] sm:$0xff]
      %v2056 = vld [vmem:[#allocation3 + $0x8] sm:$0xff]
      %v2057 = vld [vmem:[#allocation3 + $0x10] sm:$0xff]
      %v2058 = vld [vmem:[#allocation3 + $0x18] sm:$0xff]
      %v2059 = vld [vmem:[#allocation3 + $0x20] sm:$0xff]
      %v2060 = vld [vmem:[#allocation3 + $0x28] sm:$0xff]
      %v2061 = vld [vmem:[#allocation3 + $0x30] sm:$0xff]
      %v2062 = vld [vmem:[#allocation3 + $0x38] sm:$0xff]
      %v2063 = vld [vmem:[#allocation3 + $0x40] sm:$0xff]
      %v2064 = vld [vmem:[#allocation3 + $0x48] sm:$0xff]
      %v2065 = vld [vmem:[#allocation3 + $0x50] sm:$0xff]
      %v2066 = vld [vmem:[#allocation3 + $0x58] sm:$0xff]
      %v2071 = vunpack.c.l.b16 %v2051
      %v2072 = vunpack.c.l.b16 %v2052
      %v2073 = vunpack.c.l.b16 %v2053
      %v2074 = vunpack.c.l.b16 %v2054
      %v2075 = vpack.c.b16 %v2072, %v2071
      %v2076 = vpack.c.b16 %v2074, %v2073
      %2077 = vrot.lane.b32.xlu0 %v2075, 64
      %v2078 = vpop.permute.xlu0 %2077
      %2079 = vrot.lane.b32.xlu0 %v2076, 64
      %v2080 = vpop.permute.xlu0 %2079
      %2093 = vrot.lane.b32.xlu0 %v2055, 127
      %v2094 = vpop.permute.xlu0 %2093
      %2095 = vrot.lane.b32.xlu0 %v2056, 127
      %v2096 = vpop.permute.xlu0 %2095
      %2097 = vrot.lane.b32.xlu0 %v2057, 127
      %v2098 = vpop.permute.xlu0 %2097
      %2099 = vrot.lane.b32.xlu0 %v2058, 127
      %v2100 = vpop.permute.xlu0 %2099
      %2101 = vrot.lane.b32.xlu0 %v2059, 127
      %v2102 = vpop.permute.xlu0 %2101
      %2103 = vrot.lane.b32.xlu0 %v2060, 127
      %v2104 = vpop.permute.xlu0 %2103
      %2105 = vrot.lane.b32.xlu0 %v2061, 127
      %v2106 = vpop.permute.xlu0 %2105
      %2107 = vrot.lane.b32.xlu0 %v2062, 127
      %v2108 = vpop.permute.xlu0 %2107
      %2109 = vrot.lane.b32.xlu0 %v2063, 127
      %v2110 = vpop.permute.xlu0 %2109
      %2111 = vrot.lane.b32.xlu0 %v2064, 127
      %v2112 = vpop.permute.xlu0 %2111
      %2113 = vrot.lane.b32.xlu0 %v2065, 127
      %v2114 = vpop.permute.xlu0 %2113
      %2115 = vrot.lane.b32.xlu0 %v2066, 127
      %v2116 = vpop.permute.xlu0 %2115
      %v2117 = vsel %vm374, %v2094, %v2096
      %v2118 = vsel %vm374, %v2096, %v2098
      %v2119 = vsel %vm374, %v2100, %v2102
      %v2120 = vsel %vm374, %v2102, %v2104
      %v2121 = vsel %vm374, %v2106, %v2108
      %v2122 = vsel %vm374, %v2108, %v2110
      %v2123 = vsel %vm374, %v2112, %v2114
      %v2124 = vsel %vm374, %v2114, %v2116
      %vm2137 = vcmask 523264
      %v2139 = vsel %vm2137, %v2078, 0
      %v2142 = vsel %vm2137, %v2080, 0
      %2144 = vmatprep.subr.bf16.mxu0 %v2118
      %2145 = vmatpush1.bf16.msra.mxu0 %v2117
      %2146 = vmatprep.subr.bf16.mxu0 %v2120
      %2147 = vmatpush1.bf16.msra.mxu0 %v2119
      %2148 = vmatprep.subr.bf16.mxu0 %v2122
      %2149 = vmatpush1.bf16.msra.mxu0 %v2121
      %2150 = vmatprep.subr.bf16.mxu0 %v2124
      %2151 = vmatpush1.bf16.msra.mxu0 %v2123
      %2152 = vmatprep.subr.bf16.mxu0 0
      %2153 = vmatpush1.bf16.msra.mxu0 0
      %2154 = vmatprep.subr.bf16.mxu0 0
      %2155 = vmatpush1.bf16.msra.mxu0 0
      %2156 = vmatprep.subr.bf16.mxu0 0
      %2157 = vmatpush1.bf16.msra.mxu0 0
      %2158 = vmatprep.subr.bf16.mxu0 0
      %2159 = vmatpush1.bf16.msra.mxu0 0
      %2160 = vmatprep.subr.bf16.mxu0 0
      %2161 = vmatpush1.bf16.msra.mxu0 0
      %2162 = vmatprep.subr.bf16.mxu0 0
      %2163 = vmatpush1.bf16.msra.mxu0 0
      %2164 = vmatprep.subr.bf16.mxu0 0
      %2165 = vmatpush1.bf16.msra.mxu0 0
      %2166 = vmatprep.subr.bf16.mxu0 0
      %2167 = vmatpush1.bf16.msra.mxu0 0
      %2168 = vmatprep.subr.bf16.mxu0 0
      %2169 = vmatpush1.bf16.msra.mxu0 0
      %2170 = vmatprep.subr.bf16.mxu0 0
      %2171 = vmatpush1.bf16.msra.mxu0 0
      %2172 = vmatprep.subr.bf16.mxu0 0
      %2173 = vmatpush1.bf16.msra.mxu0 0
      %2174 = vmatprep.subr.bf16.mxu0 0
      %2175 = vmatpush1.bf16.msra.mxu0 0
      %2176 = vmatprep.mubr.bf16.mxu0 0
      %2177 = vmatmul.mubr.bf16.gmra.mrb[0].mxu0 %v2139
      %v2178 = vpop.f32.mrb[0].mxu0
      %v2179 = vadd.f32 0.0, %v2178
      %v2180 = vpop.f32.mrb[0].mxu0
      %v2181 = vadd.f32 0.0, %v2180
      %v2182 = vpop.f32.mrb[0].mxu0
      %v2183 = vadd.f32 0.0, %v2182
      %v2184 = vpop.f32.mrb[0].mxu0
      %v2185 = vadd.f32 0.0, %v2184
      %2186 = vmatprep.mubr.bf16.mxu0 0
      %2187 = vmatmul.mubr.bf16.gmra.mrb[0].mxu0 %v2142
      %v2188 = vpop.f32.mrb[0].mxu0
      %v2189 = vadd.f32 0.0, %v2188
      %v2190 = vpop.f32.mrb[0].mxu0
      %v2191 = vadd.f32 0.0, %v2190
      %v2192 = vpop.f32.mrb[0].mxu0
      %v2193 = vadd.f32 0.0, %v2192
      %v2194 = vpop.f32.mrb[0].mxu0
      %v2195 = vadd.f32 0.0, %v2194
      %2196 = vdwg.mxu0
      %2197 = vmatprep.subr.bf16.mxu0 0
      %2198 = vmatpush1.bf16.msra.mxu0 %v2098
      %2199 = vmatprep.subr.bf16.mxu0 0
      %2200 = vmatpush1.bf16.msra.mxu0 %v2104
      %2201 = vmatprep.subr.bf16.mxu0 0
      %2202 = vmatpush1.bf16.msra.mxu0 %v2110
      %2203 = vmatprep.subr.bf16.mxu0 0
      %2204 = vmatpush1.bf16.msra.mxu0 %v2116
      %2205 = vmatprep.subr.bf16.mxu0 0
      %2206 = vmatpush1.bf16.msra.mxu0 0
      %2207 = vmatprep.subr.bf16.mxu0 0
      %2208 = vmatpush1.bf16.msra.mxu0 0
      %2209 = vmatprep.subr.bf16.mxu0 0
      %2210 = vmatpush1.bf16.msra.mxu0 0
      %2211 = vmatprep.subr.bf16.mxu0 0
      %2212 = vmatpush1.bf16.msra.mxu0 0
      %2213 = vmatprep.subr.bf16.mxu0 0
      %2214 = vmatpush1.bf16.msra.mxu0 0
      %2215 = vmatprep.subr.bf16.mxu0 0
      %2216 = vmatpush1.bf16.msra.mxu0 0
      %2217 = vmatprep.subr.bf16.mxu0 0
      %2218 = vmatpush1.bf16.msra.mxu0 0
      %2219 = vmatprep.subr.bf16.mxu0 0
      %2220 = vmatpush1.bf16.msra.mxu0 0
      %2221 = vmatprep.subr.bf16.mxu0 0
      %2222 = vmatpush1.bf16.msra.mxu0 0
      %2223 = vmatprep.subr.bf16.mxu0 0
      %2224 = vmatpush1.bf16.msra.mxu0 0
      %2225 = vmatprep.subr.bf16.mxu0 0
      %2226 = vmatpush1.bf16.msra.mxu0 0
      %2227 = vmatprep.subr.bf16.mxu0 0
      %2228 = vmatpush1.bf16.msra.mxu0 0
      %2229 = vmatprep.mubr.bf16.mxu0 0
      %2230 = vmatmul.mubr.bf16.gmra.mrb[0].mxu0 %v2139
      %v2231 = vpop.f32.mrb[0].mxu0
      %v2232 = vadd.f32 0.0, %v2231
      %v2233 = vpop.f32.mrb[0].mxu0
      %v2234 = vpop.f32.mrb[0].mxu0
      %v2235 = vadd.f32 0.0, %v2234
      %v2236 = vpop.f32.mrb[0].mxu0
      %2237 = vmatprep.mubr.bf16.mxu0 0
      %2238 = vmatmul.mubr.bf16.gmra.mrb[0].mxu0 %v2142
      %v2239 = vpop.f32.mrb[0].mxu0
      %v2240 = vadd.f32 0.0, %v2239
      %v2241 = vpop.f32.mrb[0].mxu0
      %v2242 = vpop.f32.mrb[0].mxu0
      %v2243 = vadd.f32 0.0, %v2242
      %v2244 = vpop.f32.mrb[0].mxu0
      %2245 = vdwg.mxu0
      %v2247 = vsel %vm2137, %v2075, 0
      %v2250 = vsel %vm2137, %v2076, 0
      %2252 = vmatprep.subr.bf16.mxu0 %v2056
      %2253 = vmatpush1.bf16.msra.mxu0 %v2055
      %2254 = vmatprep.subr.bf16.mxu0 %v2059
      %2255 = vmatpush1.bf16.msra.mxu0 %v2058
      %2256 = vmatprep.subr.bf16.mxu0 %v2062
      %2257 = vmatpush1.bf16.msra.mxu0 %v2061
      %2258 = vmatprep.subr.bf16.mxu0 %v2065
      %2259 = vmatpush1.bf16.msra.mxu0 %v2064
      %2260 = vmatprep.subr.bf16.mxu0 0
      %2261 = vmatpush1.bf16.msra.mxu0 0
      %2262 = vmatprep.subr.bf16.mxu0 0
      %2263 = vmatpush1.bf16.msra.mxu0 0
      %2264 = vmatprep.subr.bf16.mxu0 0
      %2265 = vmatpush1.bf16.msra.mxu0 0
      %2266 = vmatprep.subr.bf16.mxu0 0
      %2267 = vmatpush1.bf16.msra.mxu0 0
      %2268 = vmatprep.subr.bf16.mxu0 0
      %2269 = vmatpush1.bf16.msra.mxu0 0
      %2270 = vmatprep.subr.bf16.mxu0 0
      %2271 = vmatpush1.bf16.msra.mxu0 0
      %2272 = vmatprep.subr.bf16.mxu0 0
      %2273 = vmatpush1.bf16.msra.mxu0 0
      %2274 = vmatprep.subr.bf16.mxu0 0
      %2275 = vmatpush1.bf16.msra.mxu0 0
      %2276 = vmatprep.subr.bf16.mxu0 0
      %2277 = vmatpush1.bf16.msra.mxu0 0
      %2278 = vmatprep.subr.bf16.mxu0 0
      %2279 = vmatpush1.bf16.msra.mxu0 0
      %2280 = vmatprep.subr.bf16.mxu0 0
      %2281 = vmatpush1.bf16.msra.mxu0 0
      %2282 = vmatprep.subr.bf16.mxu0 0
      %2283 = vmatpush1.bf16.msra.mxu0 0
      %2284 = vmatprep.mubr.bf16.mxu0 0
      %2285 = vmatmul.mubr.bf16.gmra.mrb[0].mxu0 %v2247
      %v2286 = vpop.f32.mrb[0].mxu0
      %v2287 = vadd.f32 %v2179, %v2286
      %v2288 = vpop.f32.mrb[0].mxu0
      %v2289 = vadd.f32 %v2181, %v2288
      %v2290 = vpop.f32.mrb[0].mxu0
      %v2291 = vadd.f32 %v2183, %v2290
      %v2292 = vpop.f32.mrb[0].mxu0
      %v2293 = vadd.f32 %v2185, %v2292
      %2294 = vmatprep.mubr.bf16.mxu0 0
      %2295 = vmatmul.mubr.bf16.gmra.mrb[0].mxu0 %v2250
      %v2296 = vpop.f32.mrb[0].mxu0
      %v2297 = vadd.f32 %v2189, %v2296
      %v2298 = vpop.f32.mrb[0].mxu0
      %v2299 = vadd.f32 %v2191, %v2298
      %v2300 = vpop.f32.mrb[0].mxu0
      %v2301 = vadd.f32 %v2193, %v2300
      %v2302 = vpop.f32.mrb[0].mxu0
      %v2303 = vadd.f32 %v2195, %v2302
      %2304 = vdwg.mxu0
      %2305 = vmatprep.subr.bf16.mxu0 0
      %2306 = vmatpush1.bf16.msra.mxu0 %v2057
      %2307 = vmatprep.subr.bf16.mxu0 0
      %2308 = vmatpush1.bf16.msra.mxu0 %v2060
      %2309 = vmatprep.subr.bf16.mxu0 0
      %2310 = vmatpush1.bf16.msra.mxu0 %v2063
      %2311 = vmatprep.subr.bf16.mxu0 0
      %2312 = vmatpush1.bf16.msra.mxu0 %v2066
      %2313 = vmatprep.subr.bf16.mxu0 0
      %2314 = vmatpush1.bf16.msra.mxu0 0
      %2315 = vmatprep.subr.bf16.mxu0 0
      %2316 = vmatpush1.bf16.msra.mxu0 0
      %2317 = vmatprep.subr.bf16.mxu0 0
      %2318 = vmatpush1.bf16.msra.mxu0 0
      %2319 = vmatprep.subr.bf16.mxu0 0
      %2320 = vmatpush1.bf16.msra.mxu0 0
      %2321 = vmatprep.subr.bf16.mxu0 0
      %2322 = vmatpush1.bf16.msra.mxu0 0
      %2323 = vmatprep.subr.bf16.mxu0 0
      %2324 = vmatpush1.bf16.msra.mxu0 0
      %2325 = vmatprep.subr.bf16.mxu0 0
      %2326 = vmatpush1.bf16.msra.mxu0 0
      %2327 = vmatprep.subr.bf16.mxu0 0
      %2328 = vmatpush1.bf16.msra.mxu0 0
      %2329 = vmatprep.subr.bf16.mxu0 0
      %2330 = vmatpush1.bf16.msra.mxu0 0
      %2331 = vmatprep.subr.bf16.mxu0 0
      %2332 = vmatpush1.bf16.msra.mxu0 0
      %2333 = vmatprep.subr.bf16.mxu0 0
      %2334 = vmatpush1.bf16.msra.mxu0 0
      %2335 = vmatprep.subr.bf16.mxu0 0
      %2336 = vmatpush1.bf16.msra.mxu0 0
      %2337 = vmatprep.mubr.bf16.mxu0 0
      %2338 = vmatmul.mubr.bf16.gmra.mrb[0].mxu0 %v2247
      %v2339 = vpop.f32.mrb[0].mxu0
      %v2340 = vadd.f32 %v2232, %v2339
      %v2341 = vpop.f32.mrb[0].mxu0
      %v2342 = vpop.f32.mrb[0].mxu0
      %v2343 = vadd.f32 %v2235, %v2342
      %v2344 = vpop.f32.mrb[0].mxu0
      %2345 = vmatprep.mubr.bf16.mxu0 0
      %2346 = vmatmul.mubr.bf16.gmra.mrb[0].mxu0 %v2250
      %v2347 = vpop.f32.mrb[0].mxu0
      %v2348 = vadd.f32 %v2240, %v2347
      %v2349 = vpop.f32.mrb[0].mxu0
      %v2350 = vpop.f32.mrb[0].mxu0
      %v2351 = vadd.f32 %v2243, %v2350
      %v2352 = vpop.f32.mrb[0].mxu0
      %2353 = vdwg.mxu0
      %v2354 = vld [vmem:[%s4 + $0x4] sm:$0xf]
      %v2355 = vld [vmem:[%s4 + $0x18] sm:$0xf]
      %v2356 = vld [vmem:[%s4 + $0x2c] sm:$0xf]
      %v2357 = vld [vmem:[%s4 + $0x40] sm:$0xf]
      %v2362 = vunpack.c.l.b16 %v2354
      %v2363 = vunpack.c.l.b16 %v2355
      %v2364 = vunpack.c.l.b16 %v2356
      %v2365 = vunpack.c.l.b16 %v2357
      %v2366 = vpack.c.b16 %v2363, %v2362
      %v2367 = vpack.c.b16 %v2365, %v2364
      %2368 = vrot.lane.b32.xlu0 %v2055, 126
      %v2369 = vpop.permute.xlu0 %2368
      %2370 = vrot.lane.b32.xlu0 %v2056, 126
      %v2371 = vpop.permute.xlu0 %2370
      %2372 = vrot.lane.b32.xlu0 %v2057, 126
      %v2373 = vpop.permute.xlu0 %2372
      %2374 = vrot.lane.b32.xlu0 %v2058, 126
      %v2375 = vpop.permute.xlu0 %2374
      %2376 = vrot.lane.b32.xlu0 %v2059, 126
      %v2377 = vpop.permute.xlu0 %2376
      %2378 = vrot.lane.b32.xlu0 %v2060, 126
      %v2379 = vpop.permute.xlu0 %2378
      %2380 = vrot.lane.b32.xlu0 %v2061, 126
      %v2381 = vpop.permute.xlu0 %2380
      %2382 = vrot.lane.b32.xlu0 %v2062, 126
      %v2383 = vpop.permute.xlu0 %2382
      %2384 = vrot.lane.b32.xlu0 %v2063, 126
      %v2385 = vpop.permute.xlu0 %2384
      %2386 = vrot.lane.b32.xlu0 %v2064, 126
      %v2387 = vpop.permute.xlu0 %2386
      %2388 = vrot.lane.b32.xlu0 %v2065, 126
      %v2389 = vpop.permute.xlu0 %2388
      %2390 = vrot.lane.b32.xlu0 %v2066, 126
      %v2391 = vpop.permute.xlu0 %2390
      %v2392 = vsel %vm424, %v2369, %v2371
      %v2393 = vsel %vm424, %v2371, %v2373
      %v2394 = vsel %vm424, %v2375, %v2377
      %v2395 = vsel %vm424, %v2377, %v2379
      %v2396 = vsel %vm424, %v2381, %v2383
      %v2397 = vsel %vm424, %v2383, %v2385
      %v2398 = vsel %vm424, %v2387, %v2389
      %v2399 = vsel %vm424, %v2389, %v2391
      %v2413 = vsel %vm2137, %v2366, 0
      %v2416 = vsel %vm2137, %v2367, 0
      %2418 = vmatprep.subr.bf16.mxu0 %v2393
      %2419 = vmatpush1.bf16.msra.mxu0 %v2392
      %2420 = vmatprep.subr.bf16.mxu0 %v2395
      %2421 = vmatpush1.bf16.msra.mxu0 %v2394
      %2422 = vmatprep.subr.bf16.mxu0 %v2397
      %2423 = vmatpush1.bf16.msra.mxu0 %v2396
      %2424 = vmatprep.subr.bf16.mxu0 %v2399
      %2425 = vmatpush1.bf16.msra.mxu0 %v2398
      %2426 = vmatprep.subr.bf16.mxu0 0
      %2427 = vmatpush1.bf16.msra.mxu0 0
      %2428 = vmatprep.subr.bf16.mxu0 0
      %2429 = vmatpush1.bf16.msra.mxu0 0
      %2430 = vmatprep.subr.bf16.mxu0 0
      %2431 = vmatpush1.bf16.msra.mxu0 0
      %2432 = vmatprep.subr.bf16.mxu0 0
      %2433 = vmatpush1.bf16.msra.mxu0 0
      %2434 = vmatprep.subr.bf16.mxu0 0
      %2435 = vmatpush1.bf16.msra.mxu0 0
      %2436 = vmatprep.subr.bf16.mxu0 0
      %2437 = vmatpush1.bf16.msra.mxu0 0
      %2438 = vmatprep.subr.bf16.mxu0 0
      %2439 = vmatpush1.bf16.msra.mxu0 0
      %2440 = vmatprep.subr.bf16.mxu0 0
      %2441 = vmatpush1.bf16.msra.mxu0 0
      %2442 = vmatprep.subr.bf16.mxu0 0
      %2443 = vmatpush1.bf16.msra.mxu0 0
      %2444 = vmatprep.subr.bf16.mxu0 0
      %2445 = vmatpush1.bf16.msra.mxu0 0
      %2446 = vmatprep.subr.bf16.mxu0 0
      %2447 = vmatpush1.bf16.msra.mxu0 0
      %2448 = vmatprep.subr.bf16.mxu0 0
      %2449 = vmatpush1.bf16.msra.mxu0 0
      %2450 = vmatprep.mubr.bf16.mxu0 0
      %2451 = vmatmul.mubr.bf16.gmra.mrb[0].mxu0 %v2413
      %v2452 = vpop.f32.mrb[0].mxu0
      %v2453 = vadd.f32 0.0, %v2452
      %v2454 = vpop.f32.mrb[0].mxu0
      %v2455 = vadd.f32 0.0, %v2454
      %v2456 = vpop.f32.mrb[0].mxu0
      %v2457 = vadd.f32 0.0, %v2456
      %v2458 = vpop.f32.mrb[0].mxu0
      %v2459 = vadd.f32 0.0, %v2458
      %2460 = vmatprep.mubr.bf16.mxu0 0
      %2461 = vmatmul.mubr.bf16.gmra.mrb[0].mxu0 %v2416
      %v2462 = vpop.f32.mrb[0].mxu0
      %v2463 = vadd.f32 0.0, %v2462
      %v2464 = vpop.f32.mrb[0].mxu0
      %v2465 = vadd.f32 0.0, %v2464
      %v2466 = vpop.f32.mrb[0].mxu0
      %v2467 = vadd.f32 0.0, %v2466
      %v2468 = vpop.f32.mrb[0].mxu0
      %v2469 = vadd.f32 0.0, %v2468
      %2470 = vdwg.mxu0
      %2471 = vmatprep.subr.bf16.mxu0 0
      %2472 = vmatpush1.bf16.msra.mxu0 %v2373
      %2473 = vmatprep.subr.bf16.mxu0 0
      %2474 = vmatpush1.bf16.msra.mxu0 %v2379
      %2475 = vmatprep.subr.bf16.mxu0 0
      %2476 = vmatpush1.bf16.msra.mxu0 %v2385
      %2477 = vmatprep.subr.bf16.mxu0 0
      %2478 = vmatpush1.bf16.msra.mxu0 %v2391
      %2479 = vmatprep.subr.bf16.mxu0 0
      %2480 = vmatpush1.bf16.msra.mxu0 0
      %2481 = vmatprep.subr.bf16.mxu0 0
      %2482 = vmatpush1.bf16.msra.mxu0 0
      %2483 = vmatprep.subr.bf16.mxu0 0
      %2484 = vmatpush1.bf16.msra.mxu0 0
      %2485 = vmatprep.subr.bf16.mxu0 0
      %2486 = vmatpush1.bf16.msra.mxu0 0
      %2487 = vmatprep.subr.bf16.mxu0 0
      %2488 = vmatpush1.bf16.msra.mxu0 0
      %2489 = vmatprep.subr.bf16.mxu0 0
      %2490 = vmatpush1.bf16.msra.mxu0 0
      %2491 = vmatprep.subr.bf16.mxu0 0
      %2492 = vmatpush1.bf16.msra.mxu0 0
      %2493 = vmatprep.subr.bf16.mxu0 0
      %2494 = vmatpush1.bf16.msra.mxu0 0
      %2495 = vmatprep.subr.bf16.mxu0 0
      %2496 = vmatpush1.bf16.msra.mxu0 0
      %2497 = vmatprep.subr.bf16.mxu0 0
      %2498 = vmatpush1.bf16.msra.mxu0 0
      %2499 = vmatprep.subr.bf16.mxu0 0
      %2500 = vmatpush1.bf16.msra.mxu0 0
      %2501 = vmatprep.subr.bf16.mxu0 0
      %2502 = vmatpush1.bf16.msra.mxu0 0
      %2503 = vmatprep.mubr.bf16.mxu0 0
      %2504 = vmatmul.mubr.bf16.gmra.mrb[0].mxu0 %v2413
      %v2505 = vpop.f32.mrb[0].mxu0
      %v2506 = vadd.f32 0.0, %v2505
      %v2507 = vpop.f32.mrb[0].mxu0
      %v2508 = vpop.f32.mrb[0].mxu0
      %v2509 = vadd.f32 0.0, %v2508
      %v2510 = vpop.f32.mrb[0].mxu0
      %2511 = vmatprep.mubr.bf16.mxu0 0
      %2512 = vmatmul.mubr.bf16.gmra.mrb[0].mxu0 %v2416
      %v2513 = vpop.f32.mrb[0].mxu0
      %v2514 = vadd.f32 0.0, %v2513
      %v2515 = vpop.f32.mrb[0].mxu0
      %v2516 = vpop.f32.mrb[0].mxu0
      %v2517 = vadd.f32 0.0, %v2516
      %v2518 = vpop.f32.mrb[0].mxu0
      %2519 = vdwg.mxu0
      %v2520 = vadd.f32 %v2287, %v2453
      %v2521 = vadd.f32 %v2289, %v2455
      %v2522 = vadd.f32 %v2340, %v2506
      %v2523 = vadd.f32 %v2291, %v2457
      %v2524 = vadd.f32 %v2293, %v2459
      %v2525 = vadd.f32 %v2343, %v2509
      %v2526 = vadd.f32 %v2297, %v2463
      %v2527 = vadd.f32 %v2299, %v2465
      %v2528 = vadd.f32 %v2348, %v2514
      %v2529 = vadd.f32 %v2301, %v2467
      %v2530 = vadd.f32 %v2303, %v2469
      %v2531 = vadd.f32 %v2351, %v2517
      %2532 = vrot.lane.b32.xlu0 %v2366, 64
      %v2533 = vpop.permute.xlu0 %2532
      %2534 = vrot.lane.b32.xlu0 %v2367, 64
      %v2535 = vpop.permute.xlu0 %2534
      %2536 = vrot.lane.b32.xlu0 %v2055, 108
      %v2537 = vpop.permute.xlu0 %2536
      %2538 = vrot.lane.b32.xlu0 %v2056, 108
      %v2539 = vpop.permute.xlu0 %2538
      %2540 = vrot.lane.b32.xlu0 %v2057, 108
      %v2541 = vpop.permute.xlu0 %2540
      %2542 = vrot.lane.b32.xlu0 %v2058, 108
      %v2543 = vpop.permute.xlu0 %2542
      %2544 = vrot.lane.b32.xlu0 %v2059, 108
      %v2545 = vpop.permute.xlu0 %2544
      %2546 = vrot.lane.b32.xlu0 %v2060, 108
      %v2547 = vpop.permute.xlu0 %2546
      %2548 = vrot.lane.b32.xlu0 %v2061, 108
      %v2549 = vpop.permute.xlu0 %2548
      %2550 = vrot.lane.b32.xlu0 %v2062, 108
      %v2551 = vpop.permute.xlu0 %2550
      %2552 = vrot.lane.b32.xlu0 %v2063, 108
      %v2553 = vpop.permute.xlu0 %2552
      %2554 = vrot.lane.b32.xlu0 %v2064, 108
      %v2555 = vpop.permute.xlu0 %2554
      %2556 = vrot.lane.b32.xlu0 %v2065, 108
      %v2557 = vpop.permute.xlu0 %2556
      %2558 = vrot.lane.b32.xlu0 %v2066, 108
      %v2559 = vpop.permute.xlu0 %2558
      %v2560 = vsel %vm590, %v2537, %v2539
      %v2561 = vsel %vm590, %v2539, %v2541
      %v2562 = vsel %vm590, %v2543, %v2545
      %v2563 = vsel %vm590, %v2545, %v2547
      %v2564 = vsel %vm590, %v2549, %v2551
      %v2565 = vsel %vm590, %v2551, %v2553
      %v2566 = vsel %vm590, %v2555, %v2557
      %v2567 = vsel %vm590, %v2557, %v2559
      %v2581 = vsel %vm2137, %v2533, 0
      %v2584 = vsel %vm2137, %v2535, 0
      %2586 = vmatprep.subr.bf16.mxu0 %v2561
      %2587 = vmatpush1.bf16.msra.mxu0 %v2560
      %2588 = vmatprep.subr.bf16.mxu0 %v2563
      %2589 = vmatpush1.bf16.msra.mxu0 %v2562
      %2590 = vmatprep.subr.bf16.mxu0 %v2565
      %2591 = vmatpush1.bf16.msra.mxu0 %v2564
      %2592 = vmatprep.subr.bf16.mxu0 %v2567
      %2593 = vmatpush1.bf16.msra.mxu0 %v2566
      %2594 = vmatprep.subr.bf16.mxu0 0
      %2595 = vmatpush1.bf16.msra.mxu0 0
      %2596 = vmatprep.subr.bf16.mxu0 0
      %2597 = vmatpush1.bf16.msra.mxu0 0
      %2598 = vmatprep.subr.bf16.mxu0 0
      %2599 = vmatpush1.bf16.msra.mxu0 0
      %2600 = vmatprep.subr.bf16.mxu0 0
      %2601 = vmatpush1.bf16.msra.mxu0 0
      %2602 = vmatprep.subr.bf16.mxu0 0
      %2603 = vmatpush1.bf16.msra.mxu0 0
      %2604 = vmatprep.subr.bf16.mxu0 0
      %2605 = vmatpush1.bf16.msra.mxu0 0
      %2606 = vmatprep.subr.bf16.mxu0 0
      %2607 = vmatpush1.bf16.msra.mxu0 0
      %2608 = vmatprep.subr.bf16.mxu0 0
      %2609 = vmatpush1.bf16.msra.mxu0 0
      %2610 = vmatprep.subr.bf16.mxu0 0
      %2611 = vmatpush1.bf16.msra.mxu0 0
      %2612 = vmatprep.subr.bf16.mxu0 0
      %2613 = vmatpush1.bf16.msra.mxu0 0
      %2614 = vmatprep.subr.bf16.mxu0 0
      %2615 = vmatpush1.bf16.msra.mxu0 0
      %2616 = vmatprep.subr.bf16.mxu0 0
      %2617 = vmatpush1.bf16.msra.mxu0 0
      %2618 = vmatprep.mubr.bf16.mxu0 0
      %2619 = vmatmul.mubr.bf16.gmra.mrb[0].mxu0 %v2581
      %v2620 = vpop.f32.mrb[0].mxu0
      %v2621 = vadd.f32 0.0, %v2620
      %v2622 = vpop.f32.mrb[0].mxu0
      %v2623 = vadd.f32 0.0, %v2622
      %v2624 = vpop.f32.mrb[0].mxu0
      %v2625 = vadd.f32 0.0, %v2624
      %v2626 = vpop.f32.mrb[0].mxu0
      %v2627 = vadd.f32 0.0, %v2626
      %2628 = vmatprep.mubr.bf16.mxu0 0
      %2629 = vmatmul.mubr.bf16.gmra.mrb[0].mxu0 %v2584
      %v2630 = vpop.f32.mrb[0].mxu0
      %v2631 = vadd.f32 0.0, %v2630
      %v2632 = vpop.f32.mrb[0].mxu0
      %v2633 = vadd.f32 0.0, %v2632
      %v2634 = vpop.f32.mrb[0].mxu0
      %v2635 = vadd.f32 0.0, %v2634
      %v2636 = vpop.f32.mrb[0].mxu0
      %v2637 = vadd.f32 0.0, %v2636
      %2638 = vdwg.mxu0
      %2639 = vmatprep.subr.bf16.mxu0 0
      %2640 = vmatpush1.bf16.msra.mxu0 %v2541
      %2641 = vmatprep.subr.bf16.mxu0 0
      %2642 = vmatpush1.bf16.msra.mxu0 %v2547
      %2643 = vmatprep.subr.bf16.mxu0 0
      %2644 = vmatpush1.bf16.msra.mxu0 %v2553
      %2645 = vmatprep.subr.bf16.mxu0 0
      %2646 = vmatpush1.bf16.msra.mxu0 %v2559
      %2647 = vmatprep.subr.bf16.mxu0 0
      %2648 = vmatpush1.bf16.msra.mxu0 0
      %2649 = vmatprep.subr.bf16.mxu0 0
      %2650 = vmatpush1.bf16.msra.mxu0 0
      %2651 = vmatprep.subr.bf16.mxu0 0
      %2652 = vmatpush1.bf16.msra.mxu0 0
      %2653 = vmatprep.subr.bf16.mxu0 0
      %2654 = vmatpush1.bf16.msra.mxu0 0
      %2655 = vmatprep.subr.bf16.mxu0 0
      %2656 = vmatpush1.bf16.msra.mxu0 0
      %2657 = vmatprep.subr.bf16.mxu0 0
      %2658 = vmatpush1.bf16.msra.mxu0 0
      %2659 = vmatprep.subr.bf16.mxu0 0
      %2660 = vmatpush1.bf16.msra.mxu0 0
      %2661 = vmatprep.subr.bf16.mxu0 0
      %2662 = vmatpush1.bf16.msra.mxu0 0
      %2663 = vmatprep.subr.bf16.mxu0 0
      %2664 = vmatpush1.bf16.msra.mxu0 0
      %2665 = vmatprep.subr.bf16.mxu0 0
      %2666 = vmatpush1.bf16.msra.mxu0 0
      %2667 = vmatprep.subr.bf16.mxu0 0
      %2668 = vmatpush1.bf16.msra.mxu0 0
      %2669 = vmatprep.subr.bf16.mxu0 0
      %2670 = vmatpush1.bf16.msra.mxu0 0
      %2671 = vmatprep.mubr.bf16.mxu0 0
      %2672 = vmatmul.mubr.bf16.gmra.mrb[0].mxu0 %v2581
      %v2673 = vpop.f32.mrb[0].mxu0
      %v2674 = vadd.f32 0.0, %v2673
      %v2675 = vpop.f32.mrb[0].mxu0
      %v2676 = vpop.f32.mrb[0].mxu0
      %v2677 = vadd.f32 0.0, %v2676
      %v2678 = vpop.f32.mrb[0].mxu0
      %2679 = vmatprep.mubr.bf16.mxu0 0
      %2680 = vmatmul.mubr.bf16.gmra.mrb[0].mxu0 %v2584
      %v2681 = vpop.f32.mrb[0].mxu0
      %v2682 = vadd.f32 0.0, %v2681
      %v2683 = vpop.f32.mrb[0].mxu0
      %v2684 = vpop.f32.mrb[0].mxu0
      %v2685 = vadd.f32 0.0, %v2684
      %v2686 = vpop.f32.mrb[0].mxu0
      %2687 = vdwg.mxu0
      %v2688 = vadd.f32 %v2520, %v2621
      %v2689 = vadd.f32 %v2521, %v2623
      %v2690 = vadd.f32 %v2522, %v2674
      %v2691 = vadd.f32 %v2523, %v2625
      %v2692 = vadd.f32 %v2524, %v2627
      %v2693 = vadd.f32 %v2525, %v2677
      %v2694 = vadd.f32 %v2526, %v2631
      %v2695 = vadd.f32 %v2527, %v2633
      %v2696 = vadd.f32 %v2528, %v2682
      %v2697 = vadd.f32 %v2529, %v2635
      %v2698 = vadd.f32 %v2530, %v2637
      %v2699 = vadd.f32 %v2531, %v2685
      %v2700 = vld [vmem:[%s4 + $0x8] sm:$0xf]
      %v2701 = vld [vmem:[%s4 + $0x1c] sm:$0xf]
      %v2702 = vld [vmem:[%s4 + $0x30] sm:$0xf]
      %v2703 = vld [vmem:[%s4 + $0x44] sm:$0xf]
      %v2708 = vunpack.c.l.b16 %v2700
      %v2709 = vunpack.c.l.b16 %v2701
      %v2710 = vunpack.c.l.b16 %v2702
      %v2711 = vunpack.c.l.b16 %v2703
      %v2712 = vpack.c.b16 %v2709, %v2708
      %v2713 = vpack.c.b16 %v2711, %v2710
      %2714 = vrot.lane.b32.xlu0 %v2055, 107
      %v2715 = vpop.permute.xlu0 %2714
      %2716 = vrot.lane.b32.xlu0 %v2056, 107
      %v2717 = vpop.permute.xlu0 %2716
      %2718 = vrot.lane.b32.xlu0 %v2057, 107
      %v2719 = vpop.permute.xlu0 %2718
      %2720 = vrot.lane.b32.xlu0 %v2058, 107
      %v2721 = vpop.permute.xlu0 %2720
      %2722 = vrot.lane.b32.xlu0 %v2059, 107
      %v2723 = vpop.permute.xlu0 %2722
      %2724 = vrot.lane.b32.xlu0 %v2060, 107
      %v2725 = vpop.permute.xlu0 %2724
      %2726 = vrot.lane.b32.xlu0 %v2061, 107
      %v2727 = vpop.permute.xlu0 %2726
      %2728 = vrot.lane.b32.xlu0 %v2062, 107
      %v2729 = vpop.permute.xlu0 %2728
      %2730 = vrot.lane.b32.xlu0 %v2063, 107
      %v2731 = vpop.permute.xlu0 %2730
      %2732 = vrot.lane.b32.xlu0 %v2064, 107
      %v2733 = vpop.permute.xlu0 %2732
      %2734 = vrot.lane.b32.xlu0 %v2065, 107
      %v2735 = vpop.permute.xlu0 %2734
      %2736 = vrot.lane.b32.xlu0 %v2066, 107
      %v2737 = vpop.permute.xlu0 %2736
      %v2738 = vsel %vm640, %v2715, %v2717
      %v2739 = vsel %vm640, %v2717, %v2719
      %v2740 = vsel %vm640, %v2721, %v2723
      %v2741 = vsel %vm640, %v2723, %v2725
      %v2742 = vsel %vm640, %v2727, %v2729
      %v2743 = vsel %vm640, %v2729, %v2731
      %v2744 = vsel %vm640, %v2733, %v2735
      %v2745 = vsel %vm640, %v2735, %v2737
      %v2759 = vsel %vm2137, %v2712, 0
      %v2762 = vsel %vm2137, %v2713, 0
      %2764 = vmatprep.subr.bf16.mxu0 %v2739
      %2765 = vmatpush1.bf16.msra.mxu0 %v2738
      %2766 = vmatprep.subr.bf16.mxu0 %v2741
      %2767 = vmatpush1.bf16.msra.mxu0 %v2740
      %2768 = vmatprep.subr.bf16.mxu0 %v2743
      %2769 = vmatpush1.bf16.msra.mxu0 %v2742
      %2770 = vmatprep.subr.bf16.mxu0 %v2745
      %2771 = vmatpush1.bf16.msra.mxu0 %v2744
      %2772 = vmatprep.subr.bf16.mxu0 0
      %2773 = vmatpush1.bf16.msra.mxu0 0
      %2774 = vmatprep.subr.bf16.mxu0 0
      %2775 = vmatpush1.bf16.msra.mxu0 0
      %2776 = vmatprep.subr.bf16.mxu0 0
      %2777 = vmatpush1.bf16.msra.mxu0 0
      %2778 = vmatprep.subr.bf16.mxu0 0
      %2779 = vmatpush1.bf16.msra.mxu0 0
      %2780 = vmatprep.subr.bf16.mxu0 0
      %2781 = vmatpush1.bf16.msra.mxu0 0
      %2782 = vmatprep.subr.bf16.mxu0 0
      %2783 = vmatpush1.bf16.msra.mxu0 0
      %2784 = vmatprep.subr.bf16.mxu0 0
      %2785 = vmatpush1.bf16.msra.mxu0 0
      %2786 = vmatprep.subr.bf16.mxu0 0
      %2787 = vmatpush1.bf16.msra.mxu0 0
      %2788 = vmatprep.subr.bf16.mxu0 0
      %2789 = vmatpush1.bf16.msra.mxu0 0
      %2790 = vmatprep.subr.bf16.mxu0 0
      %2791 = vmatpush1.bf16.msra.mxu0 0
      %2792 = vmatprep.subr.bf16.mxu0 0
      %2793 = vmatpush1.bf16.msra.mxu0 0
      %2794 = vmatprep.subr.bf16.mxu0 0
      %2795 = vmatpush1.bf16.msra.mxu0 0
      %2796 = vmatprep.mubr.bf16.mxu0 0
      %2797 = vmatmul.mubr.bf16.gmra.mrb[0].mxu0 %v2759
      %v2798 = vpop.f32.mrb[0].mxu0
      %v2799 = vadd.f32 0.0, %v2798
      %v2800 = vpop.f32.mrb[0].mxu0
      %v2801 = vadd.f32 0.0, %v2800
      %v2802 = vpop.f32.mrb[0].mxu0
      %v2803 = vadd.f32 0.0, %v2802
      %v2804 = vpop.f32.mrb[0].mxu0
      %v2805 = vadd.f32 0.0, %v2804
      %2806 = vmatprep.mubr.bf16.mxu0 0
      %2807 = vmatmul.mubr.bf16.gmra.mrb[0].mxu0 %v2762
      %v2808 = vpop.f32.mrb[0].mxu0
      %v2809 = vadd.f32 0.0, %v2808
      %v2810 = vpop.f32.mrb[0].mxu0
      %v2811 = vadd.f32 0.0, %v2810
      %v2812 = vpop.f32.mrb[0].mxu0
      %v2813 = vadd.f32 0.0, %v2812
      %v2814 = vpop.f32.mrb[0].mxu0
      %v2815 = vadd.f32 0.0, %v2814
      %2816 = vdwg.mxu0
      %2817 = vmatprep.subr.bf16.mxu0 0
      %2818 = vmatpush1.bf16.msra.mxu0 %v2719
      %2819 = vmatprep.subr.bf16.mxu0 0
      %2820 = vmatpush1.bf16.msra.mxu0 %v2725
      %2821 = vmatprep.subr.bf16.mxu0 0
      %2822 = vmatpush1.bf16.msra.mxu0 %v2731
      %2823 = vmatprep.subr.bf16.mxu0 0
      %2824 = vmatpush1.bf16.msra.mxu0 %v2737
      %2825 = vmatprep.subr.bf16.mxu0 0
      %2826 = vmatpush1.bf16.msra.mxu0 0
      %2827 = vmatprep.subr.bf16.mxu0 0
      %2828 = vmatpush1.bf16.msra.mxu0 0
      %2829 = vmatprep.subr.bf16.mxu0 0
      %2830 = vmatpush1.bf16.msra.mxu0 0
      %2831 = vmatprep.subr.bf16.mxu0 0
      %2832 = vmatpush1.bf16.msra.mxu0 0
      %2833 = vmatprep.subr.bf16.mxu0 0
      %2834 = vmatpush1.bf16.msra.mxu0 0
      %2835 = vmatprep.subr.bf16.mxu0 0
      %2836 = vmatpush1.bf16.msra.mxu0 0
      %2837 = vmatprep.subr.bf16.mxu0 0
      %2838 = vmatpush1.bf16.msra.mxu0 0
      %2839 = vmatprep.subr.bf16.mxu0 0
      %2840 = vmatpush1.bf16.msra.mxu0 0
      %2841 = vmatprep.subr.bf16.mxu0 0
      %2842 = vmatpush1.bf16.msra.mxu0 0
      %2843 = vmatprep.subr.bf16.mxu0 0
      %2844 = vmatpush1.bf16.msra.mxu0 0
      %2845 = vmatprep.subr.bf16.mxu0 0
      %2846 = vmatpush1.bf16.msra.mxu0 0
      %2847 = vmatprep.subr.bf16.mxu0 0
      %2848 = vmatpush1.bf16.msra.mxu0 0
      %2849 = vmatprep.mubr.bf16.mxu0 0
      %2850 = vmatmul.mubr.bf16.gmra.mrb[0].mxu0 %v2759
      %v2851 = vpop.f32.mrb[0].mxu0
      %v2852 = vadd.f32 0.0, %v2851
      %v2853 = vpop.f32.mrb[0].mxu0
      %v2854 = vpop.f32.mrb[0].mxu0
      %v2855 = vadd.f32 0.0, %v2854
      %v2856 = vpop.f32.mrb[0].mxu0
      %2857 = vmatprep.mubr.bf16.mxu0 0
      %2858 = vmatmul.mubr.bf16.gmra.mrb[0].mxu0 %v2762
      %v2859 = vpop.f32.mrb[0].mxu0
      %v2860 = vadd.f32 0.0, %v2859
      %v2861 = vpop.f32.mrb[0].mxu0
      %v2862 = vpop.f32.mrb[0].mxu0
      %v2863 = vadd.f32 0.0, %v2862
      %v2864 = vpop.f32.mrb[0].mxu0
      %2865 = vdwg.mxu0
      %v2866 = vadd.f32 %v2688, %v2799
      %v2867 = vadd.f32 %v2689, %v2801
      %v2868 = vadd.f32 %v2690, %v2852
      %v2869 = vadd.f32 %v2691, %v2803
      %v2870 = vadd.f32 %v2692, %v2805
      %v2871 = vadd.f32 %v2693, %v2855
      %v2872 = vadd.f32 %v2694, %v2809
      %v2873 = vadd.f32 %v2695, %v2811
      %v2874 = vadd.f32 %v2696, %v2860
      %v2875 = vadd.f32 %v2697, %v2813
      %v2876 = vadd.f32 %v2698, %v2815
      %v2877 = vadd.f32 %v2699, %v2863
      %2878 = vrot.lane.b32.xlu0 %v2712, 64
      %v2879 = vpop.permute.xlu0 %2878
      %2880 = vrot.lane.b32.xlu0 %v2713, 64
      %v2881 = vpop.permute.xlu0 %2880
      %2882 = vrot.lane.b32.xlu0 %v2055, 106
      %v2883 = vpop.permute.xlu0 %2882
      %2884 = vrot.lane.b32.xlu0 %v2056, 106
      %v2885 = vpop.permute.xlu0 %2884
      %2886 = vrot.lane.b32.xlu0 %v2057, 106
      %v2887 = vpop.permute.xlu0 %2886
      %2888 = vrot.lane.b32.xlu0 %v2058, 106
      %v2889 = vpop.permute.xlu0 %2888
      %2890 = vrot.lane.b32.xlu0 %v2059, 106
      %v2891 = vpop.permute.xlu0 %2890
      %2892 = vrot.lane.b32.xlu0 %v2060, 106
      %v2893 = vpop.permute.xlu0 %2892
      %2894 = vrot.lane.b32.xlu0 %v2061, 106
      %v2895 = vpop.permute.xlu0 %2894
      %2896 = vrot.lane.b32.xlu0 %v2062, 106
      %v2897 = vpop.permute.xlu0 %2896
      %2898 = vrot.lane.b32.xlu0 %v2063, 106
      %v2899 = vpop.permute.xlu0 %2898
      %2900 = vrot.lane.b32.xlu0 %v2064, 106
      %v2901 = vpop.permute.xlu0 %2900
      %2902 = vrot.lane.b32.xlu0 %v2065, 106
      %v2903 = vpop.permute.xlu0 %2902
      %2904 = vrot.lane.b32.xlu0 %v2066, 106
      %v2905 = vpop.permute.xlu0 %2904
      %v2906 = vsel %vm698, %v2883, %v2885
      %v2907 = vsel %vm698, %v2885, %v2887
      %v2908 = vsel %vm698, %v2889, %v2891
      %v2909 = vsel %vm698, %v2891, %v2893
      %v2910 = vsel %vm698, %v2895, %v2897
      %v2911 = vsel %vm698, %v2897, %v2899
      %v2912 = vsel %vm698, %v2901, %v2903
      %v2913 = vsel %vm698, %v2903, %v2905
      %v2927 = vsel %vm2137, %v2879, 0
      %v2930 = vsel %vm2137, %v2881, 0
      %2932 = vmatprep.subr.bf16.mxu0 %v2907
      %2933 = vmatpush1.bf16.msra.mxu0 %v2906
      %2934 = vmatprep.subr.bf16.mxu0 %v2909
      %2935 = vmatpush1.bf16.msra.mxu0 %v2908
      %2936 = vmatprep.subr.bf16.mxu0 %v2911
      %2937 = vmatpush1.bf16.msra.mxu0 %v2910
      %2938 = vmatprep.subr.bf16.mxu0 %v2913
      %2939 = vmatpush1.bf16.msra.mxu0 %v2912
      %2940 = vmatprep.subr.bf16.mxu0 0
      %2941 = vmatpush1.bf16.msra.mxu0 0
      %2942 = vmatprep.subr.bf16.mxu0 0
      %2943 = vmatpush1.bf16.msra.mxu0 0
      %2944 = vmatprep.subr.bf16.mxu0 0
      %2945 = vmatpush1.bf16.msra.mxu0 0
      %2946 = vmatprep.subr.bf16.mxu0 0
      %2947 = vmatpush1.bf16.msra.mxu0 0
      %2948 = vmatprep.subr.bf16.mxu0 0
      %2949 = vmatpush1.bf16.msra.mxu0 0
      %2950 = vmatprep.subr.bf16.mxu0 0
      %2951 = vmatpush1.bf16.msra.mxu0 0
      %2952 = vmatprep.subr.bf16.mxu0 0
      %2953 = vmatpush1.bf16.msra.mxu0 0
      %2954 = vmatprep.subr.bf16.mxu0 0
      %2955 = vmatpush1.bf16.msra.mxu0 0
      %2956 = vmatprep.subr.bf16.mxu0 0
      %2957 = vmatpush1.bf16.msra.mxu0 0
      %2958 = vmatprep.subr.bf16.mxu0 0
      %2959 = vmatpush1.bf16.msra.mxu0 0
      %2960 = vmatprep.subr.bf16.mxu0 0
      %2961 = vmatpush1.bf16.msra.mxu0 0
      %2962 = vmatprep.subr.bf16.mxu0 0
      %2963 = vmatpush1.bf16.msra.mxu0 0
      %2964 = vmatprep.mubr.bf16.mxu0 0
      %2965 = vmatmul.mubr.bf16.gmra.mrb[0].mxu0 %v2927
      %v2966 = vpop.f32.mrb[0].mxu0
      %v2967 = vadd.f32 0.0, %v2966
      %v2968 = vpop.f32.mrb[0].mxu0
      %v2969 = vadd.f32 0.0, %v2968
      %v2970 = vpop.f32.mrb[0].mxu0
      %v2971 = vadd.f32 0.0, %v2970
      %v2972 = vpop.f32.mrb[0].mxu0
      %v2973 = vadd.f32 0.0, %v2972
      %2974 = vmatprep.mubr.bf16.mxu0 0
      %2975 = vmatmul.mubr.bf16.gmra.mrb[0].mxu0 %v2930
      %v2976 = vpop.f32.mrb[0].mxu0
      %v2977 = vadd.f32 0.0, %v2976
      %v2978 = vpop.f32.mrb[0].mxu0
      %v2979 = vadd.f32 0.0, %v2978
      %v2980 = vpop.f32.mrb[0].mxu0
      %v2981 = vadd.f32 0.0, %v2980
      %v2982 = vpop.f32.mrb[0].mxu0
      %v2983 = vadd.f32 0.0, %v2982
      %2984 = vdwg.mxu0
      %2985 = vmatprep.subr.bf16.mxu0 0
      %2986 = vmatpush1.bf16.msra.mxu0 %v2887
      %2987 = vmatprep.subr.bf16.mxu0 0
      %2988 = vmatpush1.bf16.msra.mxu0 %v2893
      %2989 = vmatprep.subr.bf16.mxu0 0
      %2990 = vmatpush1.bf16.msra.mxu0 %v2899
      %2991 = vmatprep.subr.bf16.mxu0 0
      %2992 = vmatpush1.bf16.msra.mxu0 %v2905
      %2993 = vmatprep.subr.bf16.mxu0 0
      %2994 = vmatpush1.bf16.msra.mxu0 0
      %2995 = vmatprep.subr.bf16.mxu0 0
      %2996 = vmatpush1.bf16.msra.mxu0 0
      %2997 = vmatprep.subr.bf16.mxu0 0
      %2998 = vmatpush1.bf16.msra.mxu0 0
      %2999 = vmatprep.subr.bf16.mxu0 0
      %3000 = vmatpush1.bf16.msra.mxu0 0
      %3001 = vmatprep.subr.bf16.mxu0 0
      %3002 = vmatpush1.bf16.msra.mxu0 0
      %3003 = vmatprep.subr.bf16.mxu0 0
      %3004 = vmatpush1.bf16.msra.mxu0 0
      %3005 = vmatprep.subr.bf16.mxu0 0
      %3006 = vmatpush1.bf16.msra.mxu0 0
      %3007 = vmatprep.subr.bf16.mxu0 0
      %3008 = vmatpush1.bf16.msra.mxu0 0
      %3009 = vmatprep.subr.bf16.mxu0 0
      %3010 = vmatpush1.bf16.msra.mxu0 0
      %3011 = vmatprep.subr.bf16.mxu0 0
      %3012 = vmatpush1.bf16.msra.mxu0 0
      %3013 = vmatprep.subr.bf16.mxu0 0
      %3014 = vmatpush1.bf16.msra.mxu0 0
      %3015 = vmatprep.subr.bf16.mxu0 0
      %3016 = vmatpush1.bf16.msra.mxu0 0
      %3017 = vmatprep.mubr.bf16.mxu0 0
      %3018 = vmatmul.mubr.bf16.gmra.mrb[0].mxu0 %v2927
      %v3019 = vpop.f32.mrb[0].mxu0
      %v3020 = vadd.f32 0.0, %v3019
      %v3021 = vpop.f32.mrb[0].mxu0
      %v3022 = vpop.f32.mrb[0].mxu0
      %v3023 = vadd.f32 0.0, %v3022
      %v3024 = vpop.f32.mrb[0].mxu0
      %3025 = vmatprep.mubr.bf16.mxu0 0
      %3026 = vmatmul.mubr.bf16.gmra.mrb[0].mxu0 %v2930
      %v3027 = vpop.f32.mrb[0].mxu0
      %v3028 = vadd.f32 0.0, %v3027
      %v3029 = vpop.f32.mrb[0].mxu0
      %v3030 = vpop.f32.mrb[0].mxu0
      %v3031 = vadd.f32 0.0, %v3030
      %v3032 = vpop.f32.mrb[0].mxu0
      %3033 = vdwg.mxu0
      %v3034 = vadd.f32 %v2866, %v2967
      %v3035 = vadd.f32 %v2867, %v2969
      %v3036 = vadd.f32 %v2868, %v3020
      %v3037 = vadd.f32 %v2869, %v2971
      %v3038 = vadd.f32 %v2870, %v2973
      %v3039 = vadd.f32 %v2871, %v3023
      %v3040 = vadd.f32 %v2872, %v2977
      %v3041 = vadd.f32 %v2873, %v2979
      %v3042 = vadd.f32 %v2874, %v3028
      %v3043 = vadd.f32 %v2875, %v2981
      %v3044 = vadd.f32 %v2876, %v2983
      %v3045 = vadd.f32 %v2877, %v3031
      %v3046 = vld [vmem:[%s4 + $0xc] sm:$0xf]
      %v3047 = vld [vmem:[%s4 + $0x20] sm:$0xf]
      %v3048 = vld [vmem:[%s4 + $0x34] sm:$0xf]
      %v3049 = vld [vmem:[%s4 + $0x48] sm:$0xf]
      %v3054 = vunpack.c.l.b16 %v3046
      %v3055 = vunpack.c.l.b16 %v3047
      %v3056 = vunpack.c.l.b16 %v3048
      %v3057 = vunpack.c.l.b16 %v3049
      %v3058 = vpack.c.b16 %v3055, %v3054
      %v3059 = vpack.c.b16 %v3057, %v3056
      %3060 = vrot.lane.b32.xlu0 %v2055, 88
      %v3061 = vpop.permute.xlu0 %3060
      %3062 = vrot.lane.b32.xlu0 %v2056, 88
      %v3063 = vpop.permute.xlu0 %3062
      %3064 = vrot.lane.b32.xlu0 %v2057, 88
      %v3065 = vpop.permute.xlu0 %3064
      %3066 = vrot.lane.b32.xlu0 %v2058, 88
      %v3067 = vpop.permute.xlu0 %3066
      %3068 = vrot.lane.b32.xlu0 %v2059, 88
      %v3069 = vpop.permute.xlu0 %3068
      %3070 = vrot.lane.b32.xlu0 %v2060, 88
      %v3071 = vpop.permute.xlu0 %3070
      %3072 = vrot.lane.b32.xlu0 %v2061, 88
      %v3073 = vpop.permute.xlu0 %3072
      %3074 = vrot.lane.b32.xlu0 %v2062, 88
      %v3075 = vpop.permute.xlu0 %3074
      %3076 = vrot.lane.b32.xlu0 %v2063, 88
      %v3077 = vpop.permute.xlu0 %3076
      %3078 = vrot.lane.b32.xlu0 %v2064, 88
      %v3079 = vpop.permute.xlu0 %3078
      %3080 = vrot.lane.b32.xlu0 %v2065, 88
      %v3081 = vpop.permute.xlu0 %3080
      %3082 = vrot.lane.b32.xlu0 %v2066, 88
      %v3083 = vpop.permute.xlu0 %3082
      %v3084 = vsel %vm856, %v3061, %v3063
      %v3085 = vsel %vm856, %v3063, %v3065
      %v3086 = vsel %vm856, %v3067, %v3069
      %v3087 = vsel %vm856, %v3069, %v3071
      %v3088 = vsel %vm856, %v3073, %v3075
      %v3089 = vsel %vm856, %v3075, %v3077
      %v3090 = vsel %vm856, %v3079, %v3081
      %v3091 = vsel %vm856, %v3081, %v3083
      %v3105 = vsel %vm2137, %v3058, 0
      %v3108 = vsel %vm2137, %v3059, 0
      %3110 = vmatprep.subr.bf16.mxu0 %v3085
      %3111 = vmatpush1.bf16.msra.mxu0 %v3084
      %3112 = vmatprep.subr.bf16.mxu0 %v3087
      %3113 = vmatpush1.bf16.msra.mxu0 %v3086
      %3114 = vmatprep.subr.bf16.mxu0 %v3089
      %3115 = vmatpush1.bf16.msra.mxu0 %v3088
      %3116 = vmatprep.subr.bf16.mxu0 %v3091
      %3117 = vmatpush1.bf16.msra.mxu0 %v3090
      %3118 = vmatprep.subr.bf16.mxu0 0
      %3119 = vmatpush1.bf16.msra.mxu0 0
      %3120 = vmatprep.subr.bf16.mxu0 0
      %3121 = vmatpush1.bf16.msra.mxu0 0
      %3122 = vmatprep.subr.bf16.mxu0 0
      %3123 = vmatpush1.bf16.msra.mxu0 0
      %3124 = vmatprep.subr.bf16.mxu0 0
      %3125 = vmatpush1.bf16.msra.mxu0 0
      %3126 = vmatprep.subr.bf16.mxu0 0
      %3127 = vmatpush1.bf16.msra.mxu0 0
      %3128 = vmatprep.subr.bf16.mxu0 0
      %3129 = vmatpush1.bf16.msra.mxu0 0
      %3130 = vmatprep.subr.bf16.mxu0 0
      %3131 = vmatpush1.bf16.msra.mxu0 0
      %3132 = vmatprep.subr.bf16.mxu0 0
      %3133 = vmatpush1.bf16.msra.mxu0 0
      %3134 = vmatprep.subr.bf16.mxu0 0
      %3135 = vmatpush1.bf16.msra.mxu0 0
      %3136 = vmatprep.subr.bf16.mxu0 0
      %3137 = vmatpush1.bf16.msra.mxu0 0
      %3138 = vmatprep.subr.bf16.mxu0 0
      %3139 = vmatpush1.bf16.msra.mxu0 0
      %3140 = vmatprep.subr.bf16.mxu0 0
      %3141 = vmatpush1.bf16.msra.mxu0 0
      %3142 = vmatprep.mubr.bf16.mxu0 0
      %3143 = vmatmul.mubr.bf16.gmra.mrb[0].mxu0 %v3105
      %v3144 = vpop.f32.mrb[0].mxu0
      %v3145 = vadd.f32 0.0, %v3144
      %v3146 = vpop.f32.mrb[0].mxu0
      %v3147 = vadd.f32 0.0, %v3146
      %v3148 = vpop.f32.mrb[0].mxu0
      %v3149 = vadd.f32 0.0, %v3148
      %v3150 = vpop.f32.mrb[0].mxu0
      %v3151 = vadd.f32 0.0, %v3150
      %3152 = vmatprep.mubr.bf16.mxu0 0
      %3153 = vmatmul.mubr.bf16.gmra.mrb[0].mxu0 %v3108
      %v3154 = vpop.f32.mrb[0].mxu0
      %v3155 = vadd.f32 0.0, %v3154
      %v3156 = vpop.f32.mrb[0].mxu0
      %v3157 = vadd.f32 0.0, %v3156
      %v3158 = vpop.f32.mrb[0].mxu0
      %v3159 = vadd.f32 0.0, %v3158
      %v3160 = vpop.f32.mrb[0].mxu0
      %v3161 = vadd.f32 0.0, %v3160
      %3162 = vdwg.mxu0
      %3163 = vmatprep.subr.bf16.mxu0 0
      %3164 = vmatpush1.bf16.msra.mxu0 %v3065
      %3165 = vmatprep.subr.bf16.mxu0 0
      %3166 = vmatpush1.bf16.msra.mxu0 %v3071
      %3167 = vmatprep.subr.bf16.mxu0 0
      %3168 = vmatpush1.bf16.msra.mxu0 %v3077
      %3169 = vmatprep.subr.bf16.mxu0 0
      %3170 = vmatpush1.bf16.msra.mxu0 %v3083
      %3171 = vmatprep.subr.bf16.mxu0 0
      %3172 = vmatpush1.bf16.msra.mxu0 0
      %3173 = vmatprep.subr.bf16.mxu0 0
      %3174 = vmatpush1.bf16.msra.mxu0 0
      %3175 = vmatprep.subr.bf16.mxu0 0
      %3176 = vmatpush1.bf16.msra.mxu0 0
      %3177 = vmatprep.subr.bf16.mxu0 0
      %3178 = vmatpush1.bf16.msra.mxu0 0
      %3179 = vmatprep.subr.bf16.mxu0 0
      %3180 = vmatpush1.bf16.msra.mxu0 0
      %3181 = vmatprep.subr.bf16.mxu0 0
      %3182 = vmatpush1.bf16.msra.mxu0 0
      %3183 = vmatprep.subr.bf16.mxu0 0
      %3184 = vmatpush1.bf16.msra.mxu0 0
      %3185 = vmatprep.subr.bf16.mxu0 0
      %3186 = vmatpush1.bf16.msra.mxu0 0
      %3187 = vmatprep.subr.bf16.mxu0 0
      %3188 = vmatpush1.bf16.msra.mxu0 0
      %3189 = vmatprep.subr.bf16.mxu0 0
      %3190 = vmatpush1.bf16.msra.mxu0 0
      %3191 = vmatprep.subr.bf16.mxu0 0
      %3192 = vmatpush1.bf16.msra.mxu0 0
      %3193 = vmatprep.subr.bf16.mxu0 0
      %3194 = vmatpush1.bf16.msra.mxu0 0
      %3195 = vmatprep.mubr.bf16.mxu0 0
      %3196 = vmatmul.mubr.bf16.gmra.mrb[0].mxu0 %v3105
      %v3197 = vpop.f32.mrb[0].mxu0
      %v3198 = vadd.f32 0.0, %v3197
      %v3199 = vpop.f32.mrb[0].mxu0
      %v3200 = vpop.f32.mrb[0].mxu0
      %v3201 = vadd.f32 0.0, %v3200
      %v3202 = vpop.f32.mrb[0].mxu0
      %3203 = vmatprep.mubr.bf16.mxu0 0
      %3204 = vmatmul.mubr.bf16.gmra.mrb[0].mxu0 %v3108
      %v3205 = vpop.f32.mrb[0].mxu0
      %v3206 = vadd.f32 0.0, %v3205
      %v3207 = vpop.f32.mrb[0].mxu0
      %v3208 = vpop.f32.mrb[0].mxu0
      %v3209 = vadd.f32 0.0, %v3208
      %v3210 = vpop.f32.mrb[0].mxu0
      %3211 = vdwg.mxu0
      %v3212 = vadd.f32 %v3034, %v3145
      %v3213 = vadd.f32 %v3035, %v3147
      %v3214 = vadd.f32 %v3036, %v3198
      %v3215 = vadd.f32 %v3037, %v3149
      %v3216 = vadd.f32 %v3038, %v3151
      %v3217 = vadd.f32 %v3039, %v3201
      %v3218 = vadd.f32 %v3040, %v3155
      %v3219 = vadd.f32 %v3041, %v3157
      %v3220 = vadd.f32 %v3042, %v3206
      %v3221 = vadd.f32 %v3043, %v3159
      %v3222 = vadd.f32 %v3044, %v3161
      %v3223 = vadd.f32 %v3045, %v3209
      %3224 = vrot.lane.b32.xlu0 %v3058, 64
      %v3225 = vpop.permute.xlu0 %3224
      %3226 = vrot.lane.b32.xlu0 %v3059, 64
      %v3227 = vpop.permute.xlu0 %3226
      %3228 = vrot.lane.b32.xlu0 %v2055, 87
      %v3229 = vpop.permute.xlu0 %3228
      %3230 = vrot.lane.b32.xlu0 %v2056, 87
      %v3231 = vpop.permute.xlu0 %3230
      %3232 = vrot.lane.b32.xlu0 %v2057, 87
      %v3233 = vpop.permute.xlu0 %3232
      %3234 = vrot.lane.b32.xlu0 %v2058, 87
      %v3235 = vpop.permute.xlu0 %3234
      %3236 = vrot.lane.b32.xlu0 %v2059, 87
      %v3237 = vpop.permute.xlu0 %3236
      %3238 = vrot.lane.b32.xlu0 %v2060, 87
      %v3239 = vpop.permute.xlu0 %3238
      %3240 = vrot.lane.b32.xlu0 %v2061, 87
      %v3241 = vpop.permute.xlu0 %3240
      %3242 = vrot.lane.b32.xlu0 %v2062, 87
      %v3243 = vpop.permute.xlu0 %3242
      %3244 = vrot.lane.b32.xlu0 %v2063, 87
      %v3245 = vpop.permute.xlu0 %3244
      %3246 = vrot.lane.b32.xlu0 %v2064, 87
      %v3247 = vpop.permute.xlu0 %3246
      %3248 = vrot.lane.b32.xlu0 %v2065, 87
      %v3249 = vpop.permute.xlu0 %3248
      %3250 = vrot.lane.b32.xlu0 %v2066, 87
      %v3251 = vpop.permute.xlu0 %3250
      %v3252 = vsel %vm914, %v3229, %v3231
      %v3253 = vsel %vm914, %v3231, %v3233
      %v3254 = vsel %vm914, %v3235, %v3237
      %v3255 = vsel %vm914, %v3237, %v3239
      %v3256 = vsel %vm914, %v3241, %v3243
      %v3257 = vsel %vm914, %v3243, %v3245
      %v3258 = vsel %vm914, %v3247, %v3249
      %v3259 = vsel %vm914, %v3249, %v3251
      %v3273 = vsel %vm2137, %v3225, 0
      %v3276 = vsel %vm2137, %v3227, 0
      %3278 = vmatprep.subr.bf16.mxu0 %v3253
      %3279 = vmatpush1.bf16.msra.mxu0 %v3252
      %3280 = vmatprep.subr.bf16.mxu0 %v3255
      %3281 = vmatpush1.bf16.msra.mxu0 %v3254
      %3282 = vmatprep.subr.bf16.mxu0 %v3257
      %3283 = vmatpush1.bf16.msra.mxu0 %v3256
      %3284 = vmatprep.subr.bf16.mxu0 %v3259
      %3285 = vmatpush1.bf16.msra.mxu0 %v3258
      %3286 = vmatprep.subr.bf16.mxu0 0
      %3287 = vmatpush1.bf16.msra.mxu0 0
      %3288 = vmatprep.subr.bf16.mxu0 0
      %3289 = vmatpush1.bf16.msra.mxu0 0
      %3290 = vmatprep.subr.bf16.mxu0 0
      %3291 = vmatpush1.bf16.msra.mxu0 0
      %3292 = vmatprep.subr.bf16.mxu0 0
      %3293 = vmatpush1.bf16.msra.mxu0 0
      %3294 = vmatprep.subr.bf16.mxu0 0
      %3295 = vmatpush1.bf16.msra.mxu0 0
      %3296 = vmatprep.subr.bf16.mxu0 0
      %3297 = vmatpush1.bf16.msra.mxu0 0
      %3298 = vmatprep.subr.bf16.mxu0 0
      %3299 = vmatpush1.bf16.msra.mxu0 0
      %3300 = vmatprep.subr.bf16.mxu0 0
      %3301 = vmatpush1.bf16.msra.mxu0 0
      %3302 = vmatprep.subr.bf16.mxu0 0
      %3303 = vmatpush1.bf16.msra.mxu0 0
      %3304 = vmatprep.subr.bf16.mxu0 0
      %3305 = vmatpush1.bf16.msra.mxu0 0
      %3306 = vmatprep.subr.bf16.mxu0 0
      %3307 = vmatpush1.bf16.msra.mxu0 0
      %3308 = vmatprep.subr.bf16.mxu0 0
      %3309 = vmatpush1.bf16.msra.mxu0 0
      %3310 = vmatprep.mubr.bf16.mxu0 0
      %3311 = vmatmul.mubr.bf16.gmra.mrb[0].mxu0 %v3273
      %v3312 = vpop.f32.mrb[0].mxu0
      %v3313 = vadd.f32 0.0, %v3312
      %v3314 = vpop.f32.mrb[0].mxu0
      %v3315 = vadd.f32 0.0, %v3314
      %v3316 = vpop.f32.mrb[0].mxu0
      %v3317 = vadd.f32 0.0, %v3316
      %v3318 = vpop.f32.mrb[0].mxu0
      %v3319 = vadd.f32 0.0, %v3318
      %3320 = vmatprep.mubr.bf16.mxu0 0
      %3321 = vmatmul.mubr.bf16.gmra.mrb[0].mxu0 %v3276
      %v3322 = vpop.f32.mrb[0].mxu0
      %v3323 = vadd.f32 0.0, %v3322
      %v3324 = vpop.f32.mrb[0].mxu0
      %v3325 = vadd.f32 0.0, %v3324
      %v3326 = vpop.f32.mrb[0].mxu0
      %v3327 = vadd.f32 0.0, %v3326
      %v3328 = vpop.f32.mrb[0].mxu0
      %v3329 = vadd.f32 0.0, %v3328
      %3330 = vdwg.mxu0
      %3331 = vmatprep.subr.bf16.mxu0 0
      %3332 = vmatpush1.bf16.msra.mxu0 %v3233
      %3333 = vmatprep.subr.bf16.mxu0 0
      %3334 = vmatpush1.bf16.msra.mxu0 %v3239
      %3335 = vmatprep.subr.bf16.mxu0 0
      %3336 = vmatpush1.bf16.msra.mxu0 %v3245
      %3337 = vmatprep.subr.bf16.mxu0 0
      %3338 = vmatpush1.bf16.msra.mxu0 %v3251
      %3339 = vmatprep.subr.bf16.mxu0 0
      %3340 = vmatpush1.bf16.msra.mxu0 0
      %3341 = vmatprep.subr.bf16.mxu0 0
      %3342 = vmatpush1.bf16.msra.mxu0 0
      %3343 = vmatprep.subr.bf16.mxu0 0
      %3344 = vmatpush1.bf16.msra.mxu0 0
      %3345 = vmatprep.subr.bf16.mxu0 0
      %3346 = vmatpush1.bf16.msra.mxu0 0
      %3347 = vmatprep.subr.bf16.mxu0 0
      %3348 = vmatpush1.bf16.msra.mxu0 0
      %3349 = vmatprep.subr.bf16.mxu0 0
      %3350 = vmatpush1.bf16.msra.mxu0 0
      %3351 = vmatprep.subr.bf16.mxu0 0
      %3352 = vmatpush1.bf16.msra.mxu0 0
      %3353 = vmatprep.subr.bf16.mxu0 0
      %3354 = vmatpush1.bf16.msra.mxu0 0
      %3355 = vmatprep.subr.bf16.mxu0 0
      %3356 = vmatpush1.bf16.msra.mxu0 0
      %3357 = vmatprep.subr.bf16.mxu0 0
      %3358 = vmatpush1.bf16.msra.mxu0 0
      %3359 = vmatprep.subr.bf16.mxu0 0
      %3360 = vmatpush1.bf16.msra.mxu0 0
      %3361 = vmatprep.subr.bf16.mxu0 0
      %3362 = vmatpush1.bf16.msra.mxu0 0
      %3363 = vmatprep.mubr.bf16.mxu0 0
      %3364 = vmatmul.mubr.bf16.gmra.mrb[0].mxu0 %v3273
      %v3365 = vpop.f32.mrb[0].mxu0
      %v3366 = vadd.f32 0.0, %v3365
      %v3367 = vpop.f32.mrb[0].mxu0
      %v3368 = vpop.f32.mrb[0].mxu0
      %v3369 = vadd.f32 0.0, %v3368
      %v3370 = vpop.f32.mrb[0].mxu0
      %3371 = vmatprep.mubr.bf16.mxu0 0
      %3372 = vmatmul.mubr.bf16.gmra.mrb[0].mxu0 %v3276
      %v3373 = vpop.f32.mrb[0].mxu0
      %v3374 = vadd.f32 0.0, %v3373
      %v3375 = vpop.f32.mrb[0].mxu0
      %v3376 = vpop.f32.mrb[0].mxu0
      %v3377 = vadd.f32 0.0, %v3376
      %v3378 = vpop.f32.mrb[0].mxu0
      %3379 = vdwg.mxu0
      %v3380 = vadd.f32 %v3212, %v3313
      %v3381 = vadd.f32 %v3213, %v3315
      %v3382 = vadd.f32 %v3214, %v3366
      %v3383 = vadd.f32 %v3215, %v3317
      %v3384 = vadd.f32 %v3216, %v3319
      %v3385 = vadd.f32 %v3217, %v3369
      %v3386 = vadd.f32 %v3218, %v3323
      %v3387 = vadd.f32 %v3219, %v3325
      %v3388 = vadd.f32 %v3220, %v3374
      %v3389 = vadd.f32 %v3221, %v3327
      %v3390 = vadd.f32 %v3222, %v3329
      %v3391 = vadd.f32 %v3223, %v3377
      %v3392 = vld [vmem:[%s4 + $0x10] sm:$0xf]
      %v3393 = vld [vmem:[%s4 + $0x24] sm:$0xf]
      %v3394 = vld [vmem:[%s4 + $0x38] sm:$0xf]
      %v3395 = vld [vmem:[%s4 + $0x4c] sm:$0xf]
      %v3400 = vunpack.c.l.b16 %v3392
      %v3401 = vunpack.c.l.b16 %v3393
      %v3402 = vunpack.c.l.b16 %v3394
      %v3403 = vunpack.c.l.b16 %v3395
      %v3404 = vpack.c.b16 %v3401, %v3400
      %v3405 = vpack.c.b16 %v3403, %v3402
      %3406 = vrot.lane.b32.xlu0 %v2055, 86
      %v3407 = vpop.permute.xlu0 %3406
      %3408 = vrot.lane.b32.xlu0 %v2056, 86
      %v3409 = vpop.permute.xlu0 %3408
      %3410 = vrot.lane.b32.xlu0 %v2057, 86
      %v3411 = vpop.permute.xlu0 %3410
      %3412 = vrot.lane.b32.xlu0 %v2058, 86
      %v3413 = vpop.permute.xlu0 %3412
      %3414 = vrot.lane.b32.xlu0 %v2059, 86
      %v3415 = vpop.permute.xlu0 %3414
      %3416 = vrot.lane.b32.xlu0 %v2060, 86
      %v3417 = vpop.permute.xlu0 %3416
      %3418 = vrot.lane.b32.xlu0 %v2061, 86
      %v3419 = vpop.permute.xlu0 %3418
      %3420 = vrot.lane.b32.xlu0 %v2062, 86
      %v3421 = vpop.permute.xlu0 %3420
      %3422 = vrot.lane.b32.xlu0 %v2063, 86
      %v3423 = vpop.permute.xlu0 %3422
      %3424 = vrot.lane.b32.xlu0 %v2064, 86
      %v3425 = vpop.permute.xlu0 %3424
      %3426 = vrot.lane.b32.xlu0 %v2065, 86
      %v3427 = vpop.permute.xlu0 %3426
      %3428 = vrot.lane.b32.xlu0 %v2066, 86
      %v3429 = vpop.permute.xlu0 %3428
      %v3430 = vsel %vm964, %v3407, %v3409
      %v3431 = vsel %vm964, %v3409, %v3411
      %v3432 = vsel %vm964, %v3413, %v3415
      %v3433 = vsel %vm964, %v3415, %v3417
      %v3434 = vsel %vm964, %v3419, %v3421
      %v3435 = vsel %vm964, %v3421, %v3423
      %v3436 = vsel %vm964, %v3425, %v3427
      %v3437 = vsel %vm964, %v3427, %v3429
      %v3451 = vsel %vm2137, %v3404, 0
      %v3454 = vsel %vm2137, %v3405, 0
      %3456 = vmatprep.subr.bf16.mxu0 %v3431
      %3457 = vmatpush1.bf16.msra.mxu0 %v3430
      %3458 = vmatprep.subr.bf16.mxu0 %v3433
      %3459 = vmatpush1.bf16.msra.mxu0 %v3432
      %3460 = vmatprep.subr.bf16.mxu0 %v3435
      %3461 = vmatpush1.bf16.msra.mxu0 %v3434
      %3462 = vmatprep.subr.bf16.mxu0 %v3437
      %3463 = vmatpush1.bf16.msra.mxu0 %v3436
      %3464 = vmatprep.subr.bf16.mxu0 0
      %3465 = vmatpush1.bf16.msra.mxu0 0
      %3466 = vmatprep.subr.bf16.mxu0 0
      %3467 = vmatpush1.bf16.msra.mxu0 0
      %3468 = vmatprep.subr.bf16.mxu0 0
      %3469 = vmatpush1.bf16.msra.mxu0 0
      %3470 = vmatprep.subr.bf16.mxu0 0
      %3471 = vmatpush1.bf16.msra.mxu0 0
      %3472 = vmatprep.subr.bf16.mxu0 0
      %3473 = vmatpush1.bf16.msra.mxu0 0
      %3474 = vmatprep.subr.bf16.mxu0 0
      %3475 = vmatpush1.bf16.msra.mxu0 0
      %3476 = vmatprep.subr.bf16.mxu0 0
      %3477 = vmatpush1.bf16.msra.mxu0 0
      %3478 = vmatprep.subr.bf16.mxu0 0
      %3479 = vmatpush1.bf16.msra.mxu0 0
      %3480 = vmatprep.subr.bf16.mxu0 0
      %3481 = vmatpush1.bf16.msra.mxu0 0
      %3482 = vmatprep.subr.bf16.mxu0 0
      %3483 = vmatpush1.bf16.msra.mxu0 0
      %3484 = vmatprep.subr.bf16.mxu0 0
      %3485 = vmatpush1.bf16.msra.mxu0 0
      %3486 = vmatprep.subr.bf16.mxu0 0
      %3487 = vmatpush1.bf16.msra.mxu0 0
      %3488 = vmatprep.mubr.bf16.mxu0 0
      %3489 = vmatmul.mubr.bf16.gmra.mrb[0].mxu0 %v3451
      %v3490 = vpop.f32.mrb[0].mxu0
      %v3491 = vadd.f32 0.0, %v3490
      %v3492 = vpop.f32.mrb[0].mxu0
      %v3493 = vadd.f32 0.0, %v3492
      %v3494 = vpop.f32.mrb[0].mxu0
      %v3495 = vadd.f32 0.0, %v3494
      %v3496 = vpop.f32.mrb[0].mxu0
      %v3497 = vadd.f32 0.0, %v3496
      %3498 = vmatprep.mubr.bf16.mxu0 0
      %3499 = vmatmul.mubr.bf16.gmra.mrb[0].mxu0 %v3454
      %v3500 = vpop.f32.mrb[0].mxu0
      %v3501 = vadd.f32 0.0, %v3500
      %v3502 = vpop.f32.mrb[0].mxu0
      %v3503 = vadd.f32 0.0, %v3502
      %v3504 = vpop.f32.mrb[0].mxu0
      %v3505 = vadd.f32 0.0, %v3504
      %v3506 = vpop.f32.mrb[0].mxu0
      %v3507 = vadd.f32 0.0, %v3506
      %3508 = vdwg.mxu0
      %3509 = vmatprep.subr.bf16.mxu0 0
      %3510 = vmatpush1.bf16.msra.mxu0 %v3411
      %3511 = vmatprep.subr.bf16.mxu0 0
      %3512 = vmatpush1.bf16.msra.mxu0 %v3417
      %3513 = vmatprep.subr.bf16.mxu0 0
      %3514 = vmatpush1.bf16.msra.mxu0 %v3423
      %3515 = vmatprep.subr.bf16.mxu0 0
      %3516 = vmatpush1.bf16.msra.mxu0 %v3429
      %3517 = vmatprep.subr.bf16.mxu0 0
      %3518 = vmatpush1.bf16.msra.mxu0 0
      %3519 = vmatprep.subr.bf16.mxu0 0
      %3520 = vmatpush1.bf16.msra.mxu0 0
      %3521 = vmatprep.subr.bf16.mxu0 0
      %3522 = vmatpush1.bf16.msra.mxu0 0
      %3523 = vmatprep.subr.bf16.mxu0 0
      %3524 = vmatpush1.bf16.msra.mxu0 0
      %3525 = vmatprep.subr.bf16.mxu0 0
      %3526 = vmatpush1.bf16.msra.mxu0 0
      %3527 = vmatprep.subr.bf16.mxu0 0
      %3528 = vmatpush1.bf16.msra.mxu0 0
      %3529 = vmatprep.subr.bf16.mxu0 0
      %3530 = vmatpush1.bf16.msra.mxu0 0
      %3531 = vmatprep.subr.bf16.mxu0 0
      %3532 = vmatpush1.bf16.msra.mxu0 0
      %3533 = vmatprep.subr.bf16.mxu0 0
      %3534 = vmatpush1.bf16.msra.mxu0 0
      %3535 = vmatprep.subr.bf16.mxu0 0
      %3536 = vmatpush1.bf16.msra.mxu0 0
      %3537 = vmatprep.subr.bf16.mxu0 0
      %3538 = vmatpush1.bf16.msra.mxu0 0
      %3539 = vmatprep.subr.bf16.mxu0 0
      %3540 = vmatpush1.bf16.msra.mxu0 0
      %3541 = vmatprep.mubr.bf16.mxu0 0
      %3542 = vmatmul.mubr.bf16.gmra.mrb[0].mxu0 %v3451
      %v3543 = vpop.f32.mrb[0].mxu0
      %v3544 = vadd.f32 0.0, %v3543
      %v3545 = vpop.f32.mrb[0].mxu0
      %v3546 = vpop.f32.mrb[0].mxu0
      %v3547 = vadd.f32 0.0, %v3546
      %v3548 = vpop.f32.mrb[0].mxu0
      %3549 = vmatprep.mubr.bf16.mxu0 0
      %3550 = vmatmul.mubr.bf16.gmra.mrb[0].mxu0 %v3454
      %v3551 = vpop.f32.mrb[0].mxu0
      %v3552 = vadd.f32 0.0, %v3551
      %v3553 = vpop.f32.mrb[0].mxu0
      %v3554 = vpop.f32.mrb[0].mxu0
      %v3555 = vadd.f32 0.0, %v3554
      %v3556 = vpop.f32.mrb[0].mxu0
      %3557 = vdwg.mxu0
      %v3558 = vadd.f32 %v3380, %v3491
      %v3559 = vadd.f32 %v3381, %v3493
      %v3560 = vadd.f32 %v3382, %v3544
      %v3561 = vadd.f32 %v3383, %v3495
      %v3562 = vadd.f32 %v3384, %v3497
      %v3563 = vadd.f32 %v3385, %v3547
      %v3564 = vadd.f32 %v3386, %v3501
      %v3565 = vadd.f32 %v3387, %v3503
      %v3566 = vadd.f32 %v3388, %v3552
      %v3567 = vadd.f32 %v3389, %v3505
      %v3568 = vadd.f32 %v3390, %v3507
      %v3569 = vadd.f32 %v3391, %v3555
      %v3570 = vld [vmem:[%s5] sm:$0xff]
      %v3571 = vld [vmem:[%s5 + $0x8] sm:$0xff]
      %v3572 = vld [vmem:[%s5 + $0x10] sm:$0xff]
      %v3573 = vld [vmem:[%s5 + $0x18] sm:$0xff]
      %3575 = vset.pattern.permute.xlu0 0
      %3576 = vperm.xlu0 %3575, %v3570
      %v3577 = vpop.permute.xlu0 %3576
      %3580 = vset.pattern.permute.xlu0 0
      %3581 = vperm.xlu0 %3580, %v3571
      %v3582 = vpop.permute.xlu0 %3581
      %3585 = vset.pattern.permute.xlu0 0
      %3586 = vperm.xlu0 %3585, %v3572
      %v3587 = vpop.permute.xlu0 %3586
      %3590 = vset.pattern.permute.xlu0 0
      %3591 = vperm.xlu0 %3590, %v3573
      %v3592 = vpop.permute.xlu0 %3591
      %v3594 = vadd.f32 %v3558, %v3577
      %v3595 = vadd.f32 %v3559, %v3577
      %v3596 = vadd.f32 %v3560, %v3577
      %v3597 = vadd.f32 %v3561, %v3582
      %v3598 = vadd.f32 %v3562, %v3582
      %v3599 = vadd.f32 %v3563, %v3582
      %v3600 = vadd.f32 %v3564, %v3587
      %v3601 = vadd.f32 %v3565, %v3587
      %v3602 = vadd.f32 %v3566, %v3587
      %v3603 = vadd.f32 %v3567, %v3592
      %v3604 = vadd.f32 %v3568, %v3592
      %v3605 = vadd.f32 %v3569, %v3592
      %v3606 = vtanh.pop %v3594
      %v3607 = vtanh.pop %v3595
      %v3608 = vtanh.pop %v3596
      %v3609 = vtanh.pop %v3597
      %v3610 = vtanh.pop %v3598
      %v3611 = vtanh.pop %v3599
      %v3612 = vtanh.pop %v3600
      %v3613 = vtanh.pop %v3601
      %v3614 = vtanh.pop %v3602
      %v3615 = vtanh.pop %v3603
      %v3616 = vtanh.pop %v3604
      %v3617 = vtanh.pop %v3605
      %v3618 = vmul.f32 %v3606, %v1922
      %v3619 = vmul.f32 %v3607, %v1926
      %v3620 = vmul.f32 %v3608, %v1930
      %v3621 = vmul.f32 %v3609, %v1922
      %v3622 = vmul.f32 %v3610, %v1926
      %v3623 = vmul.f32 %v3611, %v1930
      %v3624 = vmul.f32 %v3612, %v1922
      %v3625 = vmul.f32 %v3613, %v1926
      %v3626 = vmul.f32 %v3614, %v1930
      %v3627 = vmul.f32 %v3615, %v1922
      %v3628 = vmul.f32 %v3616, %v1926
      %v3629 = vmul.f32 %v3617, %v1930
      %v3630 = vpack.c.bf16 %v3621, %v3618
      %v3631 = vpack.c.bf16 %v3622, %v3619
      %v3632 = vpack.c.bf16 %v3623, %v3620
      %v3633 = vpack.c.bf16 %v3627, %v3624
      %v3634 = vpack.c.bf16 %v3628, %v3625
      %v3635 = vpack.c.bf16 %v3629, %v3626
      %3636 = vst.msk [vmem:[#allocation4] sm:$0xff] %vm1970, 0
      %3637 = vst.msk [vmem:[#allocation4 + $0x18] sm:$0xff] %vm1970, 0
      %3644 = vrot.lane.b32.xlu0 %v3630, 21
      %v3645 = vpop.permute.xlu0 %3644
      %3646 = vrot.lane.b32.xlu0 %v3631, 21
      %v3647 = vpop.permute.xlu0 %3646
      %3648 = vrot.lane.b32.xlu0 %v3632, 21
      %v3649 = vpop.permute.xlu0 %3648
      %3650 = vrot.lane.b32.xlu0 %v3633, 21
      %v3651 = vpop.permute.xlu0 %3650
      %3652 = vrot.lane.b32.xlu0 %v3634, 21
      %v3653 = vpop.permute.xlu0 %3652
      %3654 = vrot.lane.b32.xlu0 %v3635, 21
      %v3655 = vpop.permute.xlu0 %3654
      %v3656 = vsel %vm2011, %v3645, %v3647
      %v3657 = vsel %vm2011, %v3647, %v3649
      %v3658 = vsel %vm2011, %v3651, %v3653
      %v3659 = vsel %vm2011, %v3653, %v3655
      %3666 = vst.msk [vmem:[#allocation4] sm:$0xff] %vm2032, %v3645
      %3667 = vst [vmem:[#allocation4 + $0x8] sm:$0xff] %v3656
      %3668 = vst.msk [vmem:[#allocation4 + $0x10] sm:$0xff] %vm2035, %v3657
      %3669 = vst.msk [vmem:[#allocation4 + $0x18] sm:$0xff] %vm2032, %v3651
      %3670 = vst [vmem:[#allocation4 + $0x20] sm:$0xff] %v3658
      %3671 = vst.msk [vmem:[#allocation4 + $0x28] sm:$0xff] %vm2035, %v3659
      %3672 = vst.msk [vmem:[#allocation4 + $0x10] sm:$0xff] %vm2046, 0
      %3673 = vst.msk [vmem:[#allocation4 + $0x28] sm:$0xff] %vm2046, 0
      %v3674 = vld [vmem:[%s6] sm:$0xf]
      %v3675 = vld [vmem:[%s6 + $0xc] sm:$0x1]
      %v3676 = vld [vmem:[#allocation4] sm:$0xff]
      %v3677 = vld [vmem:[#allocation4 + $0x8] sm:$0xff]
      %v3678 = vld [vmem:[#allocation4 + $0x10] sm:$0xff]
      %v3679 = vld [vmem:[#allocation4 + $0x18] sm:$0xff]
      %v3680 = vld [vmem:[#allocation4 + $0x20] sm:$0xff]
      %v3681 = vld [vmem:[#allocation4 + $0x28] sm:$0xff]
      %v3684 = vunpack.c.l.b16 %v3674
      %v3685 = vunpack.c.l.b16 %v3675
      %v3686 = vpack.c.b16 %v3685, %v3684
      %3687 = vrot.lane.b32.xlu0 %v3686, 96
      %v3688 = vpop.permute.xlu0 %3687
      %3695 = vrot.lane.b32.xlu0 %v3676, 127
      %v3696 = vpop.permute.xlu0 %3695
      %3697 = vrot.lane.b32.xlu0 %v3677, 127
      %v3698 = vpop.permute.xlu0 %3697
      %3699 = vrot.lane.b32.xlu0 %v3678, 127
      %v3700 = vpop.permute.xlu0 %3699
      %3701 = vrot.lane.b32.xlu0 %v3679, 127
      %v3702 = vpop.permute.xlu0 %3701
      %3703 = vrot.lane.b32.xlu0 %v3680, 127
      %v3704 = vpop.permute.xlu0 %3703
      %3705 = vrot.lane.b32.xlu0 %v3681, 127
      %v3706 = vpop.permute.xlu0 %3705
      %v3707 = vsel %vm374, %v3696, %v3698
      %v3708 = vsel %vm374, %v3698, %v3700
      %v3709 = vsel %vm374, %v3702, %v3704
      %v3710 = vsel %vm374, %v3704, %v3706
      %v3718 = vsel %vm1743, %v3688, 0
      %3720 = vmatprep.subr.bf16.mxu0 %v3708
      %3721 = vmatpush1.bf16.msra.mxu0 %v3707
      %3722 = vmatprep.subr.bf16.mxu0 %v3710
      %3723 = vmatpush1.bf16.msra.mxu0 %v3709
      %3724 = vmatprep.subr.bf16.mxu0 0
      %3725 = vmatpush1.bf16.msra.mxu0 0
      %3726 = vmatprep.subr.bf16.mxu0 0
      %3727 = vmatpush1.bf16.msra.mxu0 0
      %3728 = vmatprep.subr.bf16.mxu0 0
      %3729 = vmatpush1.bf16.msra.mxu0 0
      %3730 = vmatprep.subr.bf16.mxu0 0
      %3731 = vmatpush1.bf16.msra.mxu0 0
      %3732 = vmatprep.subr.bf16.mxu0 0
      %3733 = vmatpush1.bf16.msra.mxu0 0
      %3734 = vmatprep.subr.bf16.mxu0 0
      %3735 = vmatpush1.bf16.msra.mxu0 0
      %3736 = vmatprep.subr.bf16.mxu0 0
      %3737 = vmatpush1.bf16.msra.mxu0 0
      %3738 = vmatprep.subr.bf16.mxu0 0
      %3739 = vmatpush1.bf16.msra.mxu0 0
      %3740 = vmatprep.subr.bf16.mxu0 0
      %3741 = vmatpush1.bf16.msra.mxu0 0
      %3742 = vmatprep.subr.bf16.mxu0 0
      %3743 = vmatpush1.bf16.msra.mxu0 0
      %3744 = vmatprep.subr.bf16.mxu0 0
      %3745 = vmatpush1.bf16.msra.mxu0 0
      %3746 = vmatprep.subr.bf16.mxu0 0
      %3747 = vmatpush1.bf16.msra.mxu0 0
      %3748 = vmatprep.subr.bf16.mxu0 0
      %3749 = vmatpush1.bf16.msra.mxu0 0
      %3750 = vmatprep.subr.bf16.mxu0 0
      %3751 = vmatpush1.bf16.msra.mxu0 0
      %3752 = vmatprep.mubr.bf16.mxu0 0
      %3753 = vmatmul.mubr.bf16.gmra.mrb[0].mxu0 %v3718
      %v3754 = vpop.f32.mrb[0].mxu0
      %v3755 = vadd.f32 0.0, %v3754
      %v3756 = vpop.f32.mrb[0].mxu0
      %v3757 = vadd.f32 0.0, %v3756
      %v3758 = vpop.f32.mrb[0].mxu0
      %v3759 = vadd.f32 0.0, %v3758
      %v3760 = vpop.f32.mrb[0].mxu0
      %v3761 = vadd.f32 0.0, %v3760
      %3762 = vdwg.mxu0
      %3763 = vmatprep.subr.bf16.mxu0 0
      %3764 = vmatpush1.bf16.msra.mxu0 %v3700
      %3765 = vmatprep.subr.bf16.mxu0 0
      %3766 = vmatpush1.bf16.msra.mxu0 %v3706
      %3767 = vmatprep.subr.bf16.mxu0 0
      %3768 = vmatpush1.bf16.msra.mxu0 0
      %3769 = vmatprep.subr.bf16.mxu0 0
      %3770 = vmatpush1.bf16.msra.mxu0 0
      %3771 = vmatprep.subr.bf16.mxu0 0
      %3772 = vmatpush1.bf16.msra.mxu0 0
      %3773 = vmatprep.subr.bf16.mxu0 0
      %3774 = vmatpush1.bf16.msra.mxu0 0
      %3775 = vmatprep.subr.bf16.mxu0 0
      %3776 = vmatpush1.bf16.msra.mxu0 0
      %3777 = vmatprep.subr.bf16.mxu0 0
      %3778 = vmatpush1.bf16.msra.mxu0 0
      %3779 = vmatprep.subr.bf16.mxu0 0
      %3780 = vmatpush1.bf16.msra.mxu0 0
      %3781 = vmatprep.subr.bf16.mxu0 0
      %3782 = vmatpush1.bf16.msra.mxu0 0
      %3783 = vmatprep.subr.bf16.mxu0 0
      %3784 = vmatpush1.bf16.msra.mxu0 0
      %3785 = vmatprep.subr.bf16.mxu0 0
      %3786 = vmatpush1.bf16.msra.mxu0 0
      %3787 = vmatprep.subr.bf16.mxu0 0
      %3788 = vmatpush1.bf16.msra.mxu0 0
      %3789 = vmatprep.subr.bf16.mxu0 0
      %3790 = vmatpush1.bf16.msra.mxu0 0
      %3791 = vmatprep.subr.bf16.mxu0 0
      %3792 = vmatpush1.bf16.msra.mxu0 0
      %3793 = vmatprep.subr.bf16.mxu0 0
      %3794 = vmatpush1.bf16.msra.mxu0 0
      %3795 = vmatprep.mubr.bf16.mxu0 0
      %3796 = vmatmul.mubr.bf16.gmra.mrb[0].mxu0 %v3718
      %v3797 = vpop.f32.mrb[0].mxu0
      %v3798 = vadd.f32 0.0, %v3797
      %v3799 = vpop.f32.mrb[0].mxu0
      %v3800 = vpop.f32.mrb[0].mxu0
      %v3801 = vadd.f32 0.0, %v3800
      %v3802 = vpop.f32.mrb[0].mxu0
      %3803 = vdwg.mxu0
      %v3805 = vsel %vm1743, %v3686, 0
      %3807 = vmatprep.subr.bf16.mxu0 %v3677
      %3808 = vmatpush1.bf16.msra.mxu0 %v3676
      %3809 = vmatprep.subr.bf16.mxu0 %v3680
      %3810 = vmatpush1.bf16.msra.mxu0 %v3679
      %3811 = vmatprep.subr.bf16.mxu0 0
      %3812 = vmatpush1.bf16.msra.mxu0 0
      %3813 = vmatprep.subr.bf16.mxu0 0
      %3814 = vmatpush1.bf16.msra.mxu0 0
      %3815 = vmatprep.subr.bf16.mxu0 0
      %3816 = vmatpush1.bf16.msra.mxu0 0
      %3817 = vmatprep.subr.bf16.mxu0 0
      %3818 = vmatpush1.bf16.msra.mxu0 0
      %3819 = vmatprep.subr.bf16.mxu0 0
      %3820 = vmatpush1.bf16.msra.mxu0 0
      %3821 = vmatprep.subr.bf16.mxu0 0
      %3822 = vmatpush1.bf16.msra.mxu0 0
      %3823 = vmatprep.subr.bf16.mxu0 0
      %3824 = vmatpush1.bf16.msra.mxu0 0
      %3825 = vmatprep.subr.bf16.mxu0 0
      %3826 = vmatpush1.bf16.msra.mxu0 0
      %3827 = vmatprep.subr.bf16.mxu0 0
      %3828 = vmatpush1.bf16.msra.mxu0 0
      %3829 = vmatprep.subr.bf16.mxu0 0
      %3830 = vmatpush1.bf16.msra.mxu0 0
      %3831 = vmatprep.subr.bf16.mxu0 0
      %3832 = vmatpush1.bf16.msra.mxu0 0
      %3833 = vmatprep.subr.bf16.mxu0 0
      %3834 = vmatpush1.bf16.msra.mxu0 0
      %3835 = vmatprep.subr.bf16.mxu0 0
      %3836 = vmatpush1.bf16.msra.mxu0 0
      %3837 = vmatprep.subr.bf16.mxu0 0
      %3838 = vmatpush1.bf16.msra.mxu0 0
      %3839 = vmatprep.mubr.bf16.mxu0 0
      %3840 = vmatmul.mubr.bf16.gmra.mrb[0].mxu0 %v3805
      %v3841 = vpop.f32.mrb[0].mxu0
      %v3842 = vadd.f32 %v3755, %v3841
      %v3843 = vpop.f32.mrb[0].mxu0
      %v3844 = vadd.f32 %v3757, %v3843
      %v3845 = vpop.f32.mrb[0].mxu0
      %v3846 = vadd.f32 %v3759, %v3845
      %v3847 = vpop.f32.mrb[0].mxu0
      %v3848 = vadd.f32 %v3761, %v3847
      %3849 = vdwg.mxu0
      %3850 = vmatprep.subr.bf16.mxu0 0
      %3851 = vmatpush1.bf16.msra.mxu0 %v3678
      %3852 = vmatprep.subr.bf16.mxu0 0
      %3853 = vmatpush1.bf16.msra.mxu0 %v3681
      %3854 = vmatprep.subr.bf16.mxu0 0
      %3855 = vmatpush1.bf16.msra.mxu0 0
      %3856 = vmatprep.subr.bf16.mxu0 0
      %3857 = vmatpush1.bf16.msra.mxu0 0
      %3858 = vmatprep.subr.bf16.mxu0 0
      %3859 = vmatpush1.bf16.msra.mxu0 0
      %3860 = vmatprep.subr.bf16.mxu0 0
      %3861 = vmatpush1.bf16.msra.mxu0 0
      %3862 = vmatprep.subr.bf16.mxu0 0
      %3863 = vmatpush1.bf16.msra.mxu0 0
      %3864 = vmatprep.subr.bf16.mxu0 0
      %3865 = vmatpush1.bf16.msra.mxu0 0
      %3866 = vmatprep.subr.bf16.mxu0 0
      %3867 = vmatpush1.bf16.msra.mxu0 0
      %3868 = vmatprep.subr.bf16.mxu0 0
      %3869 = vmatpush1.bf16.msra.mxu0 0
      %3870 = vmatprep.subr.bf16.mxu0 0
      %3871 = vmatpush1.bf16.msra.mxu0 0
      %3872 = vmatprep.subr.bf16.mxu0 0
      %3873 = vmatpush1.bf16.msra.mxu0 0
      %3874 = vmatprep.subr.bf16.mxu0 0
      %3875 = vmatpush1.bf16.msra.mxu0 0
      %3876 = vmatprep.subr.bf16.mxu0 0
      %3877 = vmatpush1.bf16.msra.mxu0 0
      %3878 = vmatprep.subr.bf16.mxu0 0
      %3879 = vmatpush1.bf16.msra.mxu0 0
      %3880 = vmatprep.subr.bf16.mxu0 0
      %3881 = vmatpush1.bf16.msra.mxu0 0
      %3882 = vmatprep.mubr.bf16.mxu0 0
      %3883 = vmatmul.mubr.bf16.gmra.mrb[0].mxu0 %v3805
      %v3884 = vpop.f32.mrb[0].mxu0
      %v3885 = vadd.f32 %v3798, %v3884
      %v3886 = vpop.f32.mrb[0].mxu0
      %v3887 = vpop.f32.mrb[0].mxu0
      %v3888 = vadd.f32 %v3801, %v3887
      %v3889 = vpop.f32.mrb[0].mxu0
      %3890 = vdwg.mxu0
      %3891 = vrot.lane.b32.xlu0 %v3686, 64
      %v3892 = vpop.permute.xlu0 %3891
      %3893 = vrot.lane.b32.xlu0 %v3676, 126
      %v3894 = vpop.permute.xlu0 %3893
      %3895 = vrot.lane.b32.xlu0 %v3677, 126
      %v3896 = vpop.permute.xlu0 %3895
      %3897 = vrot.lane.b32.xlu0 %v3678, 126
      %v3898 = vpop.permute.xlu0 %3897
      %3899 = vrot.lane.b32.xlu0 %v3679, 126
      %v3900 = vpop.permute.xlu0 %3899
      %3901 = vrot.lane.b32.xlu0 %v3680, 126
      %v3902 = vpop.permute.xlu0 %3901
      %3903 = vrot.lane.b32.xlu0 %v3681, 126
      %v3904 = vpop.permute.xlu0 %3903
      %v3905 = vsel %vm424, %v3894, %v3896
      %v3906 = vsel %vm424, %v3896, %v3898
      %v3907 = vsel %vm424, %v3900, %v3902
      %v3908 = vsel %vm424, %v3902, %v3904
      %v3916 = vsel %vm1743, %v3892, 0
      %3918 = vmatprep.subr.bf16.mxu0 %v3906
      %3919 = vmatpush1.bf16.msra.mxu0 %v3905
      %3920 = vmatprep.subr.bf16.mxu0 %v3908
      %3921 = vmatpush1.bf16.msra.mxu0 %v3907
      %3922 = vmatprep.subr.bf16.mxu0 0
      %3923 = vmatpush1.bf16.msra.mxu0 0
      %3924 = vmatprep.subr.bf16.mxu0 0
      %3925 = vmatpush1.bf16.msra.mxu0 0
      %3926 = vmatprep.subr.bf16.mxu0 0
      %3927 = vmatpush1.bf16.msra.mxu0 0
      %3928 = vmatprep.subr.bf16.mxu0 0
      %3929 = vmatpush1.bf16.msra.mxu0 0
      %3930 = vmatprep.subr.bf16.mxu0 0
      %3931 = vmatpush1.bf16.msra.mxu0 0
      %3932 = vmatprep.subr.bf16.mxu0 0
      %3933 = vmatpush1.bf16.msra.mxu0 0
      %3934 = vmatprep.subr.bf16.mxu0 0
      %3935 = vmatpush1.bf16.msra.mxu0 0
      %3936 = vmatprep.subr.bf16.mxu0 0
      %3937 = vmatpush1.bf16.msra.mxu0 0
      %3938 = vmatprep.subr.bf16.mxu0 0
      %3939 = vmatpush1.bf16.msra.mxu0 0
      %3940 = vmatprep.subr.bf16.mxu0 0
      %3941 = vmatpush1.bf16.msra.mxu0 0
      %3942 = vmatprep.subr.bf16.mxu0 0
      %3943 = vmatpush1.bf16.msra.mxu0 0
      %3944 = vmatprep.subr.bf16.mxu0 0
      %3945 = vmatpush1.bf16.msra.mxu0 0
      %3946 = vmatprep.subr.bf16.mxu0 0
      %3947 = vmatpush1.bf16.msra.mxu0 0
      %3948 = vmatprep.subr.bf16.mxu0 0
      %3949 = vmatpush1.bf16.msra.mxu0 0
      %3950 = vmatprep.mubr.bf16.mxu0 0
      %3951 = vmatmul.mubr.bf16.gmra.mrb[0].mxu0 %v3916
      %v3952 = vpop.f32.mrb[0].mxu0
      %v3953 = vadd.f32 0.0, %v3952
      %v3954 = vpop.f32.mrb[0].mxu0
      %v3955 = vadd.f32 0.0, %v3954
      %v3956 = vpop.f32.mrb[0].mxu0
      %v3957 = vadd.f32 0.0, %v3956
      %v3958 = vpop.f32.mrb[0].mxu0
      %v3959 = vadd.f32 0.0, %v3958
      %3960 = vdwg.mxu0
      %3961 = vmatprep.subr.bf16.mxu0 0
      %3962 = vmatpush1.bf16.msra.mxu0 %v3898
      %3963 = vmatprep.subr.bf16.mxu0 0
      %3964 = vmatpush1.bf16.msra.mxu0 %v3904
      %3965 = vmatprep.subr.bf16.mxu0 0
      %3966 = vmatpush1.bf16.msra.mxu0 0
      %3967 = vmatprep.subr.bf16.mxu0 0
      %3968 = vmatpush1.bf16.msra.mxu0 0
      %3969 = vmatprep.subr.bf16.mxu0 0
      %3970 = vmatpush1.bf16.msra.mxu0 0
      %3971 = vmatprep.subr.bf16.mxu0 0
      %3972 = vmatpush1.bf16.msra.mxu0 0
      %3973 = vmatprep.subr.bf16.mxu0 0
      %3974 = vmatpush1.bf16.msra.mxu0 0
      %3975 = vmatprep.subr.bf16.mxu0 0
      %3976 = vmatpush1.bf16.msra.mxu0 0
      %3977 = vmatprep.subr.bf16.mxu0 0
      %3978 = vmatpush1.bf16.msra.mxu0 0
      %3979 = vmatprep.subr.bf16.mxu0 0
      %3980 = vmatpush1.bf16.msra.mxu0 0
      %3981 = vmatprep.subr.bf16.mxu0 0
      %3982 = vmatpush1.bf16.msra.mxu0 0
      %3983 = vmatprep.subr.bf16.mxu0 0
      %3984 = vmatpush1.bf16.msra.mxu0 0
      %3985 = vmatprep.subr.bf16.mxu0 0
      %3986 = vmatpush1.bf16.msra.mxu0 0
      %3987 = vmatprep.subr.bf16.mxu0 0
      %3988 = vmatpush1.bf16.msra.mxu0 0
      %3989 = vmatprep.subr.bf16.mxu0 0
      %3990 = vmatpush1.bf16.msra.mxu0 0
      %3991 = vmatprep.subr.bf16.mxu0 0
      %3992 = vmatpush1.bf16.msra.mxu0 0
      %3993 = vmatprep.mubr.bf16.mxu0 0
      %3994 = vmatmul.mubr.bf16.gmra.mrb[0].mxu0 %v3916
      %v3995 = vpop.f32.mrb[0].mxu0
      %v3996 = vadd.f32 0.0, %v3995
      %v3997 = vpop.f32.mrb[0].mxu0
      %v3998 = vpop.f32.mrb[0].mxu0
      %v3999 = vadd.f32 0.0, %v3998
      %v4000 = vpop.f32.mrb[0].mxu0
      %4001 = vdwg.mxu0
      %v4002 = vadd.f32 %v3842, %v3953
      %v4003 = vadd.f32 %v3844, %v3955
      %v4004 = vadd.f32 %v3885, %v3996
      %v4005 = vadd.f32 %v3846, %v3957
      %v4006 = vadd.f32 %v3848, %v3959
      %v4007 = vadd.f32 %v3888, %v3999
      %4008 = vrot.lane.b32.xlu0 %v3686, 32
      %v4009 = vpop.permute.xlu0 %4008
      %4010 = vrot.lane.b32.xlu0 %v3676, 108
      %v4011 = vpop.permute.xlu0 %4010
      %4012 = vrot.lane.b32.xlu0 %v3677, 108
      %v4013 = vpop.permute.xlu0 %4012
      %4014 = vrot.lane.b32.xlu0 %v3678, 108
      %v4015 = vpop.permute.xlu0 %4014
      %4016 = vrot.lane.b32.xlu0 %v3679, 108
      %v4017 = vpop.permute.xlu0 %4016
      %4018 = vrot.lane.b32.xlu0 %v3680, 108
      %v4019 = vpop.permute.xlu0 %4018
      %4020 = vrot.lane.b32.xlu0 %v3681, 108
      %v4021 = vpop.permute.xlu0 %4020
      %v4022 = vsel %vm590, %v4011, %v4013
      %v4023 = vsel %vm590, %v4013, %v4015
      %v4024 = vsel %vm590, %v4017, %v4019
      %v4025 = vsel %vm590, %v4019, %v4021
      %v4033 = vsel %vm1743, %v4009, 0
      %4035 = vmatprep.subr.bf16.mxu0 %v4023
      %4036 = vmatpush1.bf16.msra.mxu0 %v4022
      %4037 = vmatprep.subr.bf16.mxu0 %v4025
      %4038 = vmatpush1.bf16.msra.mxu0 %v4024
      %4039 = vmatprep.subr.bf16.mxu0 0
      %4040 = vmatpush1.bf16.msra.mxu0 0
      %4041 = vmatprep.subr.bf16.mxu0 0
      %4042 = vmatpush1.bf16.msra.mxu0 0
      %4043 = vmatprep.subr.bf16.mxu0 0
      %4044 = vmatpush1.bf16.msra.mxu0 0
      %4045 = vmatprep.subr.bf16.mxu0 0
      %4046 = vmatpush1.bf16.msra.mxu0 0
      %4047 = vmatprep.subr.bf16.mxu0 0
      %4048 = vmatpush1.bf16.msra.mxu0 0
      %4049 = vmatprep.subr.bf16.mxu0 0
      %4050 = vmatpush1.bf16.msra.mxu0 0
      %4051 = vmatprep.subr.bf16.mxu0 0
      %4052 = vmatpush1.bf16.msra.mxu0 0
      %4053 = vmatprep.subr.bf16.mxu0 0
      %4054 = vmatpush1.bf16.msra.mxu0 0
      %4055 = vmatprep.subr.bf16.mxu0 0
      %4056 = vmatpush1.bf16.msra.mxu0 0
      %4057 = vmatprep.subr.bf16.mxu0 0
      %4058 = vmatpush1.bf16.msra.mxu0 0
      %4059 = vmatprep.subr.bf16.mxu0 0
      %4060 = vmatpush1.bf16.msra.mxu0 0
      %4061 = vmatprep.subr.bf16.mxu0 0
      %4062 = vmatpush1.bf16.msra.mxu0 0
      %4063 = vmatprep.subr.bf16.mxu0 0
      %4064 = vmatpush1.bf16.msra.mxu0 0
      %4065 = vmatprep.subr.bf16.mxu0 0
      %4066 = vmatpush1.bf16.msra.mxu0 0
      %4067 = vmatprep.mubr.bf16.mxu0 0
      %4068 = vmatmul.mubr.bf16.gmra.mrb[0].mxu0 %v4033
      %v4069 = vpop.f32.mrb[0].mxu0
      %v4070 = vadd.f32 0.0, %v4069
      %v4071 = vpop.f32.mrb[0].mxu0
      %v4072 = vadd.f32 0.0, %v4071
      %v4073 = vpop.f32.mrb[0].mxu0
      %v4074 = vadd.f32 0.0, %v4073
      %v4075 = vpop.f32.mrb[0].mxu0
      %v4076 = vadd.f32 0.0, %v4075
      %4077 = vdwg.mxu0
      %4078 = vmatprep.subr.bf16.mxu0 0
      %4079 = vmatpush1.bf16.msra.mxu0 %v4015
      %4080 = vmatprep.subr.bf16.mxu0 0
      %4081 = vmatpush1.bf16.msra.mxu0 %v4021
      %4082 = vmatprep.subr.bf16.mxu0 0
      %4083 = vmatpush1.bf16.msra.mxu0 0
      %4084 = vmatprep.subr.bf16.mxu0 0
      %4085 = vmatpush1.bf16.msra.mxu0 0
      %4086 = vmatprep.subr.bf16.mxu0 0
      %4087 = vmatpush1.bf16.msra.mxu0 0
      %4088 = vmatprep.subr.bf16.mxu0 0
      %4089 = vmatpush1.bf16.msra.mxu0 0
      %4090 = vmatprep.subr.bf16.mxu0 0
      %4091 = vmatpush1.bf16.msra.mxu0 0
      %4092 = vmatprep.subr.bf16.mxu0 0
      %4093 = vmatpush1.bf16.msra.mxu0 0
      %4094 = vmatprep.subr.bf16.mxu0 0
      %4095 = vmatpush1.bf16.msra.mxu0 0
      %4096 = vmatprep.subr.bf16.mxu0 0
      %4097 = vmatpush1.bf16.msra.mxu0 0
      %4098 = vmatprep.subr.bf16.mxu0 0
      %4099 = vmatpush1.bf16.msra.mxu0 0
      %4100 = vmatprep.subr.bf16.mxu0 0
      %4101 = vmatpush1.bf16.msra.mxu0 0
      %4102 = vmatprep.subr.bf16.mxu0 0
      %4103 = vmatpush1.bf16.msra.mxu0 0
      %4104 = vmatprep.subr.bf16.mxu0 0
      %4105 = vmatpush1.bf16.msra.mxu0 0
      %4106 = vmatprep.subr.bf16.mxu0 0
      %4107 = vmatpush1.bf16.msra.mxu0 0
      %4108 = vmatprep.subr.bf16.mxu0 0
      %4109 = vmatpush1.bf16.msra.mxu0 0
      %4110 = vmatprep.mubr.bf16.mxu0 0
      %4111 = vmatmul.mubr.bf16.gmra.mrb[0].mxu0 %v4033
      %v4112 = vpop.f32.mrb[0].mxu0
      %v4113 = vadd.f32 0.0, %v4112
      %v4114 = vpop.f32.mrb[0].mxu0
      %v4115 = vpop.f32.mrb[0].mxu0
      %v4116 = vadd.f32 0.0, %v4115
      %v4117 = vpop.f32.mrb[0].mxu0
      %4118 = vdwg.mxu0
      %v4119 = vadd.f32 %v4002, %v4070
      %v4120 = vadd.f32 %v4003, %v4072
      %v4121 = vadd.f32 %v4004, %v4113
      %v4122 = vadd.f32 %v4005, %v4074
      %v4123 = vadd.f32 %v4006, %v4076
      %v4124 = vadd.f32 %v4007, %v4116
      %v4125 = vld [vmem:[%s6 + $0x4] sm:$0xf]
      %v4126 = vld [vmem:[%s6 + $0x10] sm:$0x1]
      %v4129 = vunpack.c.l.b16 %v4125
      %v4130 = vunpack.c.l.b16 %v4126
      %v4131 = vpack.c.b16 %v4130, %v4129
      %4132 = vrot.lane.b32.xlu0 %v3676, 107
      %v4133 = vpop.permute.xlu0 %4132
      %4134 = vrot.lane.b32.xlu0 %v3677, 107
      %v4135 = vpop.permute.xlu0 %4134
      %4136 = vrot.lane.b32.xlu0 %v3678, 107
      %v4137 = vpop.permute.xlu0 %4136
      %4138 = vrot.lane.b32.xlu0 %v3679, 107
      %v4139 = vpop.permute.xlu0 %4138
      %4140 = vrot.lane.b32.xlu0 %v3680, 107
      %v4141 = vpop.permute.xlu0 %4140
      %4142 = vrot.lane.b32.xlu0 %v3681, 107
      %v4143 = vpop.permute.xlu0 %4142
      %v4144 = vsel %vm640, %v4133, %v4135
      %v4145 = vsel %vm640, %v4135, %v4137
      %v4146 = vsel %vm640, %v4139, %v4141
      %v4147 = vsel %vm640, %v4141, %v4143
      %v4155 = vsel %vm1743, %v4131, 0
      %4157 = vmatprep.subr.bf16.mxu0 %v4145
      %4158 = vmatpush1.bf16.msra.mxu0 %v4144
      %4159 = vmatprep.subr.bf16.mxu0 %v4147
      %4160 = vmatpush1.bf16.msra.mxu0 %v4146
      %4161 = vmatprep.subr.bf16.mxu0 0
      %4162 = vmatpush1.bf16.msra.mxu0 0
      %4163 = vmatprep.subr.bf16.mxu0 0
      %4164 = vmatpush1.bf16.msra.mxu0 0
      %4165 = vmatprep.subr.bf16.mxu0 0
      %4166 = vmatpush1.bf16.msra.mxu0 0
      %4167 = vmatprep.subr.bf16.mxu0 0
      %4168 = vmatpush1.bf16.msra.mxu0 0
      %4169 = vmatprep.subr.bf16.mxu0 0
      %4170 = vmatpush1.bf16.msra.mxu0 0
      %4171 = vmatprep.subr.bf16.mxu0 0
      %4172 = vmatpush1.bf16.msra.mxu0 0
      %4173 = vmatprep.subr.bf16.mxu0 0
      %4174 = vmatpush1.bf16.msra.mxu0 0
      %4175 = vmatprep.subr.bf16.mxu0 0
      %4176 = vmatpush1.bf16.msra.mxu0 0
      %4177 = vmatprep.subr.bf16.mxu0 0
      %4178 = vmatpush1.bf16.msra.mxu0 0
      %4179 = vmatprep.subr.bf16.mxu0 0
      %4180 = vmatpush1.bf16.msra.mxu0 0
      %4181 = vmatprep.subr.bf16.mxu0 0
      %4182 = vmatpush1.bf16.msra.mxu0 0
      %4183 = vmatprep.subr.bf16.mxu0 0
      %4184 = vmatpush1.bf16.msra.mxu0 0
      %4185 = vmatprep.subr.bf16.mxu0 0
      %4186 = vmatpush1.bf16.msra.mxu0 0
      %4187 = vmatprep.subr.bf16.mxu0 0
      %4188 = vmatpush1.bf16.msra.mxu0 0
      %4189 = vmatprep.mubr.bf16.mxu0 0
      %4190 = vmatmul.mubr.bf16.gmra.mrb[0].mxu0 %v4155
      %v4191 = vpop.f32.mrb[0].mxu0
      %v4192 = vadd.f32 0.0, %v4191
      %v4193 = vpop.f32.mrb[0].mxu0
      %v4194 = vadd.f32 0.0, %v4193
      %v4195 = vpop.f32.mrb[0].mxu0
      %v4196 = vadd.f32 0.0, %v4195
      %v4197 = vpop.f32.mrb[0].mxu0
      %v4198 = vadd.f32 0.0, %v4197
      %4199 = vdwg.mxu0
      %4200 = vmatprep.subr.bf16.mxu0 0
      %4201 = vmatpush1.bf16.msra.mxu0 %v4137
      %4202 = vmatprep.subr.bf16.mxu0 0
      %4203 = vmatpush1.bf16.msra.mxu0 %v4143
      %4204 = vmatprep.subr.bf16.mxu0 0
      %4205 = vmatpush1.bf16.msra.mxu0 0
      %4206 = vmatprep.subr.bf16.mxu0 0
      %4207 = vmatpush1.bf16.msra.mxu0 0
      %4208 = vmatprep.subr.bf16.mxu0 0
      %4209 = vmatpush1.bf16.msra.mxu0 0
      %4210 = vmatprep.subr.bf16.mxu0 0
      %4211 = vmatpush1.bf16.msra.mxu0 0
      %4212 = vmatprep.subr.bf16.mxu0 0
      %4213 = vmatpush1.bf16.msra.mxu0 0
      %4214 = vmatprep.subr.bf16.mxu0 0
      %4215 = vmatpush1.bf16.msra.mxu0 0
      %4216 = vmatprep.subr.bf16.mxu0 0
      %4217 = vmatpush1.bf16.msra.mxu0 0
      %4218 = vmatprep.subr.bf16.mxu0 0
      %4219 = vmatpush1.bf16.msra.mxu0 0
      %4220 = vmatprep.subr.bf16.mxu0 0
      %4221 = vmatpush1.bf16.msra.mxu0 0
      %4222 = vmatprep.subr.bf16.mxu0 0
      %4223 = vmatpush1.bf16.msra.mxu0 0
      %4224 = vmatprep.subr.bf16.mxu0 0
      %4225 = vmatpush1.bf16.msra.mxu0 0
      %4226 = vmatprep.subr.bf16.mxu0 0
      %4227 = vmatpush1.bf16.msra.mxu0 0
      %4228 = vmatprep.subr.bf16.mxu0 0
      %4229 = vmatpush1.bf16.msra.mxu0 0
      %4230 = vmatprep.subr.bf16.mxu0 0
      %4231 = vmatpush1.bf16.msra.mxu0 0
      %4232 = vmatprep.mubr.bf16.mxu0 0
      %4233 = vmatmul.mubr.bf16.gmra.mrb[0].mxu0 %v4155
      %v4234 = vpop.f32.mrb[0].mxu0
      %v4235 = vadd.f32 0.0, %v4234
      %v4236 = vpop.f32.mrb[0].mxu0
      %v4237 = vpop.f32.mrb[0].mxu0
      %v4238 = vadd.f32 0.0, %v4237
      %v4239 = vpop.f32.mrb[0].mxu0
      %4240 = vdwg.mxu0
      %v4241 = vadd.f32 %v4119, %v4192
      %v4242 = vadd.f32 %v4120, %v4194
      %v4243 = vadd.f32 %v4121, %v4235
      %v4244 = vadd.f32 %v4122, %v4196
      %v4245 = vadd.f32 %v4123, %v4198
      %v4246 = vadd.f32 %v4124, %v4238
      %4247 = vrot.lane.b32.xlu0 %v4131, 96
      %v4248 = vpop.permute.xlu0 %4247
      %4249 = vrot.lane.b32.xlu0 %v3676, 106
      %v4250 = vpop.permute.xlu0 %4249
      %4251 = vrot.lane.b32.xlu0 %v3677, 106
      %v4252 = vpop.permute.xlu0 %4251
      %4253 = vrot.lane.b32.xlu0 %v3678, 106
      %v4254 = vpop.permute.xlu0 %4253
      %4255 = vrot.lane.b32.xlu0 %v3679, 106
      %v4256 = vpop.permute.xlu0 %4255
      %4257 = vrot.lane.b32.xlu0 %v3680, 106
      %v4258 = vpop.permute.xlu0 %4257
      %4259 = vrot.lane.b32.xlu0 %v3681, 106
      %v4260 = vpop.permute.xlu0 %4259
      %v4261 = vsel %vm698, %v4250, %v4252
      %v4262 = vsel %vm698, %v4252, %v4254
      %v4263 = vsel %vm698, %v4256, %v4258
      %v4264 = vsel %vm698, %v4258, %v4260
      %v4272 = vsel %vm1743, %v4248, 0
      %4274 = vmatprep.subr.bf16.mxu0 %v4262
      %4275 = vmatpush1.bf16.msra.mxu0 %v4261
      %4276 = vmatprep.subr.bf16.mxu0 %v4264
      %4277 = vmatpush1.bf16.msra.mxu0 %v4263
      %4278 = vmatprep.subr.bf16.mxu0 0
      %4279 = vmatpush1.bf16.msra.mxu0 0
      %4280 = vmatprep.subr.bf16.mxu0 0
      %4281 = vmatpush1.bf16.msra.mxu0 0
      %4282 = vmatprep.subr.bf16.mxu0 0
      %4283 = vmatpush1.bf16.msra.mxu0 0
      %4284 = vmatprep.subr.bf16.mxu0 0
      %4285 = vmatpush1.bf16.msra.mxu0 0
      %4286 = vmatprep.subr.bf16.mxu0 0
      %4287 = vmatpush1.bf16.msra.mxu0 0
      %4288 = vmatprep.subr.bf16.mxu0 0
      %4289 = vmatpush1.bf16.msra.mxu0 0
      %4290 = vmatprep.subr.bf16.mxu0 0
      %4291 = vmatpush1.bf16.msra.mxu0 0
      %4292 = vmatprep.subr.bf16.mxu0 0
      %4293 = vmatpush1.bf16.msra.mxu0 0
      %4294 = vmatprep.subr.bf16.mxu0 0
      %4295 = vmatpush1.bf16.msra.mxu0 0
      %4296 = vmatprep.subr.bf16.mxu0 0
      %4297 = vmatpush1.bf16.msra.mxu0 0
      %4298 = vmatprep.subr.bf16.mxu0 0
      %4299 = vmatpush1.bf16.msra.mxu0 0
      %4300 = vmatprep.subr.bf16.mxu0 0
      %4301 = vmatpush1.bf16.msra.mxu0 0
      %4302 = vmatprep.subr.bf16.mxu0 0
      %4303 = vmatpush1.bf16.msra.mxu0 0
      %4304 = vmatprep.subr.bf16.mxu0 0
      %4305 = vmatpush1.bf16.msra.mxu0 0
      %4306 = vmatprep.mubr.bf16.mxu0 0
      %4307 = vmatmul.mubr.bf16.gmra.mrb[0].mxu0 %v4272
      %v4308 = vpop.f32.mrb[0].mxu0
      %v4309 = vadd.f32 0.0, %v4308
      %v4310 = vpop.f32.mrb[0].mxu0
      %v4311 = vadd.f32 0.0, %v4310
      %v4312 = vpop.f32.mrb[0].mxu0
      %v4313 = vadd.f32 0.0, %v4312
      %v4314 = vpop.f32.mrb[0].mxu0
      %v4315 = vadd.f32 0.0, %v4314
      %4316 = vdwg.mxu0
      %4317 = vmatprep.subr.bf16.mxu0 0
      %4318 = vmatpush1.bf16.msra.mxu0 %v4254
      %4319 = vmatprep.subr.bf16.mxu0 0
      %4320 = vmatpush1.bf16.msra.mxu0 %v4260
      %4321 = vmatprep.subr.bf16.mxu0 0
      %4322 = vmatpush1.bf16.msra.mxu0 0
      %4323 = vmatprep.subr.bf16.mxu0 0
      %4324 = vmatpush1.bf16.msra.mxu0 0
      %4325 = vmatprep.subr.bf16.mxu0 0
      %4326 = vmatpush1.bf16.msra.mxu0 0
      %4327 = vmatprep.subr.bf16.mxu0 0
      %4328 = vmatpush1.bf16.msra.mxu0 0
      %4329 = vmatprep.subr.bf16.mxu0 0
      %4330 = vmatpush1.bf16.msra.mxu0 0
      %4331 = vmatprep.subr.bf16.mxu0 0
      %4332 = vmatpush1.bf16.msra.mxu0 0
      %4333 = vmatprep.subr.bf16.mxu0 0
      %4334 = vmatpush1.bf16.msra.mxu0 0
      %4335 = vmatprep.subr.bf16.mxu0 0
      %4336 = vmatpush1.bf16.msra.mxu0 0
      %4337 = vmatprep.subr.bf16.mxu0 0
      %4338 = vmatpush1.bf16.msra.mxu0 0
      %4339 = vmatprep.subr.bf16.mxu0 0
      %4340 = vmatpush1.bf16.msra.mxu0 0
      %4341 = vmatprep.subr.bf16.mxu0 0
      %4342 = vmatpush1.bf16.msra.mxu0 0
      %4343 = vmatprep.subr.bf16.mxu0 0
      %4344 = vmatpush1.bf16.msra.mxu0 0
      %4345 = vmatprep.subr.bf16.mxu0 0
      %4346 = vmatpush1.bf16.msra.mxu0 0
      %4347 = vmatprep.subr.bf16.mxu0 0
      %4348 = vmatpush1.bf16.msra.mxu0 0
      %4349 = vmatprep.mubr.bf16.mxu0 0
      %4350 = vmatmul.mubr.bf16.gmra.mrb[0].mxu0 %v4272
      %v4351 = vpop.f32.mrb[0].mxu0
      %v4352 = vadd.f32 0.0, %v4351
      %v4353 = vpop.f32.mrb[0].mxu0
      %v4354 = vpop.f32.mrb[0].mxu0
      %v4355 = vadd.f32 0.0, %v4354
      %v4356 = vpop.f32.mrb[0].mxu0
      %4357 = vdwg.mxu0
      %v4358 = vadd.f32 %v4241, %v4309
      %v4359 = vadd.f32 %v4242, %v4311
      %v4360 = vadd.f32 %v4243, %v4352
      %v4361 = vadd.f32 %v4244, %v4313
      %v4362 = vadd.f32 %v4245, %v4315
      %v4363 = vadd.f32 %v4246, %v4355
      %4364 = vrot.lane.b32.xlu0 %v4131, 64
      %v4365 = vpop.permute.xlu0 %4364
      %4366 = vrot.lane.b32.xlu0 %v3676, 88
      %v4367 = vpop.permute.xlu0 %4366
      %4368 = vrot.lane.b32.xlu0 %v3677, 88
      %v4369 = vpop.permute.xlu0 %4368
      %4370 = vrot.lane.b32.xlu0 %v3678, 88
      %v4371 = vpop.permute.xlu0 %4370
      %4372 = vrot.lane.b32.xlu0 %v3679, 88
      %v4373 = vpop.permute.xlu0 %4372
      %4374 = vrot.lane.b32.xlu0 %v3680, 88
      %v4375 = vpop.permute.xlu0 %4374
      %4376 = vrot.lane.b32.xlu0 %v3681, 88
      %v4377 = vpop.permute.xlu0 %4376
      %v4378 = vsel %vm856, %v4367, %v4369
      %v4379 = vsel %vm856, %v4369, %v4371
      %v4380 = vsel %vm856, %v4373, %v4375
      %v4381 = vsel %vm856, %v4375, %v4377
      %v4389 = vsel %vm1743, %v4365, 0
      %4391 = vmatprep.subr.bf16.mxu0 %v4379
      %4392 = vmatpush1.bf16.msra.mxu0 %v4378
      %4393 = vmatprep.subr.bf16.mxu0 %v4381
      %4394 = vmatpush1.bf16.msra.mxu0 %v4380
      %4395 = vmatprep.subr.bf16.mxu0 0
      %4396 = vmatpush1.bf16.msra.mxu0 0
      %4397 = vmatprep.subr.bf16.mxu0 0
      %4398 = vmatpush1.bf16.msra.mxu0 0
      %4399 = vmatprep.subr.bf16.mxu0 0
      %4400 = vmatpush1.bf16.msra.mxu0 0
      %4401 = vmatprep.subr.bf16.mxu0 0
      %4402 = vmatpush1.bf16.msra.mxu0 0
      %4403 = vmatprep.subr.bf16.mxu0 0
      %4404 = vmatpush1.bf16.msra.mxu0 0
      %4405 = vmatprep.subr.bf16.mxu0 0
      %4406 = vmatpush1.bf16.msra.mxu0 0
      %4407 = vmatprep.subr.bf16.mxu0 0
      %4408 = vmatpush1.bf16.msra.mxu0 0
      %4409 = vmatprep.subr.bf16.mxu0 0
      %4410 = vmatpush1.bf16.msra.mxu0 0
      %4411 = vmatprep.subr.bf16.mxu0 0
      %4412 = vmatpush1.bf16.msra.mxu0 0
      %4413 = vmatprep.subr.bf16.mxu0 0
      %4414 = vmatpush1.bf16.msra.mxu0 0
      %4415 = vmatprep.subr.bf16.mxu0 0
      %4416 = vmatpush1.bf16.msra.mxu0 0
      %4417 = vmatprep.subr.bf16.mxu0 0
      %4418 = vmatpush1.bf16.msra.mxu0 0
      %4419 = vmatprep.subr.bf16.mxu0 0
      %4420 = vmatpush1.bf16.msra.mxu0 0
      %4421 = vmatprep.subr.bf16.mxu0 0
      %4422 = vmatpush1.bf16.msra.mxu0 0
      %4423 = vmatprep.mubr.bf16.mxu0 0
      %4424 = vmatmul.mubr.bf16.gmra.mrb[0].mxu0 %v4389
      %v4425 = vpop.f32.mrb[0].mxu0
      %v4426 = vadd.f32 0.0, %v4425
      %v4427 = vpop.f32.mrb[0].mxu0
      %v4428 = vadd.f32 0.0, %v4427
      %v4429 = vpop.f32.mrb[0].mxu0
      %v4430 = vadd.f32 0.0, %v4429
      %v4431 = vpop.f32.mrb[0].mxu0
      %v4432 = vadd.f32 0.0, %v4431
      %4433 = vdwg.mxu0
      %4434 = vmatprep.subr.bf16.mxu0 0
      %4435 = vmatpush1.bf16.msra.mxu0 %v4371
      %4436 = vmatprep.subr.bf16.mxu0 0
      %4437 = vmatpush1.bf16.msra.mxu0 %v4377
      %4438 = vmatprep.subr.bf16.mxu0 0
      %4439 = vmatpush1.bf16.msra.mxu0 0
      %4440 = vmatprep.subr.bf16.mxu0 0
      %4441 = vmatpush1.bf16.msra.mxu0 0
      %4442 = vmatprep.subr.bf16.mxu0 0
      %4443 = vmatpush1.bf16.msra.mxu0 0
      %4444 = vmatprep.subr.bf16.mxu0 0
      %4445 = vmatpush1.bf16.msra.mxu0 0
      %4446 = vmatprep.subr.bf16.mxu0 0
      %4447 = vmatpush1.bf16.msra.mxu0 0
      %4448 = vmatprep.subr.bf16.mxu0 0
      %4449 = vmatpush1.bf16.msra.mxu0 0
      %4450 = vmatprep.subr.bf16.mxu0 0
      %4451 = vmatpush1.bf16.msra.mxu0 0
      %4452 = vmatprep.subr.bf16.mxu0 0
      %4453 = vmatpush1.bf16.msra.mxu0 0
      %4454 = vmatprep.subr.bf16.mxu0 0
      %4455 = vmatpush1.bf16.msra.mxu0 0
      %4456 = vmatprep.subr.bf16.mxu0 0
      %4457 = vmatpush1.bf16.msra.mxu0 0
      %4458 = vmatprep.subr.bf16.mxu0 0
      %4459 = vmatpush1.bf16.msra.mxu0 0
      %4460 = vmatprep.subr.bf16.mxu0 0
      %4461 = vmatpush1.bf16.msra.mxu0 0
      %4462 = vmatprep.subr.bf16.mxu0 0
      %4463 = vmatpush1.bf16.msra.mxu0 0
      %4464 = vmatprep.subr.bf16.mxu0 0
      %4465 = vmatpush1.bf16.msra.mxu0 0
      %4466 = vmatprep.mubr.bf16.mxu0 0
      %4467 = vmatmul.mubr.bf16.gmra.mrb[0].mxu0 %v4389
      %v4468 = vpop.f32.mrb[0].mxu0
      %v4469 = vadd.f32 0.0, %v4468
      %v4470 = vpop.f32.mrb[0].mxu0
      %v4471 = vpop.f32.mrb[0].mxu0
      %v4472 = vadd.f32 0.0, %v4471
      %v4473 = vpop.f32.mrb[0].mxu0
      %4474 = vdwg.mxu0
      %v4475 = vadd.f32 %v4358, %v4426
      %v4476 = vadd.f32 %v4359, %v4428
      %v4477 = vadd.f32 %v4360, %v4469
      %v4478 = vadd.f32 %v4361, %v4430
      %v4479 = vadd.f32 %v4362, %v4432
      %v4480 = vadd.f32 %v4363, %v4472
      %4481 = vrot.lane.b32.xlu0 %v4131, 32
      %v4482 = vpop.permute.xlu0 %4481
      %4483 = vrot.lane.b32.xlu0 %v3676, 87
      %v4484 = vpop.permute.xlu0 %4483
      %4485 = vrot.lane.b32.xlu0 %v3677, 87
      %v4486 = vpop.permute.xlu0 %4485
      %4487 = vrot.lane.b32.xlu0 %v3678, 87
      %v4488 = vpop.permute.xlu0 %4487
      %4489 = vrot.lane.b32.xlu0 %v3679, 87
      %v4490 = vpop.permute.xlu0 %4489
      %4491 = vrot.lane.b32.xlu0 %v3680, 87
      %v4492 = vpop.permute.xlu0 %4491
      %4493 = vrot.lane.b32.xlu0 %v3681, 87
      %v4494 = vpop.permute.xlu0 %4493
      %v4495 = vsel %vm914, %v4484, %v4486
      %v4496 = vsel %vm914, %v4486, %v4488
      %v4497 = vsel %vm914, %v4490, %v4492
      %v4498 = vsel %vm914, %v4492, %v4494
      %v4506 = vsel %vm1743, %v4482, 0
      %4508 = vmatprep.subr.bf16.mxu0 %v4496
      %4509 = vmatpush1.bf16.msra.mxu0 %v4495
      %4510 = vmatprep.subr.bf16.mxu0 %v4498
      %4511 = vmatpush1.bf16.msra.mxu0 %v4497
      %4512 = vmatprep.subr.bf16.mxu0 0
      %4513 = vmatpush1.bf16.msra.mxu0 0
      %4514 = vmatprep.subr.bf16.mxu0 0
      %4515 = vmatpush1.bf16.msra.mxu0 0
      %4516 = vmatprep.subr.bf16.mxu0 0
      %4517 = vmatpush1.bf16.msra.mxu0 0
      %4518 = vmatprep.subr.bf16.mxu0 0
      %4519 = vmatpush1.bf16.msra.mxu0 0
      %4520 = vmatprep.subr.bf16.mxu0 0
      %4521 = vmatpush1.bf16.msra.mxu0 0
      %4522 = vmatprep.subr.bf16.mxu0 0
      %4523 = vmatpush1.bf16.msra.mxu0 0
      %4524 = vmatprep.subr.bf16.mxu0 0
      %4525 = vmatpush1.bf16.msra.mxu0 0
      %4526 = vmatprep.subr.bf16.mxu0 0
      %4527 = vmatpush1.bf16.msra.mxu0 0
      %4528 = vmatprep.subr.bf16.mxu0 0
      %4529 = vmatpush1.bf16.msra.mxu0 0
      %4530 = vmatprep.subr.bf16.mxu0 0
      %4531 = vmatpush1.bf16.msra.mxu0 0
      %4532 = vmatprep.subr.bf16.mxu0 0
      %4533 = vmatpush1.bf16.msra.mxu0 0
      %4534 = vmatprep.subr.bf16.mxu0 0
      %4535 = vmatpush1.bf16.msra.mxu0 0
      %4536 = vmatprep.subr.bf16.mxu0 0
      %4537 = vmatpush1.bf16.msra.mxu0 0
      %4538 = vmatprep.subr.bf16.mxu0 0
      %4539 = vmatpush1.bf16.msra.mxu0 0
      %4540 = vmatprep.mubr.bf16.mxu0 0
      %4541 = vmatmul.mubr.bf16.gmra.mrb[0].mxu0 %v4506
      %v4542 = vpop.f32.mrb[0].mxu0
      %v4543 = vadd.f32 0.0, %v4542
      %v4544 = vpop.f32.mrb[0].mxu0
      %v4545 = vadd.f32 0.0, %v4544
      %v4546 = vpop.f32.mrb[0].mxu0
      %v4547 = vadd.f32 0.0, %v4546
      %v4548 = vpop.f32.mrb[0].mxu0
      %v4549 = vadd.f32 0.0, %v4548
      %4550 = vdwg.mxu0
      %4551 = vmatprep.subr.bf16.mxu0 0
      %4552 = vmatpush1.bf16.msra.mxu0 %v4488
      %4553 = vmatprep.subr.bf16.mxu0 0
      %4554 = vmatpush1.bf16.msra.mxu0 %v4494
      %4555 = vmatprep.subr.bf16.mxu0 0
      %4556 = vmatpush1.bf16.msra.mxu0 0
      %4557 = vmatprep.subr.bf16.mxu0 0
      %4558 = vmatpush1.bf16.msra.mxu0 0
      %4559 = vmatprep.subr.bf16.mxu0 0
      %4560 = vmatpush1.bf16.msra.mxu0 0
      %4561 = vmatprep.subr.bf16.mxu0 0
      %4562 = vmatpush1.bf16.msra.mxu0 0
      %4563 = vmatprep.subr.bf16.mxu0 0
      %4564 = vmatpush1.bf16.msra.mxu0 0
      %4565 = vmatprep.subr.bf16.mxu0 0
      %4566 = vmatpush1.bf16.msra.mxu0 0
      %4567 = vmatprep.subr.bf16.mxu0 0
      %4568 = vmatpush1.bf16.msra.mxu0 0
      %4569 = vmatprep.subr.bf16.mxu0 0
      %4570 = vmatpush1.bf16.msra.mxu0 0
      %4571 = vmatprep.subr.bf16.mxu0 0
      %4572 = vmatpush1.bf16.msra.mxu0 0
      %4573 = vmatprep.subr.bf16.mxu0 0
      %4574 = vmatpush1.bf16.msra.mxu0 0
      %4575 = vmatprep.subr.bf16.mxu0 0
      %4576 = vmatpush1.bf16.msra.mxu0 0
      %4577 = vmatprep.subr.bf16.mxu0 0
      %4578 = vmatpush1.bf16.msra.mxu0 0
      %4579 = vmatprep.subr.bf16.mxu0 0
      %4580 = vmatpush1.bf16.msra.mxu0 0
      %4581 = vmatprep.subr.bf16.mxu0 0
      %4582 = vmatpush1.bf16.msra.mxu0 0
      %4583 = vmatprep.mubr.bf16.mxu0 0
      %4584 = vmatmul.mubr.bf16.gmra.mrb[0].mxu0 %v4506
      %v4585 = vpop.f32.mrb[0].mxu0
      %v4586 = vadd.f32 0.0, %v4585
      %v4587 = vpop.f32.mrb[0].mxu0
      %v4588 = vpop.f32.mrb[0].mxu0
      %v4589 = vadd.f32 0.0, %v4588
      %v4590 = vpop.f32.mrb[0].mxu0
      %4591 = vdwg.mxu0
      %v4592 = vadd.f32 %v4475, %v4543
      %v4593 = vadd.f32 %v4476, %v4545
      %v4594 = vadd.f32 %v4477, %v4586
      %v4595 = vadd.f32 %v4478, %v4547
      %v4596 = vadd.f32 %v4479, %v4549
      %v4597 = vadd.f32 %v4480, %v4589
      %v4598 = vld [vmem:[%s6 + $0x8] sm:$0xf]
      %v4599 = vld [vmem:[%s6 + $0x14] sm:$0x1]
      %v4602 = vunpack.c.l.b16 %v4598
      %v4603 = vunpack.c.l.b16 %v4599
      %v4604 = vpack.c.b16 %v4603, %v4602
      %4605 = vrot.lane.b32.xlu0 %v3676, 86
      %v4606 = vpop.permute.xlu0 %4605
      %4607 = vrot.lane.b32.xlu0 %v3677, 86
      %v4608 = vpop.permute.xlu0 %4607
      %4609 = vrot.lane.b32.xlu0 %v3678, 86
      %v4610 = vpop.permute.xlu0 %4609
      %4611 = vrot.lane.b32.xlu0 %v3679, 86
      %v4612 = vpop.permute.xlu0 %4611
      %4613 = vrot.lane.b32.xlu0 %v3680, 86
      %v4614 = vpop.permute.xlu0 %4613
      %4615 = vrot.lane.b32.xlu0 %v3681, 86
      %v4616 = vpop.permute.xlu0 %4615
      %v4617 = vsel %vm964, %v4606, %v4608
      %v4618 = vsel %vm964, %v4608, %v4610
      %v4619 = vsel %vm964, %v4612, %v4614
      %v4620 = vsel %vm964, %v4614, %v4616
      %v4628 = vsel %vm1743, %v4604, 0
      %4630 = vmatprep.subr.bf16.mxu0 %v4618
      %4631 = vmatpush1.bf16.msra.mxu0 %v4617
      %4632 = vmatprep.subr.bf16.mxu0 %v4620
      %4633 = vmatpush1.bf16.msra.mxu0 %v4619
      %4634 = vmatprep.subr.bf16.mxu0 0
      %4635 = vmatpush1.bf16.msra.mxu0 0
      %4636 = vmatprep.subr.bf16.mxu0 0
      %4637 = vmatpush1.bf16.msra.mxu0 0
      %4638 = vmatprep.subr.bf16.mxu0 0
      %4639 = vmatpush1.bf16.msra.mxu0 0
      %4640 = vmatprep.subr.bf16.mxu0 0
      %4641 = vmatpush1.bf16.msra.mxu0 0
      %4642 = vmatprep.subr.bf16.mxu0 0
      %4643 = vmatpush1.bf16.msra.mxu0 0
      %4644 = vmatprep.subr.bf16.mxu0 0
      %4645 = vmatpush1.bf16.msra.mxu0 0
      %4646 = vmatprep.subr.bf16.mxu0 0
      %4647 = vmatpush1.bf16.msra.mxu0 0
      %4648 = vmatprep.subr.bf16.mxu0 0
      %4649 = vmatpush1.bf16.msra.mxu0 0
      %4650 = vmatprep.subr.bf16.mxu0 0
      %4651 = vmatpush1.bf16.msra.mxu0 0
      %4652 = vmatprep.subr.bf16.mxu0 0
      %4653 = vmatpush1.bf16.msra.mxu0 0
      %4654 = vmatprep.subr.bf16.mxu0 0
      %4655 = vmatpush1.bf16.msra.mxu0 0
      %4656 = vmatprep.subr.bf16.mxu0 0
      %4657 = vmatpush1.bf16.msra.mxu0 0
      %4658 = vmatprep.subr.bf16.mxu0 0
      %4659 = vmatpush1.bf16.msra.mxu0 0
      %4660 = vmatprep.subr.bf16.mxu0 0
      %4661 = vmatpush1.bf16.msra.mxu0 0
      %4662 = vmatprep.mubr.bf16.mxu0 0
      %4663 = vmatmul.mubr.bf16.gmra.mrb[0].mxu0 %v4628
      %v4664 = vpop.f32.mrb[0].mxu0
      %v4665 = vadd.f32 0.0, %v4664
      %v4666 = vpop.f32.mrb[0].mxu0
      %v4667 = vadd.f32 0.0, %v4666
      %v4668 = vpop.f32.mrb[0].mxu0
      %v4669 = vadd.f32 0.0, %v4668
      %v4670 = vpop.f32.mrb[0].mxu0
      %v4671 = vadd.f32 0.0, %v4670
      %4672 = vdwg.mxu0
      %4673 = vmatprep.subr.bf16.mxu0 0
      %4674 = vmatpush1.bf16.msra.mxu0 %v4610
      %4675 = vmatprep.subr.bf16.mxu0 0
      %4676 = vmatpush1.bf16.msra.mxu0 %v4616
      %4677 = vmatprep.subr.bf16.mxu0 0
      %4678 = vmatpush1.bf16.msra.mxu0 0
      %4679 = vmatprep.subr.bf16.mxu0 0
      %4680 = vmatpush1.bf16.msra.mxu0 0
      %4681 = vmatprep.subr.bf16.mxu0 0
      %4682 = vmatpush1.bf16.msra.mxu0 0
      %4683 = vmatprep.subr.bf16.mxu0 0
      %4684 = vmatpush1.bf16.msra.mxu0 0
      %4685 = vmatprep.subr.bf16.mxu0 0
      %4686 = vmatpush1.bf16.msra.mxu0 0
      %4687 = vmatprep.subr.bf16.mxu0 0
      %4688 = vmatpush1.bf16.msra.mxu0 0
      %4689 = vmatprep.subr.bf16.mxu0 0
      %4690 = vmatpush1.bf16.msra.mxu0 0
      %4691 = vmatprep.subr.bf16.mxu0 0
      %4692 = vmatpush1.bf16.msra.mxu0 0
      %4693 = vmatprep.subr.bf16.mxu0 0
      %4694 = vmatpush1.bf16.msra.mxu0 0
      %4695 = vmatprep.subr.bf16.mxu0 0
      %4696 = vmatpush1.bf16.msra.mxu0 0
      %4697 = vmatprep.subr.bf16.mxu0 0
      %4698 = vmatpush1.bf16.msra.mxu0 0
      %4699 = vmatprep.subr.bf16.mxu0 0
      %4700 = vmatpush1.bf16.msra.mxu0 0
      %4701 = vmatprep.subr.bf16.mxu0 0
      %4702 = vmatpush1.bf16.msra.mxu0 0
      %4703 = vmatprep.subr.bf16.mxu0 0
      %4704 = vmatpush1.bf16.msra.mxu0 0
      %4705 = vmatprep.mubr.bf16.mxu0 0
      %4706 = vmatmul.mubr.bf16.gmra.mrb[0].mxu0 %v4628
      %v4707 = vpop.f32.mrb[0].mxu0
      %v4708 = vadd.f32 0.0, %v4707
      %v4709 = vpop.f32.mrb[0].mxu0
      %v4710 = vpop.f32.mrb[0].mxu0
      %v4711 = vadd.f32 0.0, %v4710
      %v4712 = vpop.f32.mrb[0].mxu0
      %4713 = vdwg.mxu0
      %v4714 = vadd.f32 %v4592, %v4665
      %v4715 = vadd.f32 %v4593, %v4667
      %v4716 = vadd.f32 %v4594, %v4708
      %v4717 = vadd.f32 %v4595, %v4669
      %v4718 = vadd.f32 %v4596, %v4671
      %v4719 = vadd.f32 %v4597, %v4711
      %v4720 = vld [vmem:[%s7] sm:$0xff]
      %v4721 = vld [vmem:[%s7 + $0x8] sm:$0x1]
      %4723 = vset.pattern.permute.xlu0 0
      %4724 = vperm.xlu0 %4723, %v4720
      %v4725 = vpop.permute.xlu0 %4724
      %4728 = vset.pattern.permute.xlu0 0
      %4729 = vperm.xlu0 %4728, %v4721
      %v4730 = vpop.permute.xlu0 %4729
      %v4732 = vadd.f32 %v4714, %v4725
      %v4733 = vadd.f32 %v4715, %v4725
      %v4734 = vadd.f32 %v4716, %v4725
      %v4735 = vadd.f32 %v4717, %v4730
      %v4736 = vadd.f32 %v4718, %v4730
      %v4737 = vadd.f32 %v4719, %v4730
      %v4738 = vxor.u32 %v4732, 2147483648
      %v4739 = vxor.u32 %v4733, 2147483648
      %v4740 = vxor.u32 %v4734, 2147483648
      %v4741 = vxor.u32 %v4735, 2147483648
      %v4742 = vxor.u32 %v4736, 2147483648
      %v4743 = vxor.u32 %v4737, 2147483648
      %v4744 = vmul.f32 %v4738, 1.442695
      %v4745 = vpow.pop %v4744
      %v4746 = vmul.f32 %v4739, 1.442695
      %v4747 = vpow.pop %v4746
      %v4748 = vmul.f32 %v4740, 1.442695
      %v4749 = vpow.pop %v4748
      %v4750 = vmul.f32 %v4741, 1.442695
      %v4751 = vpow.pop %v4750
      %v4752 = vmul.f32 %v4742, 1.442695
      %v4753 = vpow.pop %v4752
      %v4754 = vmul.f32 %v4743, 1.442695
      %v4755 = vpow.pop %v4754
      %v4756 = vadd.f32 %v4745, 1.0
      %v4757 = vadd.f32 %v4747, 1.0
      %v4758 = vadd.f32 %v4749, 1.0
      %v4759 = vadd.f32 %v4751, 1.0
      %v4760 = vadd.f32 %v4753, 1.0
      %v4761 = vadd.f32 %v4755, 1.0
      %v4762 = vrcp.pop %v4756
      %v4763 = vmul.f32 1.0, %v4762
      %v4764 = vrcp.pop %v4757
      %v4765 = vmul.f32 1.0, %v4764
      %v4766 = vrcp.pop %v4758
      %v4767 = vmul.f32 1.0, %v4766
      %v4768 = vrcp.pop %v4759
      %v4769 = vmul.f32 1.0, %v4768
      %v4770 = vrcp.pop %v4760
      %v4771 = vmul.f32 1.0, %v4770
      %v4772 = vrcp.pop %v4761
      %v4773 = vmul.f32 1.0, %v4772
      %4774 = vst [vmem:[%s302] sm:$0xff] %v4763
      %4775 = vst [vmem:[%s302 + $0x8] sm:$0xff] %v4765
      %4776 = vst.msk [vmem:[%s302 + $0x10] sm:$0xff] %vm2137, %v4767
      %4777 = vst [vmem:[%s302 + $0x18] sm:$0x1] %v4769
      %4778 = vst [vmem:[%s302 + $0x20] sm:$0x1] %v4771
      %vm4779 = vcmask 516096
      %4780 = vst.msk [vmem:[%s302 + $0x28] sm:$0x1] %vm4779, %v4773
      %p4781 = scmp.lt.s32.totalorder %s19, 1
      %s4782 = scalar_select %p4781, %s19, 1
      %s4783 = smul.addr %s4782, 6
      %s4784 = smul.addr %s4783, 8
      %s4785 = scalar_lea.vmem %s8, %s4784
      // Predicated region
      $region53: #{espcn_forward.1} parent=51 // pred_check
        %p4786 = pneg %p210
      $region54: #{espcn_forward.1} parent=51 // pred_check_branch
        %4788 = sbr.rel (%p4786) target = $region56
      $region55: #{espcn_forward.1} parent=51 // pred_region
        _
      $region56: #{espcn_forward.1} parent=51 // pred_fallthru
        _
    $region52: #{espcn_forward.1} parent=5 // pred_fallthru
      _
    %p4789 = scmp.le.s32.totalorder 2, %s14
    // Predicated region
    $region57: #{espcn_forward.1} parent=5 // pred_check
      %p4790 = pneg %p4789
    $region58: #{espcn_forward.1} parent=5 // pred_check_branch
      %4792 = sbr.rel (%p4790) target = $region60
    $region59: #{espcn_forward.1} parent=5 // pred_region
      %s4793 = ssub.s32 %s14, 2
      // Predicated region
      $region61: #{espcn_forward.1} parent=59 // pred_check
        %p4794 = pneg %p216
      $region62: #{espcn_forward.1} parent=59 // pred_check_branch
        %4796 = sbr.rel (%p4794) target = $region64
      $region63: #{espcn_forward.1} parent=59 // pred_region
        %p4797 = scmp.lt.s32.totalorder %s20, 1
        %s4798 = scalar_select %p4797, %s20, 1
        %s4799 = smul.addr %s4798, 6
        %s4800 = smul.addr %s4799, 8
        %s4801 = scalar_lea.vmem %s8, %s4800
      $region64: #{espcn_forward.1} parent=59 // pred_fallthru
        _
    $region60: #{espcn_forward.1} parent=5 // pred_fallthru
      _
  $region6: #{espcn_forward.1} parent=0 // loop_footer
    %s18 = sadd.s32 1, %s14
  $region7: #{espcn_forward.1} parent=0 // loop_footer_branch
    %13 = sbr.rel target = $region3
  $region8: #{espcn_forward.1} parent=0 // loop_exit
    _

</llo_original>
